<compile_context>
chip_gen: v7x
topology: tpu7x:2x2x1
jax: 0.10.0
libtpu: 0.0.40
codegen_flags: <defaults>
</compile_context>

<pallas_src>
import functools

import jax
import jax.numpy as jnp
from jax.experimental import pallas as pl
from jax.experimental.pallas import tpu as pltpu

DIM = 128
LEAKY_SLOPE = 0.01  # torch.nn.LeakyReLU default


# ----------------------------------------------------------------------------
# Tiling helpers
# ----------------------------------------------------------------------------
def _pick_row_tile(m, candidates=(256, 128, 64, 32, 16, 8)):
    """Largest row tile (multiple of 8) that evenly divides M."""
    for t in candidates:
        if t <= m and m % t == 0:
            return t
    return m


def _pick_batch_tile(n, candidates=(8, 4, 2, 1)):
    for t in candidates:
        if n % t == 0:
            return t
    return 1


# ----------------------------------------------------------------------------
# Pallas kernels
# ----------------------------------------------------------------------------
def _conv_mm_kernel(p_ref, w_ref, b_ref, o_ref):
    # bf16 operands, f32 MXU accumulation.
    acc = jnp.dot(p_ref[...], w_ref[...], preferred_element_type=jnp.float32)
    acc = acc + b_ref[...]                      # (1, Cout) broadcasts over rows
    acc = jnp.where(acc > 0, acc, LEAKY_SLOPE * acc)
    o_ref[...] = acc.astype(o_ref.dtype)


def _conv3_linear_kernel(p_ref, w_ref, b_ref, wl_ref, o_ref):
    acc = jnp.dot(p_ref[...], w_ref[...], preferred_element_type=jnp.float32)
    acc = acc + b_ref[...]
    acc = jnp.where(acc > 0, acc, LEAKY_SLOPE * acc)
    # Fused Linear(8192 -> 1): per-row partial dot product via VPU mul + lane
    # reduce (avoids a standalone N=1 matmul and the conv3 HBM round trip).
    o_ref[...] = jnp.sum(acc * wl_ref[...], axis=1, keepdims=True)


def conv_matmul_leaky(patches, w_mat, b, out_dtype=jnp.bfloat16):
    """Y = LeakyReLU(P @ W + b).  P:(M,K) bf16, W:(K,N) bf16, b:(N,) f32."""
    m, k = patches.shape
    _, n = w_mat.shape
    tm = _pick_row_tile(m)
    return pl.pallas_call(
        _conv_mm_kernel,
        out_shape=jax.ShapeDtypeStruct((m, n), out_dtype),
        grid=(m // tm,),
        in_specs=[
            pl.BlockSpec((tm, k), lambda i: (i, 0)),
            pl.BlockSpec((k, n), lambda i: (0, 0)),   # resident weight
            pl.BlockSpec((1, n), lambda i: (0, 0)),   # resident bias
        ],
        out_specs=pl.BlockSpec((tm, n), lambda i: (i, 0)),
        compiler_params=pltpu.CompilerParams(
            dimension_semantics=("parallel",),
        ),
    )(patches, w_mat, b.reshape(1, n).astype(jnp.float32))


def conv3_linear_fused(patches, w_mat, b, wl_tile):
    """Per-position partial sums of Linear(LeakyReLU(P @ W + b)).

    patches: (N*16, K) bf16, w_mat: (K, 512) bf16, wl_tile: (TB*16, 512) f32.
    Returns (N*16, 1) f32 partial dot products (summed per batch element in JAX).
    """
    m, k = patches.shape
    _, n = w_mat.shape
    tm = wl_tile.shape[0]
    return pl.pallas_call(
        _conv3_linear_kernel,
        out_shape=jax.ShapeDtypeStruct((m, 1), jnp.float32),
        grid=(m // tm,),
        in_specs=[
            pl.BlockSpec((tm, k), lambda i: (i, 0)),
            pl.BlockSpec((k, n), lambda i: (0, 0)),   # resident conv3 weight
            pl.BlockSpec((1, n), lambda i: (0, 0)),   # resident conv3 bias
            pl.BlockSpec((tm, n), lambda i: (0, 0)),  # resident linear weight tile
        ],
        out_specs=pl.BlockSpec((tm, 1), lambda i: (i, 0)),
        compiler_params=pltpu.CompilerParams(
            dimension_semantics=("parallel",),
        ),
    )(patches, w_mat, b.reshape(1, n).astype(jnp.float32), wl_tile)


# ----------------------------------------------------------------------------
# Plain-JAX glue: NHWC im2col (pad + strided slices), feature order (ky, kx, c)
# ----------------------------------------------------------------------------
def im2col_nhwc(x, k=3, stride=2, pad=1):
    n, h, w, c = x.shape
    xp = jnp.pad(x, ((0, 0), (pad, pad), (pad, pad), (0, 0)))
    ho = (h + 2 * pad - k) // stride + 1
    wo = (w + 2 * pad - k) // stride + 1
    cols = []
    for ky in range(k):
        for kx in range(k):
            cols.append(
                xp[:, ky: ky + stride * (ho - 1) + 1: stride,
                      kx: kx + stride * (wo - 1) + 1: stride, :]
            )
    patches = jnp.concatenate(cols, axis=-1)      # (N, Ho, Wo, k*k*C)
    return patches.reshape(n * ho * wo, k * k * c), ho, wo


def _conv_w_to_mat(w_oihw):
    """OIHW -> (ky*kx*Cin, Cout) matching the im2col feature order, bf16."""
    cout = w_oihw.shape[0]
    return jnp.transpose(w_oihw, (2, 3, 1, 0)).reshape(-1, cout).astype(jnp.bfloat16)


# ----------------------------------------------------------------------------
# Parameter construction (deterministic, synthetic)
# ----------------------------------------------------------------------------
def init_params(key):
    shapes = [
        (DIM, 3, 3, 3),
        (2 * DIM, DIM, 3, 3),
        (4 * DIM, 2 * DIM, 3, 3),
    ]
    params = {"convs": [], "linear": None}
    for shp in shapes:
        key, kw, kb = jax.random.split(key, 3)
        fan_in = shp[1] * shp[2] * shp[3]
        w = jax.random.normal(kw, shp, jnp.float32) * (1.0 / jnp.sqrt(fan_in))
        b = jax.random.normal(kb, (shp[0],), jnp.float32) * 0.01
        params["convs"].append((w, b))
    key, kw, kb = jax.random.split(key, 3)
    lin_in = 4 * 4 * 4 * DIM
    wl = jax.random.normal(kw, (1, lin_in), jnp.float32) * (1.0 / jnp.sqrt(lin_in))
    bl = jax.random.normal(kb, (1,), jnp.float32) * 0.01
    params["linear"] = (wl, bl)
    return params


# ----------------------------------------------------------------------------
# Full discriminator forward (Pallas) and pure-JAX f32 reference
# ----------------------------------------------------------------------------
def discriminator_forward(x_nchw, params):
    n = x_nchw.shape[0]
    (w1, b1), (w2, b2), (w3, b3) = params["convs"]
    wl, bl = params["linear"]

    # One layout change at entry; NHWC + bf16 from here on.
    x = jnp.transpose(x_nchw, (0, 2, 3, 1)).astype(jnp.bfloat16)

    p1, h1, w1o = im2col_nhwc(x)                               # (N*256, 27)
    y1 = conv_matmul_leaky(p1, _conv_w_to_mat(w1), b1)         # (N*256, 128)
    y1 = y1.reshape(n, h1, w1o, DIM)

    p2, h2, w2o = im2col_nhwc(y1)                              # (N*64, 1152)
    y2 = conv_matmul_leaky(p2, _conv_w_to_mat(w2), b2)         # (N*64, 256)
    y2 = y2.reshape(n, h2, w2o, 2 * DIM)

    p3, h3, w3o = im2col_nhwc(y2)                              # (N*16, 2304)
    npos = h3 * w3o                                            # 16

    # Linear weight columns follow torch's NCHW .view flatten (c, h, w); permute
    # them to the NHWC (position, channel) order produced by the conv3 matmul.
    wl2d = wl.reshape(4 * DIM, h3, w3o).transpose(1, 2, 0).reshape(npos, 4 * DIM)
    tb = _pick_batch_tile(n)
    wl_tile = jnp.tile(wl2d.astype(jnp.float32), (tb, 1))      # (TB*16, 512)

    partials = conv3_linear_fused(p3, _conv_w_to_mat(w3), b3, wl_tile)  # (N*16, 1)
    return partials.reshape(n, npos).sum(axis=1, keepdims=True) + bl    # (N, 1)


def discriminator_reference(x_nchw, params):
    out = x_nchw
    for (w, b) in params["convs"]:
        out = jax.lax.conv_general_dilated(
            out, w, window_strides=(2, 2), padding=((1, 1), (1, 1)),
            dimension_numbers=("NCHW", "OIHW", "NCHW"),
            precision=jax.lax.Precision.HIGHEST,
        )
        out = out + b[None, :, None, None]
        out = jnp.where(out > 0, out, LEAKY_SLOPE * out)
    out = out.reshape(out.shape[0], -1)
    wl, bl = params["linear"]
    return jnp.dot(out, wl.T, precision=jax.lax.Precision.HIGHEST) + bl


if __name__ == "__main__":
    key = jax.random.PRNGKey(0)
    key, kx = jax.random.split(key)
    # CIFAR-10 images: the linear layer (4*4*4*DIM) implies 32x32 spatial input.
    x = jax.random.normal(kx, (2, 3, 32, 32), jnp.float32)
    params = init_params(key)

    fwd = jax.jit(discriminator_forward)
    out = jax.block_until_ready(fwd(x, params))
    assert out.shape == (2, 1), out.shape

    ref = jax.block_until_ready(discriminator_reference(x, params))
    # bf16 operands / activations vs an f32 HIGHEST-precision reference.
    assert jnp.allclose(out, ref, rtol=5e-2, atol=5e-2), (out, ref)

    print("KERNEL_OK")
</pallas_src>

<mosaic_0001>
module attributes {stable_mosaic.version = 11 : i64} {
  func.func @_conv_mm_kernel(%arg0: i32, %arg1: memref<256x27xbf16, #tpu.memory_space<vmem>>, %arg2: memref<27x128xbf16, #tpu.memory_space<vmem>>, %arg3: memref<1x128xf32, #tpu.memory_space<vmem>>, %arg4: memref<256x128xbf16, #tpu.memory_space<vmem>>) attributes {dimension_semantics = [#tpu.dimension_semantics<parallel>], iteration_bounds = array<i64: 2>, scalar_prefetch = 0 : i64, scratch_operands = 0 : i64, tpu.core_type = #tpu.core_type<tc>, window_params = [{transform_indices = @transform_0, window_bounds = array<i64: 256, 27>}, {pipeline_mode = #tpu.pipeline_mode<synchronous>, transform_indices = @transform_1, window_bounds = array<i64: 27, 128>}, {pipeline_mode = #tpu.pipeline_mode<synchronous>, transform_indices = @transform_2, window_bounds = array<i64: 1, 128>}, {transform_indices = @transform_3, window_bounds = array<i64: 256, 128>}]} {
    %c0 = arith.constant 0 : index
    %c0_0 = arith.constant 0 : index
    %0 = vector.load %arg1[%c0, %c0_0] : memref<256x27xbf16, #tpu.memory_space<vmem>>, vector<256x27xbf16>
    %c0_1 = arith.constant 0 : index
    %c0_2 = arith.constant 0 : index
    %1 = vector.load %arg2[%c0_1, %c0_2] : memref<27x128xbf16, #tpu.memory_space<vmem>>, vector<27x128xbf16>
    %cst = arith.constant dense<0.000000e+00> : vector<256x128xf32>
    %2 = tpu.matmul %0, %1, %cst {dimension_numbers = #tpu.dot_dimension_numbers<[1], [0], [0], [1], [0, 0, 1, 1], [], []>} : vector<256x27xbf16>, vector<27x128xbf16>, vector<256x128xf32> -> vector<256x128xf32>
    %c0_3 = arith.constant 0 : index
    %c0_4 = arith.constant 0 : index
    %3 = vector.load %arg3[%c0_3, %c0_4] : memref<1x128xf32, #tpu.memory_space<vmem>>, vector<1x128xf32>
    %4 = vector.broadcast %3 : vector<1x128xf32> to vector<256x128xf32>
    %5 = arith.addf %2, %4 : vector<256x128xf32>
    %cst_5 = arith.constant 0.000000e+00 : f32
    %6 = vector.broadcast %cst_5 : f32 to vector<256x128xf32>
    %7 = arith.cmpf ogt, %5, %6 : vector<256x128xf32>
    %cst_6 = arith.constant 0.00999999977 : f32
    %8 = vector.broadcast %cst_6 : f32 to vector<256x128xf32>
    %9 = arith.mulf %8, %5 : vector<256x128xf32>
    %10 = arith.select %7, %5, %9 : vector<256x128xi1>, vector<256x128xf32>
    %11 = arith.truncf %10 : vector<256x128xf32> to vector<256x128xbf16>
    %c0_7 = arith.constant 0 : index
    %c0_8 = arith.constant 0 : index
    %12 = vector.load %arg4[%c0_7, %c0_8] : memref<256x128xbf16, #tpu.memory_space<vmem>>, vector<256x128xbf16>
    tpu.vector_store %arg4[%c0_7, %c0_8], %11 {strides = array<i32>} : memref<256x128xbf16, #tpu.memory_space<vmem>>, vector<256x128xbf16>,
    return
  }
  func.func @transform_0(%arg0: i32) -> (i32, i32) {
    %c0_i32 = arith.constant 0 : i32
    %c0_i32_0 = arith.constant 0 : i32
    return %arg0, %c0_i32 : i32, i32
  }
  func.func @transform_1(%arg0: i32) -> (i32, i32) {
    %c0_i32 = arith.constant 0 : i32
    %c0_i32_0 = arith.constant 0 : i32
    %c0_i32_1 = arith.constant 0 : i32
    return %c0_i32, %c0_i32_0 : i32, i32
  }
  func.func @transform_2(%arg0: i32) -> (i32, i32) {
    %c0_i32 = arith.constant 0 : i32
    %c0_i32_0 = arith.constant 0 : i32
    %c0_i32_1 = arith.constant 0 : i32
    return %c0_i32, %c0_i32_0 : i32, i32
  }
  func.func @transform_3(%arg0: i32) -> (i32, i32) {
    %c0_i32 = arith.constant 0 : i32
    %c0_i32_0 = arith.constant 0 : i32
    return %arg0, %c0_i32 : i32, i32
  }
}

module attributes {stable_mosaic.version = 11 : i64} {
  func.func @_conv_mm_kernel(%arg0: i32, %arg1: memref<128x1152xbf16, #tpu.memory_space<vmem>>, %arg2: memref<1152x256xbf16, #tpu.memory_space<vmem>>, %arg3: memref<1x256xf32, #tpu.memory_space<vmem>>, %arg4: memref<128x256xbf16, #tpu.memory_space<vmem>>) attributes {dimension_semantics = [#tpu.dimension_semantics<parallel>], iteration_bounds = array<i64: 1>, scalar_prefetch = 0 : i64, scratch_operands = 0 : i64, tpu.core_type = #tpu.core_type<tc>, window_params = [{transform_indices = @transform_0, window_bounds = array<i64: 128, 1152>}, {pipeline_mode = #tpu.pipeline_mode<synchronous>, transform_indices = @transform_1, window_bounds = array<i64: 1152, 256>}, {pipeline_mode = #tpu.pipeline_mode<synchronous>, transform_indices = @transform_2, window_bounds = array<i64: 1, 256>}, {transform_indices = @transform_3, window_bounds = array<i64: 128, 256>}]} {
    %c0 = arith.constant 0 : index
    %c0_0 = arith.constant 0 : index
    %0 = vector.load %arg1[%c0, %c0_0] : memref<128x1152xbf16, #tpu.memory_space<vmem>>, vector<128x1152xbf16>
    %c0_1 = arith.constant 0 : index
    %c0_2 = arith.constant 0 : index
    %1 = vector.load %arg2[%c0_1, %c0_2] : memref<1152x256xbf16, #tpu.memory_space<vmem>>, vector<1152x256xbf16>
    %cst = arith.constant dense<0.000000e+00> : vector<128x256xf32>
    %2 = tpu.matmul %0, %1, %cst {dimension_numbers = #tpu.dot_dimension_numbers<[1], [0], [0], [1], [0, 0, 1, 1], [], []>} : vector<128x1152xbf16>, vector<1152x256xbf16>, vector<128x256xf32> -> vector<128x256xf32>
    %c0_3 = arith.constant 0 : index
    %c0_4 = arith.constant 0 : index
    %3 = vector.load %arg3[%c0_3, %c0_4] : memref<1x256xf32, #tpu.memory_space<vmem>>, vector<1x256xf32>
    %4 = vector.broadcast %3 : vector<1x256xf32> to vector<128x256xf32>
    %5 = arith.addf %2, %4 : vector<128x256xf32>
    %cst_5 = arith.constant 0.000000e+00 : f32
    %6 = vector.broadcast %cst_5 : f32 to vector<128x256xf32>
    %7 = arith.cmpf ogt, %5, %6 : vector<128x256xf32>
    %cst_6 = arith.constant 0.00999999977 : f32
    %8 = vector.broadcast %cst_6 : f32 to vector<128x256xf32>
    %9 = arith.mulf %8, %5 : vector<128x256xf32>
    %10 = arith.select %7, %5, %9 : vector<128x256xi1>, vector<128x256xf32>
    %11 = arith.truncf %10 : vector<128x256xf32> to vector<128x256xbf16>
    %c0_7 = arith.constant 0 : index
    %c0_8 = arith.constant 0 : index
    %12 = vector.load %arg4[%c0_7, %c0_8] : memref<128x256xbf16, #tpu.memory_space<vmem>>, vector<128x256xbf16>
    tpu.vector_store %arg4[%c0_7, %c0_8], %11 {strides = array<i32>} : memref<128x256xbf16, #tpu.memory_space<vmem>>, vector<128x256xbf16>,
    return
  }
  func.func @transform_0(%arg0: i32) -> (i32, i32) {
    %c0_i32 = arith.constant 0 : i32
    %c0_i32_0 = arith.constant 0 : i32
    return %arg0, %c0_i32 : i32, i32
  }
  func.func @transform_1(%arg0: i32) -> (i32, i32) {
    %c0_i32 = arith.constant 0 : i32
    %c0_i32_0 = arith.constant 0 : i32
    %c0_i32_1 = arith.constant 0 : i32
    return %c0_i32, %c0_i32_0 : i32, i32
  }
  func.func @transform_2(%arg0: i32) -> (i32, i32) {
    %c0_i32 = arith.constant 0 : i32
    %c0_i32_0 = arith.constant 0 : i32
    %c0_i32_1 = arith.constant 0 : i32
    return %c0_i32, %c0_i32_0 : i32, i32
  }
  func.func @transform_3(%arg0: i32) -> (i32, i32) {
    %c0_i32 = arith.constant 0 : i32
    %c0_i32_0 = arith.constant 0 : i32
    return %arg0, %c0_i32 : i32, i32
  }
}

module attributes {stable_mosaic.version = 11 : i64} {
  func.func @_conv3_linear_kernel(%arg0: i32, %arg1: memref<32x2304xbf16, #tpu.memory_space<vmem>>, %arg2: memref<2304x512xbf16, #tpu.memory_space<vmem>>, %arg3: memref<1x512xf32, #tpu.memory_space<vmem>>, %arg4: memref<32x512xf32, #tpu.memory_space<vmem>>, %arg5: memref<32x1xf32, #tpu.memory_space<vmem>>) attributes {dimension_semantics = [#tpu.dimension_semantics<parallel>], iteration_bounds = array<i64: 1>, scalar_prefetch = 0 : i64, scratch_operands = 0 : i64, tpu.core_type = #tpu.core_type<tc>, window_params = [{transform_indices = @transform_0, window_bounds = array<i64: 32, 2304>}, {pipeline_mode = #tpu.pipeline_mode<synchronous>, transform_indices = @transform_1, window_bounds = array<i64: 2304, 512>}, {pipeline_mode = #tpu.pipeline_mode<synchronous>, transform_indices = @transform_2, window_bounds = array<i64: 1, 512>}, {pipeline_mode = #tpu.pipeline_mode<synchronous>, transform_indices = @transform_3, window_bounds = array<i64: 32, 512>}, {transform_indices = @transform_4, window_bounds = array<i64: 32, 1>}]} {
    %c0 = arith.constant 0 : index
    %c0_0 = arith.constant 0 : index
    %0 = vector.load %arg1[%c0, %c0_0] : memref<32x2304xbf16, #tpu.memory_space<vmem>>, vector<32x2304xbf16>
    %c0_1 = arith.constant 0 : index
    %c0_2 = arith.constant 0 : index
    %1 = vector.load %arg2[%c0_1, %c0_2] : memref<2304x512xbf16, #tpu.memory_space<vmem>>, vector<2304x512xbf16>
    %cst = arith.constant dense<0.000000e+00> : vector<32x512xf32>
    %2 = tpu.matmul %0, %1, %cst {dimension_numbers = #tpu.dot_dimension_numbers<[1], [0], [0], [1], [0, 0, 1, 1], [], []>} : vector<32x2304xbf16>, vector<2304x512xbf16>, vector<32x512xf32> -> vector<32x512xf32>
    %c0_3 = arith.constant 0 : index
    %c0_4 = arith.constant 0 : index
    %3 = vector.load %arg3[%c0_3, %c0_4] : memref<1x512xf32, #tpu.memory_space<vmem>>, vector<1x512xf32>
    %4 = vector.broadcast %3 : vector<1x512xf32> to vector<32x512xf32>
    %5 = arith.addf %2, %4 : vector<32x512xf32>
    %cst_5 = arith.constant 0.000000e+00 : f32
    %6 = vector.broadcast %cst_5 : f32 to vector<32x512xf32>
    %7 = arith.cmpf ogt, %5, %6 : vector<32x512xf32>
    %cst_6 = arith.constant 0.00999999977 : f32
    %8 = vector.broadcast %cst_6 : f32 to vector<32x512xf32>
    %9 = arith.mulf %8, %5 : vector<32x512xf32>
    %10 = arith.select %7, %5, %9 : vector<32x512xi1>, vector<32x512xf32>
    %c0_7 = arith.constant 0 : index
    %c0_8 = arith.constant 0 : index
    %11 = vector.load %arg4[%c0_7, %c0_8] : memref<32x512xf32, #tpu.memory_space<vmem>>, vector<32x512xf32>
    %12 = arith.mulf %10, %11 : vector<32x512xf32>
    %cst_9 = arith.constant dense<0.000000e+00> : vector<32xf32>
    %13 = vector.multi_reduction <add>, %12, %cst_9 [1] : vector<32x512xf32> to vector<32xf32>
    %14 = vector.shape_cast %13 : vector<32xf32> to vector<32x1xf32>
    %c0_10 = arith.constant 0 : index
    %c0_11 = arith.constant 0 : index
    %15 = vector.load %arg5[%c0_10, %c0_11] : memref<32x1xf32, #tpu.memory_space<vmem>>, vector<32x1xf32>
    tpu.vector_store %arg5[%c0_10, %c0_11], %14 {strides = array<i32>} : memref<32x1xf32, #tpu.memory_space<vmem>>, vector<32x1xf32>,
    return
  }
  func.func @transform_0(%arg0: i32) -> (i32, i32) {
    %c0_i32 = arith.constant 0 : i32
    %c0_i32_0 = arith.constant 0 : i32
    return %arg0, %c0_i32 : i32, i32
  }
  func.func @transform_1(%arg0: i32) -> (i32, i32) {
    %c0_i32 = arith.constant 0 : i32
    %c0_i32_0 = arith.constant 0 : i32
    %c0_i32_1 = arith.constant 0 : i32
    return %c0_i32, %c0_i32_0 : i32, i32
  }
  func.func @transform_2(%arg0: i32) -> (i32, i32) {
    %c0_i32 = arith.constant 0 : i32
    %c0_i32_0 = arith.constant 0 : i32
    %c0_i32_1 = arith.constant 0 : i32
    return %c0_i32, %c0_i32_0 : i32, i32
  }
  func.func @transform_3(%arg0: i32) -> (i32, i32) {
    %c0_i32 = arith.constant 0 : i32
    %c0_i32_0 = arith.constant 0 : i32
    %c0_i32_1 = arith.constant 0 : i32
    return %c0_i32, %c0_i32_0 : i32, i32
  }
  func.func @transform_4(%arg0: i32) -> (i32, i32) {
    %c0_i32 = arith.constant 0 : i32
    %c0_i32_0 = arith.constant 0 : i32
    return %arg0, %c0_i32 : i32, i32
  }
}

</mosaic_0001>

<llo_original>
// kernel: discriminator_forward.3
$region0: #{discriminator_forward.3}
  #allocation0 [shape = 'u32[]', space=smem, size = 0x4, offset = 0x4, fixed_abs, tag = 'smem constant byte address 0x4 - core index']
  #allocation1 [shape = 'u32[144,128]{1,0:T(1,128)}', space=vmem, size = 0x12000, scoped, tag = 'internal scratch']
  %s0 = inlined_call_operand.vmem [shape: bf16[512,27], index: 0, kind: input, shape index: {}]
  %s1 = inlined_call_operand.vmem [shape: bf16[27,128], index: 1, kind: input, shape index: {}]
  %s2 = inlined_call_operand.hbm [shape: f32[1,128], index: 2, kind: input, shape index: {}]
  %s3 = inlined_call_operand.vmem [shape: bf16[512,128], index: 3, kind: output, shape index: {}]
  %s4 = sld [smem:[#allocation0]]
  $region49: #{discriminator_forward.3} parent=0
    _
  %s6 = ssub.s32 1, %s4
  %s7 = scalar_select 0, %s6, %s4
  $region1: #{discriminator_forward.3} parent=0
    #allocation2 [shape = 'u8[512]{0}', space=vmem, size = 0x400, scoped, tag = 'input window, operand 2, single buffered']
    #allocation3 [shape = 's32[2]{0}', space=sflag, size = 0x8, scoped, tag = 'scoped memory for discriminator_forward.3']
    %8 = vsyncpa [#allocation3], 0
    loop: start=0, step=1, limit=4
    $region2: #{discriminator_forward.3} parent=1 // loop_pre_header
      _
    $region3: #{discriminator_forward.3} parent=1 // loop_header
      %s10 = sphi 0, %s14
      %p11 = scmp.ge.s32.totalorder %s10, 4
      %s20 = sphi 0, %s22
      %s23 = sphi 0, %s20
      %s24 = sphi 0, %s23
      %s40 = sphi 0, %s24
      %s44 = sphi 0, %s44
      %s46 = sphi 0, %s44
      %s47 = sphi 0, %s46
      %s61 = sphi 0, %s47
      %s65 = sphi 0, %s65
      %s67 = sphi 0, %s65
      %s68 = sphi 0, %s67
      %s82 = sphi 0, %s68
      %s88 = sphi 0, %s90
      %s91 = sphi 0, %s88
      %s92 = sphi 0, %s91
      %s108 = sphi 0, %s92
    $region4: #{discriminator_forward.3} parent=1 // loop_header_branch
      %13 = sbr.rel (%p11) target = $region8
    $region5: #{discriminator_forward.3} parent=1 // loop_body
      %s15 = ssub.s32 %s10, 1
      %s16 = ssub.s32 %s10, 2
      %s17 = sadd.s32 %s10, 1
      %s18 = ssub.s32 %s10, %s17
      %p19 = scmp.eq.s32.totalorder %s18, 0
      %s21 = sadd.s32 %s20, 1
      %s22 = scalar_select %p19, %s20, %s21
      %p25 = pneg %p19
      %p26 = scmp.eq.s32.totalorder %s10, 1
      %p27 = por %p25, %p26
      %p28 = scmp.ne.s32.totalorder %s20, %s23
      %p29 = scmp.eq.s32.totalorder %s10, 0
      %p30 = por %p28, %p29
      %p31 = scmp.ne.s32.totalorder %s20, %s23
      %p32 = scmp.eq.s32.totalorder %s15, 1
      %p33 = por %p31, %p32
      %p34 = scmp.ne.s32.totalorder %s23, %s24
      %p35 = scmp.eq.s32.totalorder %s15, 0
      %p36 = por %p34, %p35
      %p37 = scmp.ne.s32.totalorder %s23, %s24
      %p38 = scmp.eq.s32.totalorder %s16, 1
      %p39 = por %p37, %p38
      %p41 = scmp.ne.s32.totalorder %s24, %s40
      %p42 = scmp.eq.s32.totalorder %s16, 0
      %p43 = por %p41, %p42
      %s45 = sadd.s32 %s44, 1
      %p48 = scmp.eq.s32.totalorder %s10, 1
      %p49 = scmp.ne.s32.totalorder %s44, %s46
      %p50 = scmp.eq.s32.totalorder %s10, 0
      %p51 = por %p49, %p50
      %p52 = scmp.ne.s32.totalorder %s44, %s46
      %p53 = scmp.eq.s32.totalorder %s15, 1
      %p54 = por %p52, %p53
      %p55 = scmp.ne.s32.totalorder %s46, %s47
      %p56 = scmp.eq.s32.totalorder %s15, 0
      %p57 = por %p55, %p56
      %p58 = scmp.ne.s32.totalorder %s46, %s47
      %p59 = scmp.eq.s32.totalorder %s16, 1
      %p60 = por %p58, %p59
      %p62 = scmp.ne.s32.totalorder %s47, %s61
      %p63 = scmp.eq.s32.totalorder %s16, 0
      %p64 = por %p62, %p63
      %s66 = sadd.s32 %s65, 1
      %p69 = scmp.eq.s32.totalorder %s10, 1
      %p70 = scmp.ne.s32.totalorder %s65, %s67
      %p71 = scmp.eq.s32.totalorder %s10, 0
      %p72 = por %p70, %p71
      %p73 = scmp.ne.s32.totalorder %s65, %s67
      %p74 = scmp.eq.s32.totalorder %s15, 1
      %p75 = por %p73, %p74
      %p76 = scmp.ne.s32.totalorder %s67, %s68
      %p77 = scmp.eq.s32.totalorder %s15, 0
      %p78 = por %p76, %p77
      %p79 = scmp.ne.s32.totalorder %s67, %s68
      %p80 = scmp.eq.s32.totalorder %s16, 1
      %p81 = por %p79, %p80
      %p83 = scmp.ne.s32.totalorder %s68, %s82
      %p84 = scmp.eq.s32.totalorder %s16, 0
      %p85 = por %p83, %p84
      %s86 = ssub.s32 %s10, %s17
      %p87 = scmp.eq.s32.totalorder %s86, 0
      %s89 = sadd.s32 %s88, 1
      %s90 = scalar_select %p87, %s88, %s89
      %p93 = pneg %p87
      %p94 = scmp.eq.s32.totalorder %s10, 1
      %p95 = por %p93, %p94
      %p96 = scmp.ne.s32.totalorder %s88, %s91
      %p97 = scmp.eq.s32.totalorder %s10, 0
      %p98 = por %p96, %p97
      %p99 = scmp.ne.s32.totalorder %s88, %s91
      %p100 = scmp.eq.s32.totalorder %s15, 1
      %p101 = por %p99, %p100
      %p102 = scmp.ne.s32.totalorder %s91, %s92
      %p103 = scmp.eq.s32.totalorder %s15, 0
      %p104 = por %p102, %p103
      %p105 = scmp.ne.s32.totalorder %s91, %s92
      %p106 = scmp.eq.s32.totalorder %s16, 1
      %p107 = por %p105, %p106
      %p109 = scmp.ne.s32.totalorder %s92, %s108
      %p110 = scmp.eq.s32.totalorder %s16, 0
      %p111 = por %p109, %p110
      %p112 = scmp.le.s32.totalorder 1, %s10
      %p113 = scmp.lt.s32.totalorder %s10, 3
      %p114 = pnand %p112, %p113
      %p115 = pneg %p114
      // Predicated region
      $region9: #{discriminator_forward.3} parent=5 // pred_check
        _
      $region10: #{discriminator_forward.3} parent=5 // pred_check_branch
        %117 = sbr.rel (%p114) target = $region12
      $region11: #{discriminator_forward.3} parent=5 // pred_region
        %s118 = ssub.s32 %s10, 1
        // Predicated region
        $region13: #{discriminator_forward.3} parent=11 // pred_check
          %p119 = pneg %p57
        $region14: #{discriminator_forward.3} parent=11 // pred_check_branch
          %121 = sbr.rel (%p119) target = $region16
        $region15: #{discriminator_forward.3} parent=11 // pred_region
          _
        $region16: #{discriminator_forward.3} parent=11 // pred_fallthru
          _
        // Predicated region
        $region17: #{discriminator_forward.3} parent=11 // pred_check
          %p122 = pneg %p78
        $region18: #{discriminator_forward.3} parent=11 // pred_check_branch
          %124 = sbr.rel (%p122) target = $region20
        $region19: #{discriminator_forward.3} parent=11 // pred_region
          %s126 = ssub.s32 16, 16
          %127 = vsyncadd [#allocation3], %s126
          %s129 = sshll.u32 [#allocation2], 4
          %s130 = int_to_ptr.vmem [resolvable:$true] %s129
          %132 = dma.hbm_to_vmem [thread:$0]  %s2, 16, %s130, [#allocation3]
        $region20: #{discriminator_forward.3} parent=11 // pred_fallthru
          _
      $region12: #{discriminator_forward.3} parent=5 // pred_fallthru
        _
      %p133 = scmp.lt.s32.totalorder %s10, 2
      // Predicated region
      $region21: #{discriminator_forward.3} parent=5 // pred_check
        %p134 = pneg %p133
      $region22: #{discriminator_forward.3} parent=5 // pred_check_branch
        %136 = sbr.rel (%p134) target = $region24
      $region23: #{discriminator_forward.3} parent=5 // pred_region
        // Predicated region
        $region25: #{discriminator_forward.3} parent=23 // pred_check
          %p137 = pneg %p30
        $region26: #{discriminator_forward.3} parent=23 // pred_check_branch
          %139 = sbr.rel (%p137) target = $region28
        $region27: #{discriminator_forward.3} parent=23 // pred_region
          %s140 = smul.u32 32, %s10
          %p141 = scmp.lt.s32.totalorder %s140, 63
          %s142 = scalar_select %p141, %s140, 63
          %s143 = smul.addr %s142, 4
          %s144 = scalar_lea.vmem %s0, %s143
          %s145 = smul.u32 32, %s10
        $region28: #{discriminator_forward.3} parent=23 // pred_fallthru
          _
      $region24: #{discriminator_forward.3} parent=5 // pred_fallthru
        _
      %p146 = scmp.le.s32.totalorder 1, %s10
      %p147 = scmp.lt.s32.totalorder %s10, 3
      %p148 = pnand %p146, %p147
      %p149 = pneg %p148
      // Predicated region
      $region29: #{discriminator_forward.3} parent=5 // pred_check
        _
      $region30: #{discriminator_forward.3} parent=5 // pred_check_branch
        %151 = sbr.rel (%p148) target = $region32
      $region31: #{discriminator_forward.3} parent=5 // pred_region
        %s152 = ssub.s32 %s10, 1
        // Predicated region
        $region33: #{discriminator_forward.3} parent=31 // pred_check
          %p153 = pneg %p78
        $region34: #{discriminator_forward.3} parent=31 // pred_check_branch
          %155 = sbr.rel (%p153) target = $region36
        $region35: #{discriminator_forward.3} parent=31 // pred_region
          %156 = dma.done [#allocation3], 16
        $region36: #{discriminator_forward.3} parent=31 // pred_fallthru
          _
        %s157 = smul.u32 32, %s15
        %p158 = scmp.lt.s32.totalorder %s157, 63
        %s159 = scalar_select %p158, %s157, 63
        %s160 = smul.addr %s159, 4
        %s161 = scalar_lea.vmem %s0, %s160
        %p162 = pneg %p36
        %p163 = pneg %p33
        %p164 = pneg %p57
        %p165 = pneg %p54
        %p166 = pneg %p78
        %p167 = pneg %p75
        %p168 = pneg %p104
        %p169 = pneg %p101
        %s170 = smul.u32 32, %s15
        %p171 = scmp.lt.s32.totalorder %s170, 63
        %s172 = scalar_select %p171, %s170, 63
        %s173 = smul.addr %s172, 4
        %s174 = scalar_lea.vmem %s3, %s173
        %s175 = smul.u32 32, %s15
        %p176 = scmp.lt.s32.totalorder %s175, 63
        %s177 = scalar_select %p176, %s175, 63
        %s178 = smul.addr %s177, 4
        %s179 = scalar_lea.vmem %s0, %s178
        %s180 = smul.u32 32, %s15
        %s181 = smul.u32 32, %s15
        %p182 = scmp.lt.s32.totalorder %s181, 63
        %s183 = scalar_select %p182, %s181, 63
        %s184 = smul.addr %s183, 4
        %s185 = scalar_lea.vmem %s3, %s184
        %s186 = smul.u32 32, %s15
        %v188 = vld [vmem:[%s179] sm:$0xf]
        %v189 = vld [vmem:[%s179 + $0x4] sm:$0xf]
        %v190 = vld [vmem:[%s179 + $0x8] sm:$0xf]
        %v191 = vld [vmem:[%s179 + $0xc] sm:$0xf]
        %v192 = vld [vmem:[%s179 + $0x10] sm:$0xf]
        %v193 = vld [vmem:[%s179 + $0x14] sm:$0xf]
        %v194 = vld [vmem:[%s179 + $0x18] sm:$0xf]
        %v195 = vld [vmem:[%s179 + $0x1c] sm:$0xf]
        %v196 = vld [vmem:[%s179 + $0x20] sm:$0xf]
        %v197 = vld [vmem:[%s179 + $0x24] sm:$0xf]
        %v198 = vld [vmem:[%s179 + $0x28] sm:$0xf]
        %v199 = vld [vmem:[%s179 + $0x2c] sm:$0xf]
        %v200 = vld [vmem:[%s179 + $0x30] sm:$0xf]
        %v201 = vld [vmem:[%s179 + $0x34] sm:$0xf]
        %v202 = vld [vmem:[%s179 + $0x38] sm:$0xf]
        %v203 = vld [vmem:[%s179 + $0x3c] sm:$0xf]
        %v204 = vld [vmem:[%s179 + $0x40] sm:$0xf]
        %v205 = vld [vmem:[%s179 + $0x44] sm:$0xf]
        %v206 = vld [vmem:[%s179 + $0x48] sm:$0xf]
        %v207 = vld [vmem:[%s179 + $0x4c] sm:$0xf]
        %v208 = vld [vmem:[%s179 + $0x50] sm:$0xf]
        %v209 = vld [vmem:[%s179 + $0x54] sm:$0xf]
        %v210 = vld [vmem:[%s179 + $0x58] sm:$0xf]
        %v211 = vld [vmem:[%s179 + $0x5c] sm:$0xf]
        %v212 = vld [vmem:[%s179 + $0x60] sm:$0xf]
        %v213 = vld [vmem:[%s179 + $0x64] sm:$0xf]
        %v214 = vld [vmem:[%s179 + $0x68] sm:$0xf]
        %v215 = vld [vmem:[%s179 + $0x6c] sm:$0xf]
        %v216 = vld [vmem:[%s179 + $0x70] sm:$0xf]
        %v217 = vld [vmem:[%s179 + $0x74] sm:$0xf]
        %v218 = vld [vmem:[%s179 + $0x78] sm:$0xf]
        %v219 = vld [vmem:[%s179 + $0x7c] sm:$0xf]
        %v220 = vld [vmem:[%s1] sm:$0xf]
        %v221 = vld [vmem:[%s1 + $0x4] sm:$0xf]
        %v222 = vld [vmem:[%s1 + $0x8] sm:$0xf]
        %v223 = vld [vmem:[%s1 + $0xc] sm:$0x3]
        %v224 = vld [vmem:[#allocation2] sm:$0x1]
        %v226 = vlaneseq
        %v227 = vshrl.u32 %v226, 7
        %v228 = vsub.s32 0, %v227
        %v229 = vrot.slane %v224, %v228
        %v263 = vunpack.c.l.b16 %v188
        %v264 = vunpack.c.l.b16 %v189
        %v265 = vunpack.c.l.b16 %v190
        %v266 = vunpack.c.l.b16 %v191
        %v267 = vunpack.c.l.b16 %v192
        %v268 = vunpack.c.l.b16 %v193
        %v269 = vunpack.c.l.b16 %v194
        %v270 = vunpack.c.l.b16 %v195
        %v271 = vunpack.c.l.b16 %v196
        %v272 = vunpack.c.l.b16 %v197
        %v273 = vunpack.c.l.b16 %v198
        %v274 = vunpack.c.l.b16 %v199
        %v275 = vunpack.c.l.b16 %v200
        %v276 = vunpack.c.l.b16 %v201
        %v277 = vunpack.c.l.b16 %v202
        %v278 = vunpack.c.l.b16 %v203
        %v279 = vunpack.c.l.b16 %v204
        %v280 = vunpack.c.l.b16 %v205
        %v281 = vunpack.c.l.b16 %v206
        %v282 = vunpack.c.l.b16 %v207
        %v283 = vunpack.c.l.b16 %v208
        %v284 = vunpack.c.l.b16 %v209
        %v285 = vunpack.c.l.b16 %v210
        %v286 = vunpack.c.l.b16 %v211
        %v287 = vunpack.c.l.b16 %v212
        %v288 = vunpack.c.l.b16 %v213
        %v289 = vunpack.c.l.b16 %v214
        %v290 = vunpack.c.l.b16 %v215
        %v291 = vunpack.c.l.b16 %v216
        %v292 = vunpack.c.l.b16 %v217
        %v293 = vunpack.c.l.b16 %v218
        %v294 = vunpack.c.l.b16 %v219
        %v295 = vpack.c.b16 %v264, %v263
        %v296 = vpack.c.b16 %v266, %v265
        %v297 = vpack.c.b16 %v268, %v267
        %v298 = vpack.c.b16 %v270, %v269
        %v299 = vpack.c.b16 %v272, %v271
        %v300 = vpack.c.b16 %v274, %v273
        %v301 = vpack.c.b16 %v276, %v275
        %v302 = vpack.c.b16 %v278, %v277
        %v303 = vpack.c.b16 %v280, %v279
        %v304 = vpack.c.b16 %v282, %v281
        %v305 = vpack.c.b16 %v284, %v283
        %v306 = vpack.c.b16 %v286, %v285
        %v307 = vpack.c.b16 %v288, %v287
        %v308 = vpack.c.b16 %v290, %v289
        %v309 = vpack.c.b16 %v292, %v291
        %v310 = vpack.c.b16 %v294, %v293
        %v315 = vunpack.c.l.b16 %v220
        %v316 = vunpack.c.l.b16 %v221
        %v317 = vunpack.c.l.b16 %v222
        %v318 = vunpack.c.l.b16 %v223
        %v319 = vpack.c.b16 %v316, %v315
        %v320 = vpack.c.b16 %v318, %v317
        %vm322 = vcmask 220160
        %v324 = vsel %vm322, %v295, 0
        %v327 = vsel %vm322, %v296, 0
        %v330 = vsel %vm322, %v297, 0
        %v333 = vsel %vm322, %v298, 0
        %v336 = vsel %vm322, %v299, 0
        %v339 = vsel %vm322, %v300, 0
        %v342 = vsel %vm322, %v301, 0
        %v345 = vsel %vm322, %v302, 0
        %v348 = vsel %vm322, %v303, 0
        %v351 = vsel %vm322, %v304, 0
        %v354 = vsel %vm322, %v305, 0
        %v357 = vsel %vm322, %v306, 0
        %v360 = vsel %vm322, %v307, 0
        %v363 = vsel %vm322, %v308, 0
        %v366 = vsel %vm322, %v309, 0
        %v369 = vsel %vm322, %v310, 0
        %vm371 = vcmask 1044480
        %vm372 = vcmask 1045504
        %v373 = vsel %vm371, 4294967295, 65535
        %v374 = vsel %vm372, %v373, 0
        %v376 = vand.u32 %v320, %v374
        %378 = vmatprep.subr.bf16.mxu0 0
        %379 = vmatpush1.bf16.msra.mxu0 %v319
        %380 = vmatprep.subr.bf16.mxu0 0
        %381 = vmatpush1.bf16.msra.mxu0 %v376
        %382 = vmatprep.subr.bf16.mxu0 0
        %383 = vmatpush1.bf16.msra.mxu0 0
        %384 = vmatprep.subr.bf16.mxu0 0
        %385 = vmatpush1.bf16.msra.mxu0 0
        %386 = vmatprep.subr.bf16.mxu0 0
        %387 = vmatpush1.bf16.msra.mxu0 0
        %388 = vmatprep.subr.bf16.mxu0 0
        %389 = vmatpush1.bf16.msra.mxu0 0
        %390 = vmatprep.subr.bf16.mxu0 0
        %391 = vmatpush1.bf16.msra.mxu0 0
        %392 = vmatprep.subr.bf16.mxu0 0
        %393 = vmatpush1.bf16.msra.mxu0 0
        %394 = vmatprep.subr.bf16.mxu0 0
        %395 = vmatpush1.bf16.msra.mxu0 0
        %396 = vmatprep.subr.bf16.mxu0 0
        %397 = vmatpush1.bf16.msra.mxu0 0
        %398 = vmatprep.subr.bf16.mxu0 0
        %399 = vmatpush1.bf16.msra.mxu0 0
        %400 = vmatprep.subr.bf16.mxu0 0
        %401 = vmatpush1.bf16.msra.mxu0 0
        %402 = vmatprep.subr.bf16.mxu0 0
        %403 = vmatpush1.bf16.msra.mxu0 0
        %404 = vmatprep.subr.bf16.mxu0 0
        %405 = vmatpush1.bf16.msra.mxu0 0
        %406 = vmatprep.subr.bf16.mxu0 0
        %407 = vmatpush1.bf16.msra.mxu0 0
        %408 = vmatprep.subr.bf16.mxu0 0
        %409 = vmatpush1.bf16.msra.mxu0 0
        %410 = vmatprep.mubr.bf16.mxu0 0
        %411 = vmatmul.mubr.bf16.gmra.mrb[0].mxu0 %v324
        %v412 = vpop.f32.mrb[0].mxu0
        %v413 = vadd.f32 %v229, %v412
        %v414 = vpop.f32.mrb[0].mxu0
        %v415 = vpop.f32.mrb[0].mxu0
        %v416 = vadd.f32 %v229, %v415
        %v417 = vpop.f32.mrb[0].mxu0
        %418 = vmatprep.mubr.bf16.mxu0 0
        %419 = vmatmul.mubr.bf16.gmra.mrb[0].mxu0 %v327
        %v420 = vpop.f32.mrb[0].mxu0
        %v421 = vadd.f32 %v229, %v420
        %v422 = vpop.f32.mrb[0].mxu0
        %v423 = vpop.f32.mrb[0].mxu0
        %v424 = vadd.f32 %v229, %v423
        %v425 = vpop.f32.mrb[0].mxu0
        %426 = vmatprep.mubr.bf16.mxu0 0
        %427 = vmatmul.mubr.bf16.gmra.mrb[0].mxu0 %v330
        %v428 = vpop.f32.mrb[0].mxu0
        %v429 = vadd.f32 %v229, %v428
        %v430 = vpop.f32.mrb[0].mxu0
        %v431 = vpop.f32.mrb[0].mxu0
        %v432 = vadd.f32 %v229, %v431
        %v433 = vpop.f32.mrb[0].mxu0
        %434 = vmatprep.mubr.bf16.mxu0 0
        %435 = vmatmul.mubr.bf16.gmra.mrb[0].mxu0 %v333
        %v436 = vpop.f32.mrb[0].mxu0
        %v437 = vadd.f32 %v229, %v436
        %v438 = vpop.f32.mrb[0].mxu0
        %v439 = vpop.f32.mrb[0].mxu0
        %v440 = vadd.f32 %v229, %v439
        %v441 = vpop.f32.mrb[0].mxu0
        %442 = vmatprep.mubr.bf16.mxu0 0
        %443 = vmatmul.mubr.bf16.gmra.mrb[0].mxu0 %v336
        %v444 = vpop.f32.mrb[0].mxu0
        %v445 = vadd.f32 %v229, %v444
        %v446 = vpop.f32.mrb[0].mxu0
        %v447 = vpop.f32.mrb[0].mxu0
        %v448 = vadd.f32 %v229, %v447
        %v449 = vpop.f32.mrb[0].mxu0
        %450 = vmatprep.mubr.bf16.mxu0 0
        %451 = vmatmul.mubr.bf16.gmra.mrb[0].mxu0 %v339
        %v452 = vpop.f32.mrb[0].mxu0
        %v453 = vadd.f32 %v229, %v452
        %v454 = vpop.f32.mrb[0].mxu0
        %v455 = vpop.f32.mrb[0].mxu0
        %v456 = vadd.f32 %v229, %v455
        %v457 = vpop.f32.mrb[0].mxu0
        %458 = vmatprep.mubr.bf16.mxu0 0
        %459 = vmatmul.mubr.bf16.gmra.mrb[0].mxu0 %v342
        %v460 = vpop.f32.mrb[0].mxu0
        %v461 = vadd.f32 %v229, %v460
        %v462 = vpop.f32.mrb[0].mxu0
        %v463 = vpop.f32.mrb[0].mxu0
        %v464 = vadd.f32 %v229, %v463
        %v465 = vpop.f32.mrb[0].mxu0
        %466 = vmatprep.mubr.bf16.mxu0 0
        %467 = vmatmul.mubr.bf16.gmra.mrb[0].mxu0 %v345
        %v468 = vpop.f32.mrb[0].mxu0
        %v469 = vadd.f32 %v229, %v468
        %v470 = vpop.f32.mrb[0].mxu0
        %v471 = vpop.f32.mrb[0].mxu0
        %v472 = vadd.f32 %v229, %v471
        %v473 = vpop.f32.mrb[0].mxu0
        %474 = vmatprep.mubr.bf16.mxu0 0
        %475 = vmatmul.mubr.bf16.gmra.mrb[0].mxu0 %v348
        %v476 = vpop.f32.mrb[0].mxu0
        %v477 = vadd.f32 %v229, %v476
        %v478 = vpop.f32.mrb[0].mxu0
        %v479 = vpop.f32.mrb[0].mxu0
        %v480 = vadd.f32 %v229, %v479
        %v481 = vpop.f32.mrb[0].mxu0
        %482 = vmatprep.mubr.bf16.mxu0 0
        %483 = vmatmul.mubr.bf16.gmra.mrb[0].mxu0 %v351
        %v484 = vpop.f32.mrb[0].mxu0
        %v485 = vadd.f32 %v229, %v484
        %v486 = vpop.f32.mrb[0].mxu0
        %v487 = vpop.f32.mrb[0].mxu0
        %v488 = vadd.f32 %v229, %v487
        %v489 = vpop.f32.mrb[0].mxu0
        %490 = vmatprep.mubr.bf16.mxu0 0
        %491 = vmatmul.mubr.bf16.gmra.mrb[0].mxu0 %v354
        %v492 = vpop.f32.mrb[0].mxu0
        %v493 = vadd.f32 %v229, %v492
        %v494 = vpop.f32.mrb[0].mxu0
        %v495 = vpop.f32.mrb[0].mxu0
        %v496 = vadd.f32 %v229, %v495
        %v497 = vpop.f32.mrb[0].mxu0
        %498 = vmatprep.mubr.bf16.mxu0 0
        %499 = vmatmul.mubr.bf16.gmra.mrb[0].mxu0 %v357
        %v500 = vpop.f32.mrb[0].mxu0
        %v501 = vadd.f32 %v229, %v500
        %v502 = vpop.f32.mrb[0].mxu0
        %v503 = vpop.f32.mrb[0].mxu0
        %v504 = vadd.f32 %v229, %v503
        %v505 = vpop.f32.mrb[0].mxu0
        %506 = vmatprep.mubr.bf16.mxu0 0
        %507 = vmatmul.mubr.bf16.gmra.mrb[0].mxu0 %v360
        %v508 = vpop.f32.mrb[0].mxu0
        %v509 = vadd.f32 %v229, %v508
        %v510 = vpop.f32.mrb[0].mxu0
        %v511 = vpop.f32.mrb[0].mxu0
        %v512 = vadd.f32 %v229, %v511
        %v513 = vpop.f32.mrb[0].mxu0
        %514 = vmatprep.mubr.bf16.mxu0 0
        %515 = vmatmul.mubr.bf16.gmra.mrb[0].mxu0 %v363
        %v516 = vpop.f32.mrb[0].mxu0
        %v517 = vadd.f32 %v229, %v516
        %v518 = vpop.f32.mrb[0].mxu0
        %v519 = vpop.f32.mrb[0].mxu0
        %v520 = vadd.f32 %v229, %v519
        %v521 = vpop.f32.mrb[0].mxu0
        %522 = vmatprep.mubr.bf16.mxu0 0
        %523 = vmatmul.mubr.bf16.gmra.mrb[0].mxu0 %v366
        %v524 = vpop.f32.mrb[0].mxu0
        %v525 = vadd.f32 %v229, %v524
        %v526 = vpop.f32.mrb[0].mxu0
        %v527 = vpop.f32.mrb[0].mxu0
        %v528 = vadd.f32 %v229, %v527
        %v529 = vpop.f32.mrb[0].mxu0
        %530 = vmatprep.mubr.bf16.mxu0 0
        %531 = vmatmul.mubr.bf16.gmra.mrb[0].mxu0 %v369
        %v532 = vpop.f32.mrb[0].mxu0
        %v533 = vadd.f32 %v229, %v532
        %v534 = vpop.f32.mrb[0].mxu0
        %v535 = vpop.f32.mrb[0].mxu0
        %v536 = vadd.f32 %v229, %v535
        %v537 = vpop.f32.mrb[0].mxu0
        %538 = vdwg.mxu0
        %vm539 = vcmp.gt.f32.partialorder %v413, 0.0
        %vm540 = vcmp.gt.f32.partialorder %v416, 0.0
        %vm541 = vcmp.gt.f32.partialorder %v421, 0.0
        %vm542 = vcmp.gt.f32.partialorder %v424, 0.0
        %vm543 = vcmp.gt.f32.partialorder %v429, 0.0
        %vm544 = vcmp.gt.f32.partialorder %v432, 0.0
        %vm545 = vcmp.gt.f32.partialorder %v437, 0.0
        %vm546 = vcmp.gt.f32.partialorder %v440, 0.0
        %vm547 = vcmp.gt.f32.partialorder %v445, 0.0
        %vm548 = vcmp.gt.f32.partialorder %v448, 0.0
        %vm549 = vcmp.gt.f32.partialorder %v453, 0.0
        %vm550 = vcmp.gt.f32.partialorder %v456, 0.0
        %vm551 = vcmp.gt.f32.partialorder %v461, 0.0
        %vm552 = vcmp.gt.f32.partialorder %v464, 0.0
        %vm553 = vcmp.gt.f32.partialorder %v469, 0.0
        %vm554 = vcmp.gt.f32.partialorder %v472, 0.0
        %vm555 = vcmp.gt.f32.partialorder %v477, 0.0
        %vm556 = vcmp.gt.f32.partialorder %v480, 0.0
        %vm557 = vcmp.gt.f32.partialorder %v485, 0.0
        %vm558 = vcmp.gt.f32.partialorder %v488, 0.0
        %vm559 = vcmp.gt.f32.partialorder %v493, 0.0
        %vm560 = vcmp.gt.f32.partialorder %v496, 0.0
        %vm561 = vcmp.gt.f32.partialorder %v501, 0.0
        %vm562 = vcmp.gt.f32.partialorder %v504, 0.0
        %vm563 = vcmp.gt.f32.partialorder %v509, 0.0
        %vm564 = vcmp.gt.f32.partialorder %v512, 0.0
        %vm565 = vcmp.gt.f32.partialorder %v517, 0.0
        %vm566 = vcmp.gt.f32.partialorder %v520, 0.0
        %vm567 = vcmp.gt.f32.partialorder %v525, 0.0
        %vm568 = vcmp.gt.f32.partialorder %v528, 0.0
        %vm569 = vcmp.gt.f32.partialorder %v533, 0.0
        %vm570 = vcmp.gt.f32.partialorder %v536, 0.0
        %v571 = vmul.f32 %v413, 0.01
        %v572 = vmul.f32 %v416, 0.01
        %v573 = vmul.f32 %v421, 0.01
        %v574 = vmul.f32 %v424, 0.01
        %v575 = vmul.f32 %v429, 0.01
        %v576 = vmul.f32 %v432, 0.01
        %v577 = vmul.f32 %v437, 0.01
        %v578 = vmul.f32 %v440, 0.01
        %v579 = vmul.f32 %v445, 0.01
        %v580 = vmul.f32 %v448, 0.01
        %v581 = vmul.f32 %v453, 0.01
        %v582 = vmul.f32 %v456, 0.01
        %v583 = vmul.f32 %v461, 0.01
        %v584 = vmul.f32 %v464, 0.01
        %v585 = vmul.f32 %v469, 0.01
        %v586 = vmul.f32 %v472, 0.01
        %v587 = vmul.f32 %v477, 0.01
        %v588 = vmul.f32 %v480, 0.01
        %v589 = vmul.f32 %v485, 0.01
        %v590 = vmul.f32 %v488, 0.01
        %v591 = vmul.f32 %v493, 0.01
        %v592 = vmul.f32 %v496, 0.01
        %v593 = vmul.f32 %v501, 0.01
        %v594 = vmul.f32 %v504, 0.01
        %v595 = vmul.f32 %v509, 0.01
        %v596 = vmul.f32 %v512, 0.01
        %v597 = vmul.f32 %v517, 0.01
        %v598 = vmul.f32 %v520, 0.01
        %v599 = vmul.f32 %v525, 0.01
        %v600 = vmul.f32 %v528, 0.01
        %v601 = vmul.f32 %v533, 0.01
        %v602 = vmul.f32 %v536, 0.01
        %v603 = vsel %vm539, %v413, %v571
        %v604 = vsel %vm540, %v416, %v572
        %v605 = vsel %vm541, %v421, %v573
        %v606 = vsel %vm542, %v424, %v574
        %v607 = vsel %vm543, %v429, %v575
        %v608 = vsel %vm544, %v432, %v576
        %v609 = vsel %vm545, %v437, %v577
        %v610 = vsel %vm546, %v440, %v578
        %v611 = vsel %vm547, %v445, %v579
        %v612 = vsel %vm548, %v448, %v580
        %v613 = vsel %vm549, %v453, %v581
        %v614 = vsel %vm550, %v456, %v582
        %v615 = vsel %vm551, %v461, %v583
        %v616 = vsel %vm552, %v464, %v584
        %v617 = vsel %vm553, %v469, %v585
        %v618 = vsel %vm554, %v472, %v586
        %v619 = vsel %vm555, %v477, %v587
        %v620 = vsel %vm556, %v480, %v588
        %v621 = vsel %vm557, %v485, %v589
        %v622 = vsel %vm558, %v488, %v590
        %v623 = vsel %vm559, %v493, %v591
        %v624 = vsel %vm560, %v496, %v592
        %v625 = vsel %vm561, %v501, %v593
        %v626 = vsel %vm562, %v504, %v594
        %v627 = vsel %vm563, %v509, %v595
        %v628 = vsel %vm564, %v512, %v596
        %v629 = vsel %vm565, %v517, %v597
        %v630 = vsel %vm566, %v520, %v598
        %v631 = vsel %vm567, %v525, %v599
        %v632 = vsel %vm568, %v528, %v600
        %v633 = vsel %vm569, %v533, %v601
        %v634 = vsel %vm570, %v536, %v602
        %v635 = vpack.c.bf16 %v604, %v603
        %v636 = vpack.c.bf16 %v606, %v605
        %v637 = vpack.c.bf16 %v608, %v607
        %v638 = vpack.c.bf16 %v610, %v609
        %v639 = vpack.c.bf16 %v612, %v611
        %v640 = vpack.c.bf16 %v614, %v613
        %v641 = vpack.c.bf16 %v616, %v615
        %v642 = vpack.c.bf16 %v618, %v617
        %v643 = vpack.c.bf16 %v620, %v619
        %v644 = vpack.c.bf16 %v622, %v621
        %v645 = vpack.c.bf16 %v624, %v623
        %v646 = vpack.c.bf16 %v626, %v625
        %v647 = vpack.c.bf16 %v628, %v627
        %v648 = vpack.c.bf16 %v630, %v629
        %v649 = vpack.c.bf16 %v632, %v631
        %v650 = vpack.c.bf16 %v634, %v633
        %v667 = vunpack.c.l.b16 %v635
        %v668 = vunpack.c.h.b16 %v635
        %v669 = vunpack.c.l.b16 %v636
        %v670 = vunpack.c.h.b16 %v636
        %v671 = vunpack.c.l.b16 %v637
        %v672 = vunpack.c.h.b16 %v637
        %v673 = vunpack.c.l.b16 %v638
        %v674 = vunpack.c.h.b16 %v638
        %v675 = vunpack.c.l.b16 %v639
        %v676 = vunpack.c.h.b16 %v639
        %v677 = vunpack.c.l.b16 %v640
        %v678 = vunpack.c.h.b16 %v640
        %v679 = vunpack.c.l.b16 %v641
        %v680 = vunpack.c.h.b16 %v641
        %v681 = vunpack.c.l.b16 %v642
        %v682 = vunpack.c.h.b16 %v642
        %v683 = vunpack.c.l.b16 %v643
        %v684 = vunpack.c.h.b16 %v643
        %v685 = vunpack.c.l.b16 %v644
        %v686 = vunpack.c.h.b16 %v644
        %v687 = vunpack.c.l.b16 %v645
        %v688 = vunpack.c.h.b16 %v645
        %v689 = vunpack.c.l.b16 %v646
        %v690 = vunpack.c.h.b16 %v646
        %v691 = vunpack.c.l.b16 %v647
        %v692 = vunpack.c.h.b16 %v647
        %v693 = vunpack.c.l.b16 %v648
        %v694 = vunpack.c.h.b16 %v648
        %v695 = vunpack.c.l.b16 %v649
        %v696 = vunpack.c.h.b16 %v649
        %v697 = vunpack.c.l.b16 %v650
        %v698 = vunpack.c.h.b16 %v650
        %v699 = vpack.c.b16 %v667, %v667
        %v700 = vpack.c.b16 %v668, %v668
        %v701 = vpack.c.b16 %v669, %v669
        %v702 = vpack.c.b16 %v670, %v670
        %v703 = vpack.c.b16 %v671, %v671
        %v704 = vpack.c.b16 %v672, %v672
        %v705 = vpack.c.b16 %v673, %v673
        %v706 = vpack.c.b16 %v674, %v674
        %v707 = vpack.c.b16 %v675, %v675
        %v708 = vpack.c.b16 %v676, %v676
        %v709 = vpack.c.b16 %v677, %v677
        %v710 = vpack.c.b16 %v678, %v678
        %v711 = vpack.c.b16 %v679, %v679
        %v712 = vpack.c.b16 %v680, %v680
        %v713 = vpack.c.b16 %v681, %v681
        %v714 = vpack.c.b16 %v682, %v682
        %v715 = vpack.c.b16 %v683, %v683
        %v716 = vpack.c.b16 %v684, %v684
        %v717 = vpack.c.b16 %v685, %v685
        %v718 = vpack.c.b16 %v686, %v686
        %v719 = vpack.c.b16 %v687, %v687
        %v720 = vpack.c.b16 %v688, %v688
        %v721 = vpack.c.b16 %v689, %v689
        %v722 = vpack.c.b16 %v690, %v690
        %v723 = vpack.c.b16 %v691, %v691
        %v724 = vpack.c.b16 %v692, %v692
        %v725 = vpack.c.b16 %v693, %v693
        %v726 = vpack.c.b16 %v694, %v694
        %v727 = vpack.c.b16 %v695, %v695
        %v728 = vpack.c.b16 %v696, %v696
        %v729 = vpack.c.b16 %v697, %v697
        %v730 = vpack.c.b16 %v698, %v698
        %763 = vst [vmem:[%s185] sm:$0xf] %v699
        %764 = vst [vmem:[%s185 + $0x4] sm:$0xf] %v700
        %765 = vst [vmem:[%s185 + $0x8] sm:$0xf] %v701
        %766 = vst [vmem:[%s185 + $0xc] sm:$0xf] %v702
        %767 = vst [vmem:[%s185 + $0x10] sm:$0xf] %v703
        %768 = vst [vmem:[%s185 + $0x14] sm:$0xf] %v704
        %769 = vst [vmem:[%s185 + $0x18] sm:$0xf] %v705
        %770 = vst [vmem:[%s185 + $0x1c] sm:$0xf] %v706
        %771 = vst [vmem:[%s185 + $0x20] sm:$0xf] %v707
        %772 = vst [vmem:[%s185 + $0x24] sm:$0xf] %v708
        %773 = vst [vmem:[%s185 + $0x28] sm:$0xf] %v709
        %774 = vst [vmem:[%s185 + $0x2c] sm:$0xf] %v710
        %775 = vst [vmem:[%s185 + $0x30] sm:$0xf] %v711
        %776 = vst [vmem:[%s185 + $0x34] sm:$0xf] %v712
        %777 = vst [vmem:[%s185 + $0x38] sm:$0xf] %v713
        %778 = vst [vmem:[%s185 + $0x3c] sm:$0xf] %v714
        %779 = vst [vmem:[%s185 + $0x40] sm:$0xf] %v715
        %780 = vst [vmem:[%s185 + $0x44] sm:$0xf] %v716
        %781 = vst [vmem:[%s185 + $0x48] sm:$0xf] %v717
        %782 = vst [vmem:[%s185 + $0x4c] sm:$0xf] %v718
        %783 = vst [vmem:[%s185 + $0x50] sm:$0xf] %v719
        %784 = vst [vmem:[%s185 + $0x54] sm:$0xf] %v720
        %785 = vst [vmem:[%s185 + $0x58] sm:$0xf] %v721
        %786 = vst [vmem:[%s185 + $0x5c] sm:$0xf] %v722
        %787 = vst [vmem:[%s185 + $0x60] sm:$0xf] %v723
        %788 = vst [vmem:[%s185 + $0x64] sm:$0xf] %v724
        %789 = vst [vmem:[%s185 + $0x68] sm:$0xf] %v725
        %790 = vst [vmem:[%s185 + $0x6c] sm:$0xf] %v726
        %791 = vst [vmem:[%s185 + $0x70] sm:$0xf] %v727
        %792 = vst [vmem:[%s185 + $0x74] sm:$0xf] %v728
        %793 = vst [vmem:[%s185 + $0x78] sm:$0xf] %v729
        %794 = vst [vmem:[%s185 + $0x7c] sm:$0xf] %v730
        %s795 = smul.u32 32, %s15
        %p796 = scmp.lt.s32.totalorder %s795, 63
        %s797 = scalar_select %p796, %s795, 63
        %s798 = smul.addr %s797, 4
        %s799 = scalar_lea.vmem %s3, %s798
        // Predicated region
        $region37: #{discriminator_forward.3} parent=31 // pred_check
          %p800 = pneg %p101
        $region38: #{discriminator_forward.3} parent=31 // pred_check_branch
          %802 = sbr.rel (%p800) target = $region40
        $region39: #{discriminator_forward.3} parent=31 // pred_region
          %s803 = smul.u32 32, %s15
        $region40: #{discriminator_forward.3} parent=31 // pred_fallthru
          _
      $region32: #{discriminator_forward.3} parent=5 // pred_fallthru
        _
      %p804 = scmp.le.s32.totalorder 2, %s10
      // Predicated region
      $region41: #{discriminator_forward.3} parent=5 // pred_check
        %p805 = pneg %p804
      $region42: #{discriminator_forward.3} parent=5 // pred_check_branch
        %807 = sbr.rel (%p805) target = $region44
      $region43: #{discriminator_forward.3} parent=5 // pred_region
        %s808 = ssub.s32 %s10, 2
        // Predicated region
        $region45: #{discriminator_forward.3} parent=43 // pred_check
          %p809 = pneg %p107
        $region46: #{discriminator_forward.3} parent=43 // pred_check_branch
          %811 = sbr.rel (%p809) target = $region48
        $region47: #{discriminator_forward.3} parent=43 // pred_region
          %s812 = smul.u32 32, %s16
          %p813 = scmp.lt.s32.totalorder %s812, 63
          %s814 = scalar_select %p813, %s812, 63
          %s815 = smul.addr %s814, 4
          %s816 = scalar_lea.vmem %s3, %s815
        $region48: #{discriminator_forward.3} parent=43 // pred_fallthru
          _
      $region44: #{discriminator_forward.3} parent=5 // pred_fallthru
        _
    $region6: #{discriminator_forward.3} parent=1 // loop_footer
      %s14 = sadd.s32 1, %s10
    $region7: #{discriminator_forward.3} parent=1 // loop_footer_branch
      %9 = sbr.rel target = $region3
    $region8: #{discriminator_forward.3} parent=1 // loop_exit
      _
    %817 = vsyncpa [#allocation3], 1
    %s818 = scalar_lea.sflag [#allocation3], 1
    %819 = vsyncpa %s818, 1

// kernel: discriminator_forward.4
$region0: #{discriminator_forward.4}
  #allocation0 [shape = 'u32[]', space=smem, size = 0x4, offset = 0x4, fixed_abs, tag = 'smem constant byte address 0x4 - core index']
  #allocation1 [shape = 'u32[144,128]{1,0:T(1,128)}', space=vmem, size = 0x12000, scoped, tag = 'internal scratch']
  %s0 = inlined_call_operand.vmem [shape: bf16[128,1152], index: 0, kind: input, shape index: {}]
  %s1 = inlined_call_operand.vmem [shape: bf16[1152,256], index: 1, kind: input, shape index: {}]
  %s2 = inlined_call_operand.vmem [shape: f32[1,256], index: 2, kind: input, shape index: {}]
  %s3 = inlined_call_operand.vmem [shape: bf16[128,256], index: 3, kind: output, shape index: {}]
  %s4 = sld [smem:[#allocation0]]
  $region22: #{discriminator_forward.4} parent=0
    _
  %s6 = ssub.s32 1, %s4
  %s7 = scalar_select 0, %s6, %s4
  // Predicated region
  $region2: #{discriminator_forward.4} parent=0 // pred_check
    _
  $region3: #{discriminator_forward.4} parent=0 // pred_check_branch
    %9 = sbr.rel (0) target = $region5
  $region4: #{discriminator_forward.4} parent=0 // pred_region
    _
  $region5: #{discriminator_forward.4} parent=0 // pred_fallthru
    _
  // Predicated region
  $region6: #{discriminator_forward.4} parent=0 // pred_check
    _
  $region7: #{discriminator_forward.4} parent=0 // pred_check_branch
    %11 = sbr.rel (0) target = $region9
  $region8: #{discriminator_forward.4} parent=0 // pred_region
    _
  $region9: #{discriminator_forward.4} parent=0 // pred_fallthru
    _
  // Predicated region
  $region10: #{discriminator_forward.4} parent=0 // pred_check
    _
  $region11: #{discriminator_forward.4} parent=0 // pred_check_branch
    %13 = sbr.rel (0) target = $region13
  $region12: #{discriminator_forward.4} parent=0 // pred_region
    _
  $region13: #{discriminator_forward.4} parent=0 // pred_fallthru
    _
  %v15 = vld [vmem:[%s0] sm:$0xff]
  %v16 = vld [vmem:[%s0 + $0x8] sm:$0xff]
  %v17 = vld [vmem:[%s0 + $0x10] sm:$0xff]
  %v18 = vld [vmem:[%s0 + $0x18] sm:$0xff]
  %v19 = vld [vmem:[%s0 + $0x20] sm:$0xf]
  %v20 = vld [vmem:[%s0 + $0x24] sm:$0xff]
  %v21 = vld [vmem:[%s0 + $0x2c] sm:$0xff]
  %v22 = vld [vmem:[%s0 + $0x34] sm:$0xff]
  %v23 = vld [vmem:[%s0 + $0x3c] sm:$0xff]
  %v24 = vld [vmem:[%s0 + $0x44] sm:$0xf]
  %v25 = vld [vmem:[%s0 + $0x48] sm:$0xff]
  %v26 = vld [vmem:[%s0 + $0x50] sm:$0xff]
  %v27 = vld [vmem:[%s0 + $0x58] sm:$0xff]
  %v28 = vld [vmem:[%s0 + $0x60] sm:$0xff]
  %v29 = vld [vmem:[%s0 + $0x68] sm:$0xf]
  %v30 = vld [vmem:[%s0 + $0x6c] sm:$0xff]
  %v31 = vld [vmem:[%s0 + $0x74] sm:$0xff]
  %v32 = vld [vmem:[%s0 + $0x7c] sm:$0xff]
  %v33 = vld [vmem:[%s0 + $0x84] sm:$0xff]
  %v34 = vld [vmem:[%s0 + $0x8c] sm:$0xf]
  %v35 = vld [vmem:[%s0 + $0x90] sm:$0xff]
  %v36 = vld [vmem:[%s0 + $0x98] sm:$0xff]
  %v37 = vld [vmem:[%s0 + $0xa0] sm:$0xff]
  %v38 = vld [vmem:[%s0 + $0xa8] sm:$0xff]
  %v39 = vld [vmem:[%s0 + $0xb0] sm:$0xf]
  %v40 = vld [vmem:[%s0 + $0xb4] sm:$0xff]
  %v41 = vld [vmem:[%s0 + $0xbc] sm:$0xff]
  %v42 = vld [vmem:[%s0 + $0xc4] sm:$0xff]
  %v43 = vld [vmem:[%s0 + $0xcc] sm:$0xff]
  %v44 = vld [vmem:[%s0 + $0xd4] sm:$0xf]
  %v45 = vld [vmem:[%s0 + $0xd8] sm:$0xff]
  %v46 = vld [vmem:[%s0 + $0xe0] sm:$0xff]
  %v47 = vld [vmem:[%s0 + $0xe8] sm:$0xff]
  %v48 = vld [vmem:[%s0 + $0xf0] sm:$0xff]
  %v49 = vld [vmem:[%s0 + $0xf8] sm:$0xf]
  %v50 = vld [vmem:[%s0 + $0xfc] sm:$0xff]
  %v51 = vld [vmem:[%s0 + $0x104] sm:$0xff]
  %v52 = vld [vmem:[%s0 + $0x10c] sm:$0xff]
  %v53 = vld [vmem:[%s0 + $0x114] sm:$0xff]
  %v54 = vld [vmem:[%s0 + $0x11c] sm:$0xf]
  %v55 = vld [vmem:[%s0 + $0x120] sm:$0xff]
  %v56 = vld [vmem:[%s0 + $0x128] sm:$0xff]
  %v57 = vld [vmem:[%s0 + $0x130] sm:$0xff]
  %v58 = vld [vmem:[%s0 + $0x138] sm:$0xff]
  %v59 = vld [vmem:[%s0 + $0x140] sm:$0xf]
  %v60 = vld [vmem:[%s0 + $0x144] sm:$0xff]
  %v61 = vld [vmem:[%s0 + $0x14c] sm:$0xff]
  %v62 = vld [vmem:[%s0 + $0x154] sm:$0xff]
  %v63 = vld [vmem:[%s0 + $0x15c] sm:$0xff]
  %v64 = vld [vmem:[%s0 + $0x164] sm:$0xf]
  %v65 = vld [vmem:[%s0 + $0x168] sm:$0xff]
  %v66 = vld [vmem:[%s0 + $0x170] sm:$0xff]
  %v67 = vld [vmem:[%s0 + $0x178] sm:$0xff]
  %v68 = vld [vmem:[%s0 + $0x180] sm:$0xff]
  %v69 = vld [vmem:[%s0 + $0x188] sm:$0xf]
  %v70 = vld [vmem:[%s0 + $0x18c] sm:$0xff]
  %v71 = vld [vmem:[%s0 + $0x194] sm:$0xff]
  %v72 = vld [vmem:[%s0 + $0x19c] sm:$0xff]
  %v73 = vld [vmem:[%s0 + $0x1a4] sm:$0xff]
  %v74 = vld [vmem:[%s0 + $0x1ac] sm:$0xf]
  %v75 = vld [vmem:[%s0 + $0x1b0] sm:$0xff]
  %v76 = vld [vmem:[%s0 + $0x1b8] sm:$0xff]
  %v77 = vld [vmem:[%s0 + $0x1c0] sm:$0xff]
  %v78 = vld [vmem:[%s0 + $0x1c8] sm:$0xff]
  %v79 = vld [vmem:[%s0 + $0x1d0] sm:$0xf]
  %v80 = vld [vmem:[%s0 + $0x1d4] sm:$0xff]
  %v81 = vld [vmem:[%s0 + $0x1dc] sm:$0xff]
  %v82 = vld [vmem:[%s0 + $0x1e4] sm:$0xff]
  %v83 = vld [vmem:[%s0 + $0x1ec] sm:$0xff]
  %v84 = vld [vmem:[%s0 + $0x1f4] sm:$0xf]
  %v85 = vld [vmem:[%s0 + $0x1f8] sm:$0xff]
  %v86 = vld [vmem:[%s0 + $0x200] sm:$0xff]
  %v87 = vld [vmem:[%s0 + $0x208] sm:$0xff]
  %v88 = vld [vmem:[%s0 + $0x210] sm:$0xff]
  %v89 = vld [vmem:[%s0 + $0x218] sm:$0xf]
  %v90 = vld [vmem:[%s0 + $0x21c] sm:$0xff]
  %v91 = vld [vmem:[%s0 + $0x224] sm:$0xff]
  %v92 = vld [vmem:[%s0 + $0x22c] sm:$0xff]
  %v93 = vld [vmem:[%s0 + $0x234] sm:$0xff]
  %v94 = vld [vmem:[%s0 + $0x23c] sm:$0xf]
  %v95 = vld [vmem:[%s1] sm:$0xff]
  %v96 = vld [vmem:[%s1 + $0x8] sm:$0xff]
  %v97 = vld [vmem:[%s1 + $0x10] sm:$0xff]
  %v98 = vld [vmem:[%s1 + $0x18] sm:$0xff]
  %v99 = vld [vmem:[%s1 + $0x20] sm:$0xff]
  %v100 = vld [vmem:[%s1 + $0x28] sm:$0xff]
  %v101 = vld [vmem:[%s1 + $0x30] sm:$0xff]
  %v102 = vld [vmem:[%s1 + $0x38] sm:$0xff]
  %v103 = vld [vmem:[%s1 + $0x40] sm:$0xff]
  %v104 = vld [vmem:[%s1 + $0x48] sm:$0xff]
  %v105 = vld [vmem:[%s1 + $0x50] sm:$0xff]
  %v106 = vld [vmem:[%s1 + $0x58] sm:$0xff]
  %v107 = vld [vmem:[%s1 + $0x60] sm:$0xff]
  %v108 = vld [vmem:[%s1 + $0x68] sm:$0xff]
  %v109 = vld [vmem:[%s1 + $0x70] sm:$0xff]
  %v110 = vld [vmem:[%s1 + $0x78] sm:$0xff]
  %v111 = vld [vmem:[%s1 + $0x80] sm:$0xff]
  %v112 = vld [vmem:[%s1 + $0x88] sm:$0xff]
  %v113 = vld [vmem:[%s1 + $0x90] sm:$0xff]
  %v114 = vld [vmem:[%s1 + $0x98] sm:$0xff]
  %v115 = vld [vmem:[%s1 + $0xa0] sm:$0xff]
  %v116 = vld [vmem:[%s1 + $0xa8] sm:$0xff]
  %v117 = vld [vmem:[%s1 + $0xb0] sm:$0xff]
  %v118 = vld [vmem:[%s1 + $0xb8] sm:$0xff]
  %v119 = vld [vmem:[%s1 + $0xc0] sm:$0xff]
  %v120 = vld [vmem:[%s1 + $0xc8] sm:$0xff]
  %v121 = vld [vmem:[%s1 + $0xd0] sm:$0xff]
  %v122 = vld [vmem:[%s1 + $0xd8] sm:$0xff]
  %v123 = vld [vmem:[%s1 + $0xe0] sm:$0xff]
  %v124 = vld [vmem:[%s1 + $0xe8] sm:$0xff]
  %v125 = vld [vmem:[%s1 + $0xf0] sm:$0xff]
  %v126 = vld [vmem:[%s1 + $0xf8] sm:$0xff]
  %v127 = vld [vmem:[%s1 + $0x100] sm:$0xff]
  %v128 = vld [vmem:[%s1 + $0x108] sm:$0xff]
  %v129 = vld [vmem:[%s1 + $0x110] sm:$0xff]
  %v130 = vld [vmem:[%s1 + $0x118] sm:$0xff]
  %v131 = vld [vmem:[%s1 + $0x120] sm:$0xff]
  %v132 = vld [vmem:[%s1 + $0x128] sm:$0xff]
  %v133 = vld [vmem:[%s1 + $0x130] sm:$0xff]
  %v134 = vld [vmem:[%s1 + $0x138] sm:$0xff]
  %v135 = vld [vmem:[%s1 + $0x140] sm:$0xff]
  %v136 = vld [vmem:[%s1 + $0x148] sm:$0xff]
  %v137 = vld [vmem:[%s1 + $0x150] sm:$0xff]
  %v138 = vld [vmem:[%s1 + $0x158] sm:$0xff]
  %v139 = vld [vmem:[%s1 + $0x160] sm:$0xff]
  %v140 = vld [vmem:[%s1 + $0x168] sm:$0xff]
  %v141 = vld [vmem:[%s1 + $0x170] sm:$0xff]
  %v142 = vld [vmem:[%s1 + $0x178] sm:$0xff]
  %v143 = vld [vmem:[%s1 + $0x180] sm:$0xff]
  %v144 = vld [vmem:[%s1 + $0x188] sm:$0xff]
  %v145 = vld [vmem:[%s1 + $0x190] sm:$0xff]
  %v146 = vld [vmem:[%s1 + $0x198] sm:$0xff]
  %v147 = vld [vmem:[%s1 + $0x1a0] sm:$0xff]
  %v148 = vld [vmem:[%s1 + $0x1a8] sm:$0xff]
  %v149 = vld [vmem:[%s1 + $0x1b0] sm:$0xff]
  %v150 = vld [vmem:[%s1 + $0x1b8] sm:$0xff]
  %v151 = vld [vmem:[%s1 + $0x1c0] sm:$0xff]
  %v152 = vld [vmem:[%s1 + $0x1c8] sm:$0xff]
  %v153 = vld [vmem:[%s1 + $0x1d0] sm:$0xff]
  %v154 = vld [vmem:[%s1 + $0x1d8] sm:$0xff]
  %v155 = vld [vmem:[%s1 + $0x1e0] sm:$0xff]
  %v156 = vld [vmem:[%s1 + $0x1e8] sm:$0xff]
  %v157 = vld [vmem:[%s1 + $0x1f0] sm:$0xff]
  %v158 = vld [vmem:[%s1 + $0x1f8] sm:$0xff]
  %v159 = vld [vmem:[%s1 + $0x200] sm:$0xff]
  %v160 = vld [vmem:[%s1 + $0x208] sm:$0xff]
  %v161 = vld [vmem:[%s1 + $0x210] sm:$0xff]
  %v162 = vld [vmem:[%s1 + $0x218] sm:$0xff]
  %v163 = vld [vmem:[%s1 + $0x220] sm:$0xff]
  %v164 = vld [vmem:[%s1 + $0x228] sm:$0xff]
  %v165 = vld [vmem:[%s1 + $0x230] sm:$0xff]
  %v166 = vld [vmem:[%s1 + $0x238] sm:$0xff]
  %v167 = vld [vmem:[%s1 + $0x240] sm:$0xff]
  %v168 = vld [vmem:[%s1 + $0x248] sm:$0xff]
  %v169 = vld [vmem:[%s1 + $0x250] sm:$0xff]
  %v170 = vld [vmem:[%s1 + $0x258] sm:$0xff]
  %v171 = vld [vmem:[%s1 + $0x260] sm:$0xff]
  %v172 = vld [vmem:[%s1 + $0x268] sm:$0xff]
  %v173 = vld [vmem:[%s1 + $0x270] sm:$0xff]
  %v174 = vld [vmem:[%s1 + $0x278] sm:$0xff]
  %v175 = vld [vmem:[%s1 + $0x280] sm:$0xff]
  %v176 = vld [vmem:[%s1 + $0x288] sm:$0xff]
  %v177 = vld [vmem:[%s1 + $0x290] sm:$0xff]
  %v178 = vld [vmem:[%s1 + $0x298] sm:$0xff]
  %v179 = vld [vmem:[%s1 + $0x2a0] sm:$0xff]
  %v180 = vld [vmem:[%s1 + $0x2a8] sm:$0xff]
  %v181 = vld [vmem:[%s1 + $0x2b0] sm:$0xff]
  %v182 = vld [vmem:[%s1 + $0x2b8] sm:$0xff]
  %v183 = vld [vmem:[%s1 + $0x2c0] sm:$0xff]
  %v184 = vld [vmem:[%s1 + $0x2c8] sm:$0xff]
  %v185 = vld [vmem:[%s1 + $0x2d0] sm:$0xff]
  %v186 = vld [vmem:[%s1 + $0x2d8] sm:$0xff]
  %v187 = vld [vmem:[%s1 + $0x2e0] sm:$0xff]
  %v188 = vld [vmem:[%s1 + $0x2e8] sm:$0xff]
  %v189 = vld [vmem:[%s1 + $0x2f0] sm:$0xff]
  %v190 = vld [vmem:[%s1 + $0x2f8] sm:$0xff]
  %v191 = vld [vmem:[%s1 + $0x300] sm:$0xff]
  %v192 = vld [vmem:[%s1 + $0x308] sm:$0xff]
  %v193 = vld [vmem:[%s1 + $0x310] sm:$0xff]
  %v194 = vld [vmem:[%s1 + $0x318] sm:$0xff]
  %v195 = vld [vmem:[%s1 + $0x320] sm:$0xff]
  %v196 = vld [vmem:[%s1 + $0x328] sm:$0xff]
  %v197 = vld [vmem:[%s1 + $0x330] sm:$0xff]
  %v198 = vld [vmem:[%s1 + $0x338] sm:$0xff]
  %v199 = vld [vmem:[%s1 + $0x340] sm:$0xff]
  %v200 = vld [vmem:[%s1 + $0x348] sm:$0xff]
  %v201 = vld [vmem:[%s1 + $0x350] sm:$0xff]
  %v202 = vld [vmem:[%s1 + $0x358] sm:$0xff]
  %v203 = vld [vmem:[%s1 + $0x360] sm:$0xff]
  %v204 = vld [vmem:[%s1 + $0x368] sm:$0xff]
  %v205 = vld [vmem:[%s1 + $0x370] sm:$0xff]
  %v206 = vld [vmem:[%s1 + $0x378] sm:$0xff]
  %v207 = vld [vmem:[%s1 + $0x380] sm:$0xff]
  %v208 = vld [vmem:[%s1 + $0x388] sm:$0xff]
  %v209 = vld [vmem:[%s1 + $0x390] sm:$0xff]
  %v210 = vld [vmem:[%s1 + $0x398] sm:$0xff]
  %v211 = vld [vmem:[%s1 + $0x3a0] sm:$0xff]
  %v212 = vld [vmem:[%s1 + $0x3a8] sm:$0xff]
  %v213 = vld [vmem:[%s1 + $0x3b0] sm:$0xff]
  %v214 = vld [vmem:[%s1 + $0x3b8] sm:$0xff]
  %v215 = vld [vmem:[%s1 + $0x3c0] sm:$0xff]
  %v216 = vld [vmem:[%s1 + $0x3c8] sm:$0xff]
  %v217 = vld [vmem:[%s1 + $0x3d0] sm:$0xff]
  %v218 = vld [vmem:[%s1 + $0x3d8] sm:$0xff]
  %v219 = vld [vmem:[%s1 + $0x3e0] sm:$0xff]
  %v220 = vld [vmem:[%s1 + $0x3e8] sm:$0xff]
  %v221 = vld [vmem:[%s1 + $0x3f0] sm:$0xff]
  %v222 = vld [vmem:[%s1 + $0x3f8] sm:$0xff]
  %v223 = vld [vmem:[%s1 + $0x400] sm:$0xff]
  %v224 = vld [vmem:[%s1 + $0x408] sm:$0xff]
  %v225 = vld [vmem:[%s1 + $0x410] sm:$0xff]
  %v226 = vld [vmem:[%s1 + $0x418] sm:$0xff]
  %v227 = vld [vmem:[%s1 + $0x420] sm:$0xff]
  %v228 = vld [vmem:[%s1 + $0x428] sm:$0xff]
  %v229 = vld [vmem:[%s1 + $0x430] sm:$0xff]
  %v230 = vld [vmem:[%s1 + $0x438] sm:$0xff]
  %v231 = vld [vmem:[%s1 + $0x440] sm:$0xff]
  %v232 = vld [vmem:[%s1 + $0x448] sm:$0xff]
  %v233 = vld [vmem:[%s1 + $0x450] sm:$0xff]
  %v234 = vld [vmem:[%s1 + $0x458] sm:$0xff]
  %v235 = vld [vmem:[%s1 + $0x460] sm:$0xff]
  %v236 = vld [vmem:[%s1 + $0x468] sm:$0xff]
  %v237 = vld [vmem:[%s1 + $0x470] sm:$0xff]
  %v238 = vld [vmem:[%s1 + $0x478] sm:$0xff]
  %v239 = vld [vmem:[%s2] sm:$0x3]
  %v241 = vlaneseq
  %v242 = vshrl.u32 %v241, 7
  %v243 = vsub.s32 0, %v242
  %v244 = vrot.slane %v239, %v243
  %v245 = vlaneseq
  %v246 = vshrl.u32 %v245, 7
  %v247 = vsub.s32 1, %v246
  %v248 = vrot.slane %v239, %v247
  %v331 = vunpack.c.l.b16 %v15
  %v332 = vunpack.c.h.b16 %v15
  %v333 = vunpack.c.l.b16 %v16
  %v334 = vunpack.c.h.b16 %v16
  %v335 = vunpack.c.l.b16 %v17
  %v336 = vunpack.c.h.b16 %v17
  %v337 = vunpack.c.l.b16 %v18
  %v338 = vunpack.c.h.b16 %v18
  %v339 = vunpack.c.l.b16 %v19
  %v340 = vunpack.c.l.b16 %v20
  %v341 = vunpack.c.h.b16 %v20
  %v342 = vunpack.c.l.b16 %v21
  %v343 = vunpack.c.h.b16 %v21
  %v344 = vunpack.c.l.b16 %v22
  %v345 = vunpack.c.h.b16 %v22
  %v346 = vunpack.c.l.b16 %v23
  %v347 = vunpack.c.h.b16 %v23
  %v348 = vunpack.c.l.b16 %v24
  %v349 = vunpack.c.l.b16 %v25
  %v350 = vunpack.c.h.b16 %v25
  %v351 = vunpack.c.l.b16 %v26
  %v352 = vunpack.c.h.b16 %v26
  %v353 = vunpack.c.l.b16 %v27
  %v354 = vunpack.c.h.b16 %v27
  %v355 = vunpack.c.l.b16 %v28
  %v356 = vunpack.c.h.b16 %v28
  %v357 = vunpack.c.l.b16 %v29
  %v358 = vunpack.c.l.b16 %v30
  %v359 = vunpack.c.h.b16 %v30
  %v360 = vunpack.c.l.b16 %v31
  %v361 = vunpack.c.h.b16 %v31
  %v362 = vunpack.c.l.b16 %v32
  %v363 = vunpack.c.h.b16 %v32
  %v364 = vunpack.c.l.b16 %v33
  %v365 = vunpack.c.h.b16 %v33
  %v366 = vunpack.c.l.b16 %v34
  %v367 = vunpack.c.l.b16 %v35
  %v368 = vunpack.c.h.b16 %v35
  %v369 = vunpack.c.l.b16 %v36
  %v370 = vunpack.c.h.b16 %v36
  %v371 = vunpack.c.l.b16 %v37
  %v372 = vunpack.c.h.b16 %v37
  %v373 = vunpack.c.l.b16 %v38
  %v374 = vunpack.c.h.b16 %v38
  %v375 = vunpack.c.l.b16 %v39
  %v376 = vunpack.c.l.b16 %v40
  %v377 = vunpack.c.h.b16 %v40
  %v378 = vunpack.c.l.b16 %v41
  %v379 = vunpack.c.h.b16 %v41
  %v380 = vunpack.c.l.b16 %v42
  %v381 = vunpack.c.h.b16 %v42
  %v382 = vunpack.c.l.b16 %v43
  %v383 = vunpack.c.h.b16 %v43
  %v384 = vunpack.c.l.b16 %v44
  %v385 = vunpack.c.l.b16 %v45
  %v386 = vunpack.c.h.b16 %v45
  %v387 = vunpack.c.l.b16 %v46
  %v388 = vunpack.c.h.b16 %v46
  %v389 = vunpack.c.l.b16 %v47
  %v390 = vunpack.c.h.b16 %v47
  %v391 = vunpack.c.l.b16 %v48
  %v392 = vunpack.c.h.b16 %v48
  %v393 = vunpack.c.l.b16 %v49
  %v394 = vunpack.c.l.b16 %v50
  %v395 = vunpack.c.h.b16 %v50
  %v396 = vunpack.c.l.b16 %v51
  %v397 = vunpack.c.h.b16 %v51
  %v398 = vunpack.c.l.b16 %v52
  %v399 = vunpack.c.h.b16 %v52
  %v400 = vunpack.c.l.b16 %v53
  %v401 = vunpack.c.h.b16 %v53
  %v402 = vunpack.c.l.b16 %v54
  %v403 = vunpack.c.l.b16 %v55
  %v404 = vunpack.c.h.b16 %v55
  %v405 = vunpack.c.l.b16 %v56
  %v406 = vunpack.c.h.b16 %v56
  %v407 = vunpack.c.l.b16 %v57
  %v408 = vunpack.c.h.b16 %v57
  %v409 = vunpack.c.l.b16 %v58
  %v410 = vunpack.c.h.b16 %v58
  %v411 = vunpack.c.l.b16 %v59
  %v412 = vunpack.c.l.b16 %v60
  %v413 = vunpack.c.h.b16 %v60
  %v414 = vunpack.c.l.b16 %v61
  %v415 = vunpack.c.h.b16 %v61
  %v416 = vunpack.c.l.b16 %v62
  %v417 = vunpack.c.h.b16 %v62
  %v418 = vunpack.c.l.b16 %v63
  %v419 = vunpack.c.h.b16 %v63
  %v420 = vunpack.c.l.b16 %v64
  %v421 = vunpack.c.l.b16 %v65
  %v422 = vunpack.c.h.b16 %v65
  %v423 = vunpack.c.l.b16 %v66
  %v424 = vunpack.c.h.b16 %v66
  %v425 = vunpack.c.l.b16 %v67
  %v426 = vunpack.c.h.b16 %v67
  %v427 = vunpack.c.l.b16 %v68
  %v428 = vunpack.c.h.b16 %v68
  %v429 = vunpack.c.l.b16 %v69
  %v430 = vunpack.c.l.b16 %v70
  %v431 = vunpack.c.h.b16 %v70
  %v432 = vunpack.c.l.b16 %v71
  %v433 = vunpack.c.h.b16 %v71
  %v434 = vunpack.c.l.b16 %v72
  %v435 = vunpack.c.h.b16 %v72
  %v436 = vunpack.c.l.b16 %v73
  %v437 = vunpack.c.h.b16 %v73
  %v438 = vunpack.c.l.b16 %v74
  %v439 = vunpack.c.l.b16 %v75
  %v440 = vunpack.c.h.b16 %v75
  %v441 = vunpack.c.l.b16 %v76
  %v442 = vunpack.c.h.b16 %v76
  %v443 = vunpack.c.l.b16 %v77
  %v444 = vunpack.c.h.b16 %v77
  %v445 = vunpack.c.l.b16 %v78
  %v446 = vunpack.c.h.b16 %v78
  %v447 = vunpack.c.l.b16 %v79
  %v448 = vunpack.c.l.b16 %v80
  %v449 = vunpack.c.h.b16 %v80
  %v450 = vunpack.c.l.b16 %v81
  %v451 = vunpack.c.h.b16 %v81
  %v452 = vunpack.c.l.b16 %v82
  %v453 = vunpack.c.h.b16 %v82
  %v454 = vunpack.c.l.b16 %v83
  %v455 = vunpack.c.h.b16 %v83
  %v456 = vunpack.c.l.b16 %v84
  %v457 = vunpack.c.l.b16 %v85
  %v458 = vunpack.c.h.b16 %v85
  %v459 = vunpack.c.l.b16 %v86
  %v460 = vunpack.c.h.b16 %v86
  %v461 = vunpack.c.l.b16 %v87
  %v462 = vunpack.c.h.b16 %v87
  %v463 = vunpack.c.l.b16 %v88
  %v464 = vunpack.c.h.b16 %v88
  %v465 = vunpack.c.l.b16 %v89
  %v466 = vunpack.c.l.b16 %v90
  %v467 = vunpack.c.h.b16 %v90
  %v468 = vunpack.c.l.b16 %v91
  %v469 = vunpack.c.h.b16 %v91
  %v470 = vunpack.c.l.b16 %v92
  %v471 = vunpack.c.h.b16 %v92
  %v472 = vunpack.c.l.b16 %v93
  %v473 = vunpack.c.h.b16 %v93
  %v474 = vunpack.c.l.b16 %v94
  %v475 = vpack.c.b16 %v340, %v331
  %v476 = vpack.c.b16 %v341, %v332
  %v477 = vpack.c.b16 %v342, %v333
  %v478 = vpack.c.b16 %v343, %v334
  %v479 = vpack.c.b16 %v344, %v335
  %v480 = vpack.c.b16 %v345, %v336
  %v481 = vpack.c.b16 %v346, %v337
  %v482 = vpack.c.b16 %v347, %v338
  %v483 = vpack.c.b16 %v348, %v339
  %v484 = vpack.c.b16 %v358, %v349
  %v485 = vpack.c.b16 %v359, %v350
  %v486 = vpack.c.b16 %v360, %v351
  %v487 = vpack.c.b16 %v361, %v352
  %v488 = vpack.c.b16 %v362, %v353
  %v489 = vpack.c.b16 %v363, %v354
  %v490 = vpack.c.b16 %v364, %v355
  %v491 = vpack.c.b16 %v365, %v356
  %v492 = vpack.c.b16 %v366, %v357
  %v493 = vpack.c.b16 %v376, %v367
  %v494 = vpack.c.b16 %v377, %v368
  %v495 = vpack.c.b16 %v378, %v369
  %v496 = vpack.c.b16 %v379, %v370
  %v497 = vpack.c.b16 %v380, %v371
  %v498 = vpack.c.b16 %v381, %v372
  %v499 = vpack.c.b16 %v382, %v373
  %v500 = vpack.c.b16 %v383, %v374
  %v501 = vpack.c.b16 %v384, %v375
  %v502 = vpack.c.b16 %v394, %v385
  %v503 = vpack.c.b16 %v395, %v386
  %v504 = vpack.c.b16 %v396, %v387
  %v505 = vpack.c.b16 %v397, %v388
  %v506 = vpack.c.b16 %v398, %v389
  %v507 = vpack.c.b16 %v399, %v390
  %v508 = vpack.c.b16 %v400, %v391
  %v509 = vpack.c.b16 %v401, %v392
  %v510 = vpack.c.b16 %v402, %v393
  %v511 = vpack.c.b16 %v412, %v403
  %v512 = vpack.c.b16 %v413, %v404
  %v513 = vpack.c.b16 %v414, %v405
  %v514 = vpack.c.b16 %v415, %v406
  %v515 = vpack.c.b16 %v416, %v407
  %v516 = vpack.c.b16 %v417, %v408
  %v517 = vpack.c.b16 %v418, %v409
  %v518 = vpack.c.b16 %v419, %v410
  %v519 = vpack.c.b16 %v420, %v411
  %v520 = vpack.c.b16 %v430, %v421
  %v521 = vpack.c.b16 %v431, %v422
  %v522 = vpack.c.b16 %v432, %v423
  %v523 = vpack.c.b16 %v433, %v424
  %v524 = vpack.c.b16 %v434, %v425
  %v525 = vpack.c.b16 %v435, %v426
  %v526 = vpack.c.b16 %v436, %v427
  %v527 = vpack.c.b16 %v437, %v428
  %v528 = vpack.c.b16 %v438, %v429
  %v529 = vpack.c.b16 %v448, %v439
  %v530 = vpack.c.b16 %v449, %v440
  %v531 = vpack.c.b16 %v450, %v441
  %v532 = vpack.c.b16 %v451, %v442
  %v533 = vpack.c.b16 %v452, %v443
  %v534 = vpack.c.b16 %v453, %v444
  %v535 = vpack.c.b16 %v454, %v445
  %v536 = vpack.c.b16 %v455, %v446
  %v537 = vpack.c.b16 %v456, %v447
  %v538 = vpack.c.b16 %v466, %v457
  %v539 = vpack.c.b16 %v467, %v458
  %v540 = vpack.c.b16 %v468, %v459
  %v541 = vpack.c.b16 %v469, %v460
  %v542 = vpack.c.b16 %v470, %v461
  %v543 = vpack.c.b16 %v471, %v462
  %v544 = vpack.c.b16 %v472, %v463
  %v545 = vpack.c.b16 %v473, %v464
  %v546 = vpack.c.b16 %v474, %v465
  %v763 = vunpack.c.l.b16 %v95
  %v764 = vunpack.c.h.b16 %v95
  %v765 = vunpack.c.l.b16 %v96
  %v766 = vunpack.c.h.b16 %v96
  %v767 = vunpack.c.l.b16 %v97
  %v768 = vunpack.c.h.b16 %v97
  %v769 = vunpack.c.l.b16 %v98
  %v770 = vunpack.c.h.b16 %v98
  %v771 = vunpack.c.l.b16 %v99
  %v772 = vunpack.c.h.b16 %v99
  %v773 = vunpack.c.l.b16 %v100
  %v774 = vunpack.c.h.b16 %v100
  %v775 = vunpack.c.l.b16 %v101
  %v776 = vunpack.c.h.b16 %v101
  %v777 = vunpack.c.l.b16 %v102
  %v778 = vunpack.c.h.b16 %v102
  %v779 = vunpack.c.l.b16 %v103
  %v780 = vunpack.c.h.b16 %v103
  %v781 = vunpack.c.l.b16 %v104
  %v782 = vunpack.c.h.b16 %v104
  %v783 = vunpack.c.l.b16 %v105
  %v784 = vunpack.c.h.b16 %v105
  %v785 = vunpack.c.l.b16 %v106
  %v786 = vunpack.c.h.b16 %v106
  %v787 = vunpack.c.l.b16 %v107
  %v788 = vunpack.c.h.b16 %v107
  %v789 = vunpack.c.l.b16 %v108
  %v790 = vunpack.c.h.b16 %v108
  %v791 = vunpack.c.l.b16 %v109
  %v792 = vunpack.c.h.b16 %v109
  %v793 = vunpack.c.l.b16 %v110
  %v794 = vunpack.c.h.b16 %v110
  %v795 = vunpack.c.l.b16 %v111
  %v796 = vunpack.c.h.b16 %v111
  %v797 = vunpack.c.l.b16 %v112
  %v798 = vunpack.c.h.b16 %v112
  %v799 = vunpack.c.l.b16 %v113
  %v800 = vunpack.c.h.b16 %v113
  %v801 = vunpack.c.l.b16 %v114
  %v802 = vunpack.c.h.b16 %v114
  %v803 = vunpack.c.l.b16 %v115
  %v804 = vunpack.c.h.b16 %v115
  %v805 = vunpack.c.l.b16 %v116
  %v806 = vunpack.c.h.b16 %v116
  %v807 = vunpack.c.l.b16 %v117
  %v808 = vunpack.c.h.b16 %v117
  %v809 = vunpack.c.l.b16 %v118
  %v810 = vunpack.c.h.b16 %v118
  %v811 = vunpack.c.l.b16 %v119
  %v812 = vunpack.c.h.b16 %v119
  %v813 = vunpack.c.l.b16 %v120
  %v814 = vunpack.c.h.b16 %v120
  %v815 = vunpack.c.l.b16 %v121
  %v816 = vunpack.c.h.b16 %v121
  %v817 = vunpack.c.l.b16 %v122
  %v818 = vunpack.c.h.b16 %v122
  %v819 = vunpack.c.l.b16 %v123
  %v820 = vunpack.c.h.b16 %v123
  %v821 = vunpack.c.l.b16 %v124
  %v822 = vunpack.c.h.b16 %v124
  %v823 = vunpack.c.l.b16 %v125
  %v824 = vunpack.c.h.b16 %v125
  %v825 = vunpack.c.l.b16 %v126
  %v826 = vunpack.c.h.b16 %v126
  %v827 = vunpack.c.l.b16 %v127
  %v828 = vunpack.c.h.b16 %v127
  %v829 = vunpack.c.l.b16 %v128
  %v830 = vunpack.c.h.b16 %v128
  %v831 = vunpack.c.l.b16 %v129
  %v832 = vunpack.c.h.b16 %v129
  %v833 = vunpack.c.l.b16 %v130
  %v834 = vunpack.c.h.b16 %v130
  %v835 = vunpack.c.l.b16 %v131
  %v836 = vunpack.c.h.b16 %v131
  %v837 = vunpack.c.l.b16 %v132
  %v838 = vunpack.c.h.b16 %v132
  %v839 = vunpack.c.l.b16 %v133
  %v840 = vunpack.c.h.b16 %v133
  %v841 = vunpack.c.l.b16 %v134
  %v842 = vunpack.c.h.b16 %v134
  %v843 = vunpack.c.l.b16 %v135
  %v844 = vunpack.c.h.b16 %v135
  %v845 = vunpack.c.l.b16 %v136
  %v846 = vunpack.c.h.b16 %v136
  %v847 = vunpack.c.l.b16 %v137
  %v848 = vunpack.c.h.b16 %v137
  %v849 = vunpack.c.l.b16 %v138
  %v850 = vunpack.c.h.b16 %v138
  %v851 = vunpack.c.l.b16 %v139
  %v852 = vunpack.c.h.b16 %v139
  %v853 = vunpack.c.l.b16 %v140
  %v854 = vunpack.c.h.b16 %v140
  %v855 = vunpack.c.l.b16 %v141
  %v856 = vunpack.c.h.b16 %v141
  %v857 = vunpack.c.l.b16 %v142
  %v858 = vunpack.c.h.b16 %v142
  %v859 = vunpack.c.l.b16 %v143
  %v860 = vunpack.c.h.b16 %v143
  %v861 = vunpack.c.l.b16 %v144
  %v862 = vunpack.c.h.b16 %v144
  %v863 = vunpack.c.l.b16 %v145
  %v864 = vunpack.c.h.b16 %v145
  %v865 = vunpack.c.l.b16 %v146
  %v866 = vunpack.c.h.b16 %v146
  %v867 = vunpack.c.l.b16 %v147
  %v868 = vunpack.c.h.b16 %v147
  %v869 = vunpack.c.l.b16 %v148
  %v870 = vunpack.c.h.b16 %v148
  %v871 = vunpack.c.l.b16 %v149
  %v872 = vunpack.c.h.b16 %v149
  %v873 = vunpack.c.l.b16 %v150
  %v874 = vunpack.c.h.b16 %v150
  %v875 = vunpack.c.l.b16 %v151
  %v876 = vunpack.c.h.b16 %v151
  %v877 = vunpack.c.l.b16 %v152
  %v878 = vunpack.c.h.b16 %v152
  %v879 = vunpack.c.l.b16 %v153
  %v880 = vunpack.c.h.b16 %v153
  %v881 = vunpack.c.l.b16 %v154
  %v882 = vunpack.c.h.b16 %v154
  %v883 = vunpack.c.l.b16 %v155
  %v884 = vunpack.c.h.b16 %v155
  %v885 = vunpack.c.l.b16 %v156
  %v886 = vunpack.c.h.b16 %v156
  %v887 = vunpack.c.l.b16 %v157
  %v888 = vunpack.c.h.b16 %v157
  %v889 = vunpack.c.l.b16 %v158
  %v890 = vunpack.c.h.b16 %v158
  %v891 = vunpack.c.l.b16 %v159
  %v892 = vunpack.c.h.b16 %v159
  %v893 = vunpack.c.l.b16 %v160
  %v894 = vunpack.c.h.b16 %v160
  %v895 = vunpack.c.l.b16 %v161
  %v896 = vunpack.c.h.b16 %v161
  %v897 = vunpack.c.l.b16 %v162
  %v898 = vunpack.c.h.b16 %v162
  %v899 = vunpack.c.l.b16 %v163
  %v900 = vunpack.c.h.b16 %v163
  %v901 = vunpack.c.l.b16 %v164
  %v902 = vunpack.c.h.b16 %v164
  %v903 = vunpack.c.l.b16 %v165
  %v904 = vunpack.c.h.b16 %v165
  %v905 = vunpack.c.l.b16 %v166
  %v906 = vunpack.c.h.b16 %v166
  %v907 = vunpack.c.l.b16 %v167
  %v908 = vunpack.c.h.b16 %v167
  %v909 = vunpack.c.l.b16 %v168
  %v910 = vunpack.c.h.b16 %v168
  %v911 = vunpack.c.l.b16 %v169
  %v912 = vunpack.c.h.b16 %v169
  %v913 = vunpack.c.l.b16 %v170
  %v914 = vunpack.c.h.b16 %v170
  %v915 = vunpack.c.l.b16 %v171
  %v916 = vunpack.c.h.b16 %v171
  %v917 = vunpack.c.l.b16 %v172
  %v918 = vunpack.c.h.b16 %v172
  %v919 = vunpack.c.l.b16 %v173
  %v920 = vunpack.c.h.b16 %v173
  %v921 = vunpack.c.l.b16 %v174
  %v922 = vunpack.c.h.b16 %v174
  %v923 = vunpack.c.l.b16 %v175
  %v924 = vunpack.c.h.b16 %v175
  %v925 = vunpack.c.l.b16 %v176
  %v926 = vunpack.c.h.b16 %v176
  %v927 = vunpack.c.l.b16 %v177
  %v928 = vunpack.c.h.b16 %v177
  %v929 = vunpack.c.l.b16 %v178
  %v930 = vunpack.c.h.b16 %v178
  %v931 = vunpack.c.l.b16 %v179
  %v932 = vunpack.c.h.b16 %v179
  %v933 = vunpack.c.l.b16 %v180
  %v934 = vunpack.c.h.b16 %v180
  %v935 = vunpack.c.l.b16 %v181
  %v936 = vunpack.c.h.b16 %v181
  %v937 = vunpack.c.l.b16 %v182
  %v938 = vunpack.c.h.b16 %v182
  %v939 = vunpack.c.l.b16 %v183
  %v940 = vunpack.c.h.b16 %v183
  %v941 = vunpack.c.l.b16 %v184
  %v942 = vunpack.c.h.b16 %v184
  %v943 = vunpack.c.l.b16 %v185
  %v944 = vunpack.c.h.b16 %v185
  %v945 = vunpack.c.l.b16 %v186
  %v946 = vunpack.c.h.b16 %v186
  %v947 = vunpack.c.l.b16 %v187
  %v948 = vunpack.c.h.b16 %v187
  %v949 = vunpack.c.l.b16 %v188
  %v950 = vunpack.c.h.b16 %v188
  %v951 = vunpack.c.l.b16 %v189
  %v952 = vunpack.c.h.b16 %v189
  %v953 = vunpack.c.l.b16 %v190
  %v954 = vunpack.c.h.b16 %v190
  %v955 = vunpack.c.l.b16 %v191
  %v956 = vunpack.c.h.b16 %v191
  %v957 = vunpack.c.l.b16 %v192
  %v958 = vunpack.c.h.b16 %v192
  %v959 = vunpack.c.l.b16 %v193
  %v960 = vunpack.c.h.b16 %v193
  %v961 = vunpack.c.l.b16 %v194
  %v962 = vunpack.c.h.b16 %v194
  %v963 = vunpack.c.l.b16 %v195
  %v964 = vunpack.c.h.b16 %v195
  %v965 = vunpack.c.l.b16 %v196
  %v966 = vunpack.c.h.b16 %v196
  %v967 = vunpack.c.l.b16 %v197
  %v968 = vunpack.c.h.b16 %v197
  %v969 = vunpack.c.l.b16 %v198
  %v970 = vunpack.c.h.b16 %v198
  %v971 = vunpack.c.l.b16 %v199
  %v972 = vunpack.c.h.b16 %v199
  %v973 = vunpack.c.l.b16 %v200
  %v974 = vunpack.c.h.b16 %v200
  %v975 = vunpack.c.l.b16 %v201
  %v976 = vunpack.c.h.b16 %v201
  %v977 = vunpack.c.l.b16 %v202
  %v978 = vunpack.c.h.b16 %v202
  %v979 = vunpack.c.l.b16 %v203
  %v980 = vunpack.c.h.b16 %v203
  %v981 = vunpack.c.l.b16 %v204
  %v982 = vunpack.c.h.b16 %v204
  %v983 = vunpack.c.l.b16 %v205
  %v984 = vunpack.c.h.b16 %v205
  %v985 = vunpack.c.l.b16 %v206
  %v986 = vunpack.c.h.b16 %v206
  %v987 = vunpack.c.l.b16 %v207
  %v988 = vunpack.c.h.b16 %v207
  %v989 = vunpack.c.l.b16 %v208
  %v990 = vunpack.c.h.b16 %v208
  %v991 = vunpack.c.l.b16 %v209
  %v992 = vunpack.c.h.b16 %v209
  %v993 = vunpack.c.l.b16 %v210
  %v994 = vunpack.c.h.b16 %v210
  %v995 = vunpack.c.l.b16 %v211
  %v996 = vunpack.c.h.b16 %v211
  %v997 = vunpack.c.l.b16 %v212
  %v998 = vunpack.c.h.b16 %v212
  %v999 = vunpack.c.l.b16 %v213
  %v1000 = vunpack.c.h.b16 %v213
  %v1001 = vunpack.c.l.b16 %v214
  %v1002 = vunpack.c.h.b16 %v214
  %v1003 = vunpack.c.l.b16 %v215
  %v1004 = vunpack.c.h.b16 %v215
  %v1005 = vunpack.c.l.b16 %v216
  %v1006 = vunpack.c.h.b16 %v216
  %v1007 = vunpack.c.l.b16 %v217
  %v1008 = vunpack.c.h.b16 %v217
  %v1009 = vunpack.c.l.b16 %v218
  %v1010 = vunpack.c.h.b16 %v218
  %v1011 = vunpack.c.l.b16 %v219
  %v1012 = vunpack.c.h.b16 %v219
  %v1013 = vunpack.c.l.b16 %v220
  %v1014 = vunpack.c.h.b16 %v220
  %v1015 = vunpack.c.l.b16 %v221
  %v1016 = vunpack.c.h.b16 %v221
  %v1017 = vunpack.c.l.b16 %v222
  %v1018 = vunpack.c.h.b16 %v222
  %v1019 = vunpack.c.l.b16 %v223
  %v1020 = vunpack.c.h.b16 %v223
  %v1021 = vunpack.c.l.b16 %v224
  %v1022 = vunpack.c.h.b16 %v224
  %v1023 = vunpack.c.l.b16 %v225
  %v1024 = vunpack.c.h.b16 %v225
  %v1025 = vunpack.c.l.b16 %v226
  %v1026 = vunpack.c.h.b16 %v226
  %v1027 = vunpack.c.l.b16 %v227
  %v1028 = vunpack.c.h.b16 %v227
  %v1029 = vunpack.c.l.b16 %v228
  %v1030 = vunpack.c.h.b16 %v228
  %v1031 = vunpack.c.l.b16 %v229
  %v1032 = vunpack.c.h.b16 %v229
  %v1033 = vunpack.c.l.b16 %v230
  %v1034 = vunpack.c.h.b16 %v230
  %v1035 = vunpack.c.l.b16 %v231
  %v1036 = vunpack.c.h.b16 %v231
  %v1037 = vunpack.c.l.b16 %v232
  %v1038 = vunpack.c.h.b16 %v232
  %v1039 = vunpack.c.l.b16 %v233
  %v1040 = vunpack.c.h.b16 %v233
  %v1041 = vunpack.c.l.b16 %v234
  %v1042 = vunpack.c.h.b16 %v234
  %v1043 = vunpack.c.l.b16 %v235
  %v1044 = vunpack.c.h.b16 %v235
  %v1045 = vunpack.c.l.b16 %v236
  %v1046 = vunpack.c.h.b16 %v236
  %v1047 = vunpack.c.l.b16 %v237
  %v1048 = vunpack.c.h.b16 %v237
  %v1049 = vunpack.c.l.b16 %v238
  %v1050 = vunpack.c.h.b16 %v238
  %v1051 = vpack.c.b16 %v765, %v763
  %v1052 = vpack.c.b16 %v766, %v764
  %v1053 = vpack.c.b16 %v769, %v767
  %v1054 = vpack.c.b16 %v770, %v768
  %v1055 = vpack.c.b16 %v773, %v771
  %v1056 = vpack.c.b16 %v774, %v772
  %v1057 = vpack.c.b16 %v777, %v775
  %v1058 = vpack.c.b16 %v778, %v776
  %v1059 = vpack.c.b16 %v781, %v779
  %v1060 = vpack.c.b16 %v782, %v780
  %v1061 = vpack.c.b16 %v785, %v783
  %v1062 = vpack.c.b16 %v786, %v784
  %v1063 = vpack.c.b16 %v789, %v787
  %v1064 = vpack.c.b16 %v790, %v788
  %v1065 = vpack.c.b16 %v793, %v791
  %v1066 = vpack.c.b16 %v794, %v792
  %v1067 = vpack.c.b16 %v797, %v795
  %v1068 = vpack.c.b16 %v798, %v796
  %v1069 = vpack.c.b16 %v801, %v799
  %v1070 = vpack.c.b16 %v802, %v800
  %v1071 = vpack.c.b16 %v805, %v803
  %v1072 = vpack.c.b16 %v806, %v804
  %v1073 = vpack.c.b16 %v809, %v807
  %v1074 = vpack.c.b16 %v810, %v808
  %v1075 = vpack.c.b16 %v813, %v811
  %v1076 = vpack.c.b16 %v814, %v812
  %v1077 = vpack.c.b16 %v817, %v815
  %v1078 = vpack.c.b16 %v818, %v816
  %v1079 = vpack.c.b16 %v821, %v819
  %v1080 = vpack.c.b16 %v822, %v820
  %v1081 = vpack.c.b16 %v825, %v823
  %v1082 = vpack.c.b16 %v826, %v824
  %v1083 = vpack.c.b16 %v829, %v827
  %v1084 = vpack.c.b16 %v830, %v828
  %v1085 = vpack.c.b16 %v833, %v831
  %v1086 = vpack.c.b16 %v834, %v832
  %v1087 = vpack.c.b16 %v837, %v835
  %v1088 = vpack.c.b16 %v838, %v836
  %v1089 = vpack.c.b16 %v841, %v839
  %v1090 = vpack.c.b16 %v842, %v840
  %v1091 = vpack.c.b16 %v845, %v843
  %v1092 = vpack.c.b16 %v846, %v844
  %v1093 = vpack.c.b16 %v849, %v847
  %v1094 = vpack.c.b16 %v850, %v848
  %v1095 = vpack.c.b16 %v853, %v851
  %v1096 = vpack.c.b16 %v854, %v852
  %v1097 = vpack.c.b16 %v857, %v855
  %v1098 = vpack.c.b16 %v858, %v856
  %v1099 = vpack.c.b16 %v861, %v859
  %v1100 = vpack.c.b16 %v862, %v860
  %v1101 = vpack.c.b16 %v865, %v863
  %v1102 = vpack.c.b16 %v866, %v864
  %v1103 = vpack.c.b16 %v869, %v867
  %v1104 = vpack.c.b16 %v870, %v868
  %v1105 = vpack.c.b16 %v873, %v871
  %v1106 = vpack.c.b16 %v874, %v872
  %v1107 = vpack.c.b16 %v877, %v875
  %v1108 = vpack.c.b16 %v878, %v876
  %v1109 = vpack.c.b16 %v881, %v879
  %v1110 = vpack.c.b16 %v882, %v880
  %v1111 = vpack.c.b16 %v885, %v883
  %v1112 = vpack.c.b16 %v886, %v884
  %v1113 = vpack.c.b16 %v889, %v887
  %v1114 = vpack.c.b16 %v890, %v888
  %v1115 = vpack.c.b16 %v893, %v891
  %v1116 = vpack.c.b16 %v894, %v892
  %v1117 = vpack.c.b16 %v897, %v895
  %v1118 = vpack.c.b16 %v898, %v896
  %v1119 = vpack.c.b16 %v901, %v899
  %v1120 = vpack.c.b16 %v902, %v900
  %v1121 = vpack.c.b16 %v905, %v903
  %v1122 = vpack.c.b16 %v906, %v904
  %v1123 = vpack.c.b16 %v909, %v907
  %v1124 = vpack.c.b16 %v910, %v908
  %v1125 = vpack.c.b16 %v913, %v911
  %v1126 = vpack.c.b16 %v914, %v912
  %v1127 = vpack.c.b16 %v917, %v915
  %v1128 = vpack.c.b16 %v918, %v916
  %v1129 = vpack.c.b16 %v921, %v919
  %v1130 = vpack.c.b16 %v922, %v920
  %v1131 = vpack.c.b16 %v925, %v923
  %v1132 = vpack.c.b16 %v926, %v924
  %v1133 = vpack.c.b16 %v929, %v927
  %v1134 = vpack.c.b16 %v930, %v928
  %v1135 = vpack.c.b16 %v933, %v931
  %v1136 = vpack.c.b16 %v934, %v932
  %v1137 = vpack.c.b16 %v937, %v935
  %v1138 = vpack.c.b16 %v938, %v936
  %v1139 = vpack.c.b16 %v941, %v939
  %v1140 = vpack.c.b16 %v942, %v940
  %v1141 = vpack.c.b16 %v945, %v943
  %v1142 = vpack.c.b16 %v946, %v944
  %v1143 = vpack.c.b16 %v949, %v947
  %v1144 = vpack.c.b16 %v950, %v948
  %v1145 = vpack.c.b16 %v953, %v951
  %v1146 = vpack.c.b16 %v954, %v952
  %v1147 = vpack.c.b16 %v957, %v955
  %v1148 = vpack.c.b16 %v958, %v956
  %v1149 = vpack.c.b16 %v961, %v959
  %v1150 = vpack.c.b16 %v962, %v960
  %v1151 = vpack.c.b16 %v965, %v963
  %v1152 = vpack.c.b16 %v966, %v964
  %v1153 = vpack.c.b16 %v969, %v967
  %v1154 = vpack.c.b16 %v970, %v968
  %v1155 = vpack.c.b16 %v973, %v971
  %v1156 = vpack.c.b16 %v974, %v972
  %v1157 = vpack.c.b16 %v977, %v975
  %v1158 = vpack.c.b16 %v978, %v976
  %v1159 = vpack.c.b16 %v981, %v979
  %v1160 = vpack.c.b16 %v982, %v980
  %v1161 = vpack.c.b16 %v985, %v983
  %v1162 = vpack.c.b16 %v986, %v984
  %v1163 = vpack.c.b16 %v989, %v987
  %v1164 = vpack.c.b16 %v990, %v988
  %v1165 = vpack.c.b16 %v993, %v991
  %v1166 = vpack.c.b16 %v994, %v992
  %v1167 = vpack.c.b16 %v997, %v995
  %v1168 = vpack.c.b16 %v998, %v996
  %v1169 = vpack.c.b16 %v1001, %v999
  %v1170 = vpack.c.b16 %v1002, %v1000
  %v1171 = vpack.c.b16 %v1005, %v1003
  %v1172 = vpack.c.b16 %v1006, %v1004
  %v1173 = vpack.c.b16 %v1009, %v1007
  %v1174 = vpack.c.b16 %v1010, %v1008
  %v1175 = vpack.c.b16 %v1013, %v1011
  %v1176 = vpack.c.b16 %v1014, %v1012
  %v1177 = vpack.c.b16 %v1017, %v1015
  %v1178 = vpack.c.b16 %v1018, %v1016
  %v1179 = vpack.c.b16 %v1021, %v1019
  %v1180 = vpack.c.b16 %v1022, %v1020
  %v1181 = vpack.c.b16 %v1025, %v1023
  %v1182 = vpack.c.b16 %v1026, %v1024
  %v1183 = vpack.c.b16 %v1029, %v1027
  %v1184 = vpack.c.b16 %v1030, %v1028
  %v1185 = vpack.c.b16 %v1033, %v1031
  %v1186 = vpack.c.b16 %v1034, %v1032
  %v1187 = vpack.c.b16 %v1037, %v1035
  %v1188 = vpack.c.b16 %v1038, %v1036
  %v1189 = vpack.c.b16 %v1041, %v1039
  %v1190 = vpack.c.b16 %v1042, %v1040
  %v1191 = vpack.c.b16 %v1045, %v1043
  %v1192 = vpack.c.b16 %v1046, %v1044
  %v1193 = vpack.c.b16 %v1049, %v1047
  %v1194 = vpack.c.b16 %v1050, %v1048
  %1339 = vmatprep.subr.bf16.mxu0 %v1052
  %1340 = vmatpush1.bf16.msra.mxu0 %v1051
  %1341 = vmatprep.subr.bf16.mxu0 %v1054
  %1342 = vmatpush1.bf16.msra.mxu0 %v1053
  %1343 = vmatprep.subr.bf16.mxu0 %v1056
  %1344 = vmatpush1.bf16.msra.mxu0 %v1055
  %1345 = vmatprep.subr.bf16.mxu0 %v1058
  %1346 = vmatpush1.bf16.msra.mxu0 %v1057
  %1347 = vmatprep.subr.bf16.mxu0 %v1060
  %1348 = vmatpush1.bf16.msra.mxu0 %v1059
  %1349 = vmatprep.subr.bf16.mxu0 %v1062
  %1350 = vmatpush1.bf16.msra.mxu0 %v1061
  %1351 = vmatprep.subr.bf16.mxu0 %v1064
  %1352 = vmatpush1.bf16.msra.mxu0 %v1063
  %1353 = vmatprep.subr.bf16.mxu0 %v1066
  %1354 = vmatpush1.bf16.msra.mxu0 %v1065
  %1355 = vmatprep.subr.bf16.mxu0 %v1068
  %1356 = vmatpush1.bf16.msra.mxu0 %v1067
  %1357 = vmatprep.subr.bf16.mxu0 %v1070
  %1358 = vmatpush1.bf16.msra.mxu0 %v1069
  %1359 = vmatprep.subr.bf16.mxu0 %v1072
  %1360 = vmatpush1.bf16.msra.mxu0 %v1071
  %1361 = vmatprep.subr.bf16.mxu0 %v1074
  %1362 = vmatpush1.bf16.msra.mxu0 %v1073
  %1363 = vmatprep.subr.bf16.mxu0 %v1076
  %1364 = vmatpush1.bf16.msra.mxu0 %v1075
  %1365 = vmatprep.subr.bf16.mxu0 %v1078
  %1366 = vmatpush1.bf16.msra.mxu0 %v1077
  %1367 = vmatprep.subr.bf16.mxu0 %v1080
  %1368 = vmatpush1.bf16.msra.mxu0 %v1079
  %1369 = vmatprep.subr.bf16.mxu0 %v1082
  %1370 = vmatpush1.bf16.msra.mxu0 %v1081
  %1371 = vmatprep.mubr.bf16.mxu0 %v476
  %1372 = vmatmul.mubr.bf16.gmra.mrb[0].mxu0 %v475
  %v1373 = vpop.f32.mrb[0].mxu0
  %v1374 = vadd.f32 %v244, %v1373
  %v1375 = vpop.f32.mrb[0].mxu0
  %v1376 = vadd.f32 %v248, %v1375
  %v1377 = vpop.f32.mrb[0].mxu0
  %v1378 = vadd.f32 %v244, %v1377
  %v1379 = vpop.f32.mrb[0].mxu0
  %v1380 = vadd.f32 %v248, %v1379
  %1381 = vmatprep.mubr.bf16.mxu0 %v485
  %1382 = vmatmul.mubr.bf16.gmra.mrb[0].mxu0 %v484
  %v1383 = vpop.f32.mrb[0].mxu0
  %v1384 = vadd.f32 %v244, %v1383
  %v1385 = vpop.f32.mrb[0].mxu0
  %v1386 = vadd.f32 %v248, %v1385
  %v1387 = vpop.f32.mrb[0].mxu0
  %v1388 = vadd.f32 %v244, %v1387
  %v1389 = vpop.f32.mrb[0].mxu0
  %v1390 = vadd.f32 %v248, %v1389
  %1391 = vmatprep.mubr.bf16.mxu0 %v494
  %1392 = vmatmul.mubr.bf16.gmra.mrb[0].mxu0 %v493
  %v1393 = vpop.f32.mrb[0].mxu0
  %v1394 = vadd.f32 %v244, %v1393
  %v1395 = vpop.f32.mrb[0].mxu0
  %v1396 = vadd.f32 %v248, %v1395
  %v1397 = vpop.f32.mrb[0].mxu0
  %v1398 = vadd.f32 %v244, %v1397
  %v1399 = vpop.f32.mrb[0].mxu0
  %v1400 = vadd.f32 %v248, %v1399
  %1401 = vmatprep.mubr.bf16.mxu0 %v503
  %1402 = vmatmul.mubr.bf16.gmra.mrb[0].mxu0 %v502
  %v1403 = vpop.f32.mrb[0].mxu0
  %v1404 = vadd.f32 %v244, %v1403
  %v1405 = vpop.f32.mrb[0].mxu0
  %v1406 = vadd.f32 %v248, %v1405
  %v1407 = vpop.f32.mrb[0].mxu0
  %v1408 = vadd.f32 %v244, %v1407
  %v1409 = vpop.f32.mrb[0].mxu0
  %v1410 = vadd.f32 %v248, %v1409
  %1411 = vmatprep.mubr.bf16.mxu0 %v512
  %1412 = vmatmul.mubr.bf16.gmra.mrb[0].mxu0 %v511
  %v1413 = vpop.f32.mrb[0].mxu0
  %v1414 = vadd.f32 %v244, %v1413
  %v1415 = vpop.f32.mrb[0].mxu0
  %v1416 = vadd.f32 %v248, %v1415
  %v1417 = vpop.f32.mrb[0].mxu0
  %v1418 = vadd.f32 %v244, %v1417
  %v1419 = vpop.f32.mrb[0].mxu0
  %v1420 = vadd.f32 %v248, %v1419
  %1421 = vmatprep.mubr.bf16.mxu0 %v521
  %1422 = vmatmul.mubr.bf16.gmra.mrb[0].mxu0 %v520
  %v1423 = vpop.f32.mrb[0].mxu0
  %v1424 = vadd.f32 %v244, %v1423
  %v1425 = vpop.f32.mrb[0].mxu0
  %v1426 = vadd.f32 %v248, %v1425
  %v1427 = vpop.f32.mrb[0].mxu0
  %v1428 = vadd.f32 %v244, %v1427
  %v1429 = vpop.f32.mrb[0].mxu0
  %v1430 = vadd.f32 %v248, %v1429
  %1431 = vmatprep.mubr.bf16.mxu0 %v530
  %1432 = vmatmul.mubr.bf16.gmra.mrb[0].mxu0 %v529
  %v1433 = vpop.f32.mrb[0].mxu0
  %v1434 = vadd.f32 %v244, %v1433
  %v1435 = vpop.f32.mrb[0].mxu0
  %v1436 = vadd.f32 %v248, %v1435
  %v1437 = vpop.f32.mrb[0].mxu0
  %v1438 = vadd.f32 %v244, %v1437
  %v1439 = vpop.f32.mrb[0].mxu0
  %v1440 = vadd.f32 %v248, %v1439
  %1441 = vmatprep.mubr.bf16.mxu0 %v539
  %1442 = vmatmul.mubr.bf16.gmra.mrb[0].mxu0 %v538
  %v1443 = vpop.f32.mrb[0].mxu0
  %v1444 = vadd.f32 %v244, %v1443
  %v1445 = vpop.f32.mrb[0].mxu0
  %v1446 = vadd.f32 %v248, %v1445
  %v1447 = vpop.f32.mrb[0].mxu0
  %v1448 = vadd.f32 %v244, %v1447
  %v1449 = vpop.f32.mrb[0].mxu0
  %v1450 = vadd.f32 %v248, %v1449
  %1451 = vdwg.mxu0
  %1452 = vmatprep.subr.bf16.mxu0 %v1084
  %1453 = vmatpush1.bf16.msra.mxu0 %v1083
  %1454 = vmatprep.subr.bf16.mxu0 %v1086
  %1455 = vmatpush1.bf16.msra.mxu0 %v1085
  %1456 = vmatprep.subr.bf16.mxu0 %v1088
  %1457 = vmatpush1.bf16.msra.mxu0 %v1087
  %1458 = vmatprep.subr.bf16.mxu0 %v1090
  %1459 = vmatpush1.bf16.msra.mxu0 %v1089
  %1460 = vmatprep.subr.bf16.mxu0 %v1092
  %1461 = vmatpush1.bf16.msra.mxu0 %v1091
  %1462 = vmatprep.subr.bf16.mxu0 %v1094
  %1463 = vmatpush1.bf16.msra.mxu0 %v1093
  %1464 = vmatprep.subr.bf16.mxu0 %v1096
  %1465 = vmatpush1.bf16.msra.mxu0 %v1095
  %1466 = vmatprep.subr.bf16.mxu0 %v1098
  %1467 = vmatpush1.bf16.msra.mxu0 %v1097
  %1468 = vmatprep.subr.bf16.mxu0 %v1100
  %1469 = vmatpush1.bf16.msra.mxu0 %v1099
  %1470 = vmatprep.subr.bf16.mxu0 %v1102
  %1471 = vmatpush1.bf16.msra.mxu0 %v1101
  %1472 = vmatprep.subr.bf16.mxu0 %v1104
  %1473 = vmatpush1.bf16.msra.mxu0 %v1103
  %1474 = vmatprep.subr.bf16.mxu0 %v1106
  %1475 = vmatpush1.bf16.msra.mxu0 %v1105
  %1476 = vmatprep.subr.bf16.mxu0 %v1108
  %1477 = vmatpush1.bf16.msra.mxu0 %v1107
  %1478 = vmatprep.subr.bf16.mxu0 %v1110
  %1479 = vmatpush1.bf16.msra.mxu0 %v1109
  %1480 = vmatprep.subr.bf16.mxu0 %v1112
  %1481 = vmatpush1.bf16.msra.mxu0 %v1111
  %1482 = vmatprep.subr.bf16.mxu0 %v1114
  %1483 = vmatpush1.bf16.msra.mxu0 %v1113
  %1484 = vmatprep.mubr.bf16.mxu0 %v478
  %1485 = vmatmul.mubr.bf16.gmra.mrb[0].mxu0 %v477
  %v1486 = vpop.f32.mrb[0].mxu0
  %v1487 = vadd.f32 %v1374, %v1486
  %v1488 = vpop.f32.mrb[0].mxu0
  %v1489 = vadd.f32 %v1376, %v1488
  %v1490 = vpop.f32.mrb[0].mxu0
  %v1491 = vadd.f32 %v1378, %v1490
  %v1492 = vpop.f32.mrb[0].mxu0
  %v1493 = vadd.f32 %v1380, %v1492
  %1494 = vmatprep.mubr.bf16.mxu0 %v487
  %1495 = vmatmul.mubr.bf16.gmra.mrb[0].mxu0 %v486
  %v1496 = vpop.f32.mrb[0].mxu0
  %v1497 = vadd.f32 %v1384, %v1496
  %v1498 = vpop.f32.mrb[0].mxu0
  %v1499 = vadd.f32 %v1386, %v1498
  %v1500 = vpop.f32.mrb[0].mxu0
  %v1501 = vadd.f32 %v1388, %v1500
  %v1502 = vpop.f32.mrb[0].mxu0
  %v1503 = vadd.f32 %v1390, %v1502
  %1504 = vmatprep.mubr.bf16.mxu0 %v496
  %1505 = vmatmul.mubr.bf16.gmra.mrb[0].mxu0 %v495
  %v1506 = vpop.f32.mrb[0].mxu0
  %v1507 = vadd.f32 %v1394, %v1506
  %v1508 = vpop.f32.mrb[0].mxu0
  %v1509 = vadd.f32 %v1396, %v1508
  %v1510 = vpop.f32.mrb[0].mxu0
  %v1511 = vadd.f32 %v1398, %v1510
  %v1512 = vpop.f32.mrb[0].mxu0
  %v1513 = vadd.f32 %v1400, %v1512
  %1514 = vmatprep.mubr.bf16.mxu0 %v505
  %1515 = vmatmul.mubr.bf16.gmra.mrb[0].mxu0 %v504
  %v1516 = vpop.f32.mrb[0].mxu0
  %v1517 = vadd.f32 %v1404, %v1516
  %v1518 = vpop.f32.mrb[0].mxu0
  %v1519 = vadd.f32 %v1406, %v1518
  %v1520 = vpop.f32.mrb[0].mxu0
  %v1521 = vadd.f32 %v1408, %v1520
  %v1522 = vpop.f32.mrb[0].mxu0
  %v1523 = vadd.f32 %v1410, %v1522
  %1524 = vmatprep.mubr.bf16.mxu0 %v514
  %1525 = vmatmul.mubr.bf16.gmra.mrb[0].mxu0 %v513
  %v1526 = vpop.f32.mrb[0].mxu0
  %v1527 = vadd.f32 %v1414, %v1526
  %v1528 = vpop.f32.mrb[0].mxu0
  %v1529 = vadd.f32 %v1416, %v1528
  %v1530 = vpop.f32.mrb[0].mxu0
  %v1531 = vadd.f32 %v1418, %v1530
  %v1532 = vpop.f32.mrb[0].mxu0
  %v1533 = vadd.f32 %v1420, %v1532
  %1534 = vmatprep.mubr.bf16.mxu0 %v523
  %1535 = vmatmul.mubr.bf16.gmra.mrb[0].mxu0 %v522
  %v1536 = vpop.f32.mrb[0].mxu0
  %v1537 = vadd.f32 %v1424, %v1536
  %v1538 = vpop.f32.mrb[0].mxu0
  %v1539 = vadd.f32 %v1426, %v1538
  %v1540 = vpop.f32.mrb[0].mxu0
  %v1541 = vadd.f32 %v1428, %v1540
  %v1542 = vpop.f32.mrb[0].mxu0
  %v1543 = vadd.f32 %v1430, %v1542
  %1544 = vmatprep.mubr.bf16.mxu0 %v532
  %1545 = vmatmul.mubr.bf16.gmra.mrb[0].mxu0 %v531
  %v1546 = vpop.f32.mrb[0].mxu0
  %v1547 = vadd.f32 %v1434, %v1546
  %v1548 = vpop.f32.mrb[0].mxu0
  %v1549 = vadd.f32 %v1436, %v1548
  %v1550 = vpop.f32.mrb[0].mxu0
  %v1551 = vadd.f32 %v1438, %v1550
  %v1552 = vpop.f32.mrb[0].mxu0
  %v1553 = vadd.f32 %v1440, %v1552
  %1554 = vmatprep.mubr.bf16.mxu0 %v541
  %1555 = vmatmul.mubr.bf16.gmra.mrb[0].mxu0 %v540
  %v1556 = vpop.f32.mrb[0].mxu0
  %v1557 = vadd.f32 %v1444, %v1556
  %v1558 = vpop.f32.mrb[0].mxu0
  %v1559 = vadd.f32 %v1446, %v1558
  %v1560 = vpop.f32.mrb[0].mxu0
  %v1561 = vadd.f32 %v1448, %v1560
  %v1562 = vpop.f32.mrb[0].mxu0
  %v1563 = vadd.f32 %v1450, %v1562
  %1564 = vdwg.mxu0
  %1565 = vmatprep.subr.bf16.mxu0 %v1116
  %1566 = vmatpush1.bf16.msra.mxu0 %v1115
  %1567 = vmatprep.subr.bf16.mxu0 %v1118
  %1568 = vmatpush1.bf16.msra.mxu0 %v1117
  %1569 = vmatprep.subr.bf16.mxu0 %v1120
  %1570 = vmatpush1.bf16.msra.mxu0 %v1119
  %1571 = vmatprep.subr.bf16.mxu0 %v1122
  %1572 = vmatpush1.bf16.msra.mxu0 %v1121
  %1573 = vmatprep.subr.bf16.mxu0 %v1124
  %1574 = vmatpush1.bf16.msra.mxu0 %v1123
  %1575 = vmatprep.subr.bf16.mxu0 %v1126
  %1576 = vmatpush1.bf16.msra.mxu0 %v1125
  %1577 = vmatprep.subr.bf16.mxu0 %v1128
  %1578 = vmatpush1.bf16.msra.mxu0 %v1127
  %1579 = vmatprep.subr.bf16.mxu0 %v1130
  %1580 = vmatpush1.bf16.msra.mxu0 %v1129
  %1581 = vmatprep.subr.bf16.mxu0 %v1132
  %1582 = vmatpush1.bf16.msra.mxu0 %v1131
  %1583 = vmatprep.subr.bf16.mxu0 %v1134
  %1584 = vmatpush1.bf16.msra.mxu0 %v1133
  %1585 = vmatprep.subr.bf16.mxu0 %v1136
  %1586 = vmatpush1.bf16.msra.mxu0 %v1135
  %1587 = vmatprep.subr.bf16.mxu0 %v1138
  %1588 = vmatpush1.bf16.msra.mxu0 %v1137
  %1589 = vmatprep.subr.bf16.mxu0 %v1140
  %1590 = vmatpush1.bf16.msra.mxu0 %v1139
  %1591 = vmatprep.subr.bf16.mxu0 %v1142
  %1592 = vmatpush1.bf16.msra.mxu0 %v1141
  %1593 = vmatprep.subr.bf16.mxu0 %v1144
  %1594 = vmatpush1.bf16.msra.mxu0 %v1143
  %1595 = vmatprep.subr.bf16.mxu0 %v1146
  %1596 = vmatpush1.bf16.msra.mxu0 %v1145
  %1597 = vmatprep.mubr.bf16.mxu0 %v480
  %1598 = vmatmul.mubr.bf16.gmra.mrb[0].mxu0 %v479
  %v1599 = vpop.f32.mrb[0].mxu0
  %v1600 = vadd.f32 %v1487, %v1599
  %v1601 = vpop.f32.mrb[0].mxu0
  %v1602 = vadd.f32 %v1489, %v1601
  %v1603 = vpop.f32.mrb[0].mxu0
  %v1604 = vadd.f32 %v1491, %v1603
  %v1605 = vpop.f32.mrb[0].mxu0
  %v1606 = vadd.f32 %v1493, %v1605
  %1607 = vmatprep.mubr.bf16.mxu0 %v489
  %1608 = vmatmul.mubr.bf16.gmra.mrb[0].mxu0 %v488
  %v1609 = vpop.f32.mrb[0].mxu0
  %v1610 = vadd.f32 %v1497, %v1609
  %v1611 = vpop.f32.mrb[0].mxu0
  %v1612 = vadd.f32 %v1499, %v1611
  %v1613 = vpop.f32.mrb[0].mxu0
  %v1614 = vadd.f32 %v1501, %v1613
  %v1615 = vpop.f32.mrb[0].mxu0
  %v1616 = vadd.f32 %v1503, %v1615
  %1617 = vmatprep.mubr.bf16.mxu0 %v498
  %1618 = vmatmul.mubr.bf16.gmra.mrb[0].mxu0 %v497
  %v1619 = vpop.f32.mrb[0].mxu0
  %v1620 = vadd.f32 %v1507, %v1619
  %v1621 = vpop.f32.mrb[0].mxu0
  %v1622 = vadd.f32 %v1509, %v1621
  %v1623 = vpop.f32.mrb[0].mxu0
  %v1624 = vadd.f32 %v1511, %v1623
  %v1625 = vpop.f32.mrb[0].mxu0
  %v1626 = vadd.f32 %v1513, %v1625
  %1627 = vmatprep.mubr.bf16.mxu0 %v507
  %1628 = vmatmul.mubr.bf16.gmra.mrb[0].mxu0 %v506
  %v1629 = vpop.f32.mrb[0].mxu0
  %v1630 = vadd.f32 %v1517, %v1629
  %v1631 = vpop.f32.mrb[0].mxu0
  %v1632 = vadd.f32 %v1519, %v1631
  %v1633 = vpop.f32.mrb[0].mxu0
  %v1634 = vadd.f32 %v1521, %v1633
  %v1635 = vpop.f32.mrb[0].mxu0
  %v1636 = vadd.f32 %v1523, %v1635
  %1637 = vmatprep.mubr.bf16.mxu0 %v516
  %1638 = vmatmul.mubr.bf16.gmra.mrb[0].mxu0 %v515
  %v1639 = vpop.f32.mrb[0].mxu0
  %v1640 = vadd.f32 %v1527, %v1639
  %v1641 = vpop.f32.mrb[0].mxu0
  %v1642 = vadd.f32 %v1529, %v1641
  %v1643 = vpop.f32.mrb[0].mxu0
  %v1644 = vadd.f32 %v1531, %v1643
  %v1645 = vpop.f32.mrb[0].mxu0
  %v1646 = vadd.f32 %v1533, %v1645
  %1647 = vmatprep.mubr.bf16.mxu0 %v525
  %1648 = vmatmul.mubr.bf16.gmra.mrb[0].mxu0 %v524
  %v1649 = vpop.f32.mrb[0].mxu0
  %v1650 = vadd.f32 %v1537, %v1649
  %v1651 = vpop.f32.mrb[0].mxu0
  %v1652 = vadd.f32 %v1539, %v1651
  %v1653 = vpop.f32.mrb[0].mxu0
  %v1654 = vadd.f32 %v1541, %v1653
  %v1655 = vpop.f32.mrb[0].mxu0
  %v1656 = vadd.f32 %v1543, %v1655
  %1657 = vmatprep.mubr.bf16.mxu0 %v534
  %1658 = vmatmul.mubr.bf16.gmra.mrb[0].mxu0 %v533
  %v1659 = vpop.f32.mrb[0].mxu0
  %v1660 = vadd.f32 %v1547, %v1659
  %v1661 = vpop.f32.mrb[0].mxu0
  %v1662 = vadd.f32 %v1549, %v1661
  %v1663 = vpop.f32.mrb[0].mxu0
  %v1664 = vadd.f32 %v1551, %v1663
  %v1665 = vpop.f32.mrb[0].mxu0
  %v1666 = vadd.f32 %v1553, %v1665
  %1667 = vmatprep.mubr.bf16.mxu0 %v543
  %1668 = vmatmul.mubr.bf16.gmra.mrb[0].mxu0 %v542
  %v1669 = vpop.f32.mrb[0].mxu0
  %v1670 = vadd.f32 %v1557, %v1669
  %v1671 = vpop.f32.mrb[0].mxu0
  %v1672 = vadd.f32 %v1559, %v1671
  %v1673 = vpop.f32.mrb[0].mxu0
  %v1674 = vadd.f32 %v1561, %v1673
  %v1675 = vpop.f32.mrb[0].mxu0
  %v1676 = vadd.f32 %v1563, %v1675
  %1677 = vdwg.mxu0
  %1678 = vmatprep.subr.bf16.mxu0 %v1148
  %1679 = vmatpush1.bf16.msra.mxu0 %v1147
  %1680 = vmatprep.subr.bf16.mxu0 %v1150
  %1681 = vmatpush1.bf16.msra.mxu0 %v1149
  %1682 = vmatprep.subr.bf16.mxu0 %v1152
  %1683 = vmatpush1.bf16.msra.mxu0 %v1151
  %1684 = vmatprep.subr.bf16.mxu0 %v1154
  %1685 = vmatpush1.bf16.msra.mxu0 %v1153
  %1686 = vmatprep.subr.bf16.mxu0 %v1156
  %1687 = vmatpush1.bf16.msra.mxu0 %v1155
  %1688 = vmatprep.subr.bf16.mxu0 %v1158
  %1689 = vmatpush1.bf16.msra.mxu0 %v1157
  %1690 = vmatprep.subr.bf16.mxu0 %v1160
  %1691 = vmatpush1.bf16.msra.mxu0 %v1159
  %1692 = vmatprep.subr.bf16.mxu0 %v1162
  %1693 = vmatpush1.bf16.msra.mxu0 %v1161
  %1694 = vmatprep.subr.bf16.mxu0 %v1164
  %1695 = vmatpush1.bf16.msra.mxu0 %v1163
  %1696 = vmatprep.subr.bf16.mxu0 %v1166
  %1697 = vmatpush1.bf16.msra.mxu0 %v1165
  %1698 = vmatprep.subr.bf16.mxu0 %v1168
  %1699 = vmatpush1.bf16.msra.mxu0 %v1167
  %1700 = vmatprep.subr.bf16.mxu0 %v1170
  %1701 = vmatpush1.bf16.msra.mxu0 %v1169
  %1702 = vmatprep.subr.bf16.mxu0 %v1172
  %1703 = vmatpush1.bf16.msra.mxu0 %v1171
  %1704 = vmatprep.subr.bf16.mxu0 %v1174
  %1705 = vmatpush1.bf16.msra.mxu0 %v1173
  %1706 = vmatprep.subr.bf16.mxu0 %v1176
  %1707 = vmatpush1.bf16.msra.mxu0 %v1175
  %1708 = vmatprep.subr.bf16.mxu0 %v1178
  %1709 = vmatpush1.bf16.msra.mxu0 %v1177
  %1710 = vmatprep.mubr.bf16.mxu0 %v482
  %1711 = vmatmul.mubr.bf16.gmra.mrb[0].mxu0 %v481
  %v1712 = vpop.f32.mrb[0].mxu0
  %v1713 = vadd.f32 %v1600, %v1712
  %v1714 = vpop.f32.mrb[0].mxu0
  %v1715 = vadd.f32 %v1602, %v1714
  %v1716 = vpop.f32.mrb[0].mxu0
  %v1717 = vadd.f32 %v1604, %v1716
  %v1718 = vpop.f32.mrb[0].mxu0
  %v1719 = vadd.f32 %v1606, %v1718
  %1720 = vmatprep.mubr.bf16.mxu0 %v491
  %1721 = vmatmul.mubr.bf16.gmra.mrb[0].mxu0 %v490
  %v1722 = vpop.f32.mrb[0].mxu0
  %v1723 = vadd.f32 %v1610, %v1722
  %v1724 = vpop.f32.mrb[0].mxu0
  %v1725 = vadd.f32 %v1612, %v1724
  %v1726 = vpop.f32.mrb[0].mxu0
  %v1727 = vadd.f32 %v1614, %v1726
  %v1728 = vpop.f32.mrb[0].mxu0
  %v1729 = vadd.f32 %v1616, %v1728
  %1730 = vmatprep.mubr.bf16.mxu0 %v500
  %1731 = vmatmul.mubr.bf16.gmra.mrb[0].mxu0 %v499
  %v1732 = vpop.f32.mrb[0].mxu0
  %v1733 = vadd.f32 %v1620, %v1732
  %v1734 = vpop.f32.mrb[0].mxu0
  %v1735 = vadd.f32 %v1622, %v1734
  %v1736 = vpop.f32.mrb[0].mxu0
  %v1737 = vadd.f32 %v1624, %v1736
  %v1738 = vpop.f32.mrb[0].mxu0
  %v1739 = vadd.f32 %v1626, %v1738
  %1740 = vmatprep.mubr.bf16.mxu0 %v509
  %1741 = vmatmul.mubr.bf16.gmra.mrb[0].mxu0 %v508
  %v1742 = vpop.f32.mrb[0].mxu0
  %v1743 = vadd.f32 %v1630, %v1742
  %v1744 = vpop.f32.mrb[0].mxu0
  %v1745 = vadd.f32 %v1632, %v1744
  %v1746 = vpop.f32.mrb[0].mxu0
  %v1747 = vadd.f32 %v1634, %v1746
  %v1748 = vpop.f32.mrb[0].mxu0
  %v1749 = vadd.f32 %v1636, %v1748
  %1750 = vmatprep.mubr.bf16.mxu0 %v518
  %1751 = vmatmul.mubr.bf16.gmra.mrb[0].mxu0 %v517
  %v1752 = vpop.f32.mrb[0].mxu0
  %v1753 = vadd.f32 %v1640, %v1752
  %v1754 = vpop.f32.mrb[0].mxu0
  %v1755 = vadd.f32 %v1642, %v1754
  %v1756 = vpop.f32.mrb[0].mxu0
  %v1757 = vadd.f32 %v1644, %v1756
  %v1758 = vpop.f32.mrb[0].mxu0
  %v1759 = vadd.f32 %v1646, %v1758
  %1760 = vmatprep.mubr.bf16.mxu0 %v527
  %1761 = vmatmul.mubr.bf16.gmra.mrb[0].mxu0 %v526
  %v1762 = vpop.f32.mrb[0].mxu0
  %v1763 = vadd.f32 %v1650, %v1762
  %v1764 = vpop.f32.mrb[0].mxu0
  %v1765 = vadd.f32 %v1652, %v1764
  %v1766 = vpop.f32.mrb[0].mxu0
  %v1767 = vadd.f32 %v1654, %v1766
  %v1768 = vpop.f32.mrb[0].mxu0
  %v1769 = vadd.f32 %v1656, %v1768
  %1770 = vmatprep.mubr.bf16.mxu0 %v536
  %1771 = vmatmul.mubr.bf16.gmra.mrb[0].mxu0 %v535
  %v1772 = vpop.f32.mrb[0].mxu0
  %v1773 = vadd.f32 %v1660, %v1772
  %v1774 = vpop.f32.mrb[0].mxu0
  %v1775 = vadd.f32 %v1662, %v1774
  %v1776 = vpop.f32.mrb[0].mxu0
  %v1777 = vadd.f32 %v1664, %v1776
  %v1778 = vpop.f32.mrb[0].mxu0
  %v1779 = vadd.f32 %v1666, %v1778
  %1780 = vmatprep.mubr.bf16.mxu0 %v545
  %1781 = vmatmul.mubr.bf16.gmra.mrb[0].mxu0 %v544
  %v1782 = vpop.f32.mrb[0].mxu0
  %v1783 = vadd.f32 %v1670, %v1782
  %v1784 = vpop.f32.mrb[0].mxu0
  %v1785 = vadd.f32 %v1672, %v1784
  %v1786 = vpop.f32.mrb[0].mxu0
  %v1787 = vadd.f32 %v1674, %v1786
  %v1788 = vpop.f32.mrb[0].mxu0
  %v1789 = vadd.f32 %v1676, %v1788
  %1790 = vdwg.mxu0
  %1791 = vmatprep.subr.bf16.mxu0 %v1180
  %1792 = vmatpush1.bf16.msra.mxu0 %v1179
  %1793 = vmatprep.subr.bf16.mxu0 %v1182
  %1794 = vmatpush1.bf16.msra.mxu0 %v1181
  %1795 = vmatprep.subr.bf16.mxu0 %v1184
  %1796 = vmatpush1.bf16.msra.mxu0 %v1183
  %1797 = vmatprep.subr.bf16.mxu0 %v1186
  %1798 = vmatpush1.bf16.msra.mxu0 %v1185
  %1799 = vmatprep.subr.bf16.mxu0 %v1188
  %1800 = vmatpush1.bf16.msra.mxu0 %v1187
  %1801 = vmatprep.subr.bf16.mxu0 %v1190
  %1802 = vmatpush1.bf16.msra.mxu0 %v1189
  %1803 = vmatprep.subr.bf16.mxu0 %v1192
  %1804 = vmatpush1.bf16.msra.mxu0 %v1191
  %1805 = vmatprep.subr.bf16.mxu0 %v1194
  %1806 = vmatpush1.bf16.msra.mxu0 %v1193
  %1807 = vmatprep.subr.bf16.mxu0 0
  %1808 = vmatpush1.bf16.msra.mxu0 0
  %1809 = vmatprep.subr.bf16.mxu0 0
  %1810 = vmatpush1.bf16.msra.mxu0 0
  %1811 = vmatprep.subr.bf16.mxu0 0
  %1812 = vmatpush1.bf16.msra.mxu0 0
  %1813 = vmatprep.subr.bf16.mxu0 0
  %1814 = vmatpush1.bf16.msra.mxu0 0
  %1815 = vmatprep.subr.bf16.mxu0 0
  %1816 = vmatpush1.bf16.msra.mxu0 0
  %1817 = vmatprep.subr.bf16.mxu0 0
  %1818 = vmatpush1.bf16.msra.mxu0 0
  %1819 = vmatprep.subr.bf16.mxu0 0
  %1820 = vmatpush1.bf16.msra.mxu0 0
  %1821 = vmatprep.subr.bf16.mxu0 0
  %1822 = vmatpush1.bf16.msra.mxu0 0
  %1823 = vmatprep.mubr.bf16.mxu0 0
  %1824 = vmatmul.mubr.bf16.gmra.mrb[0].mxu0 %v483
  %v1825 = vpop.f32.mrb[0].mxu0
  %v1826 = vadd.f32 %v1713, %v1825
  %v1827 = vpop.f32.mrb[0].mxu0
  %v1828 = vadd.f32 %v1715, %v1827
  %v1829 = vpop.f32.mrb[0].mxu0
  %v1830 = vadd.f32 %v1717, %v1829
  %v1831 = vpop.f32.mrb[0].mxu0
  %v1832 = vadd.f32 %v1719, %v1831
  %1833 = vmatprep.mubr.bf16.mxu0 0
  %1834 = vmatmul.mubr.bf16.gmra.mrb[0].mxu0 %v492
  %v1835 = vpop.f32.mrb[0].mxu0
  %v1836 = vadd.f32 %v1723, %v1835
  %v1837 = vpop.f32.mrb[0].mxu0
  %v1838 = vadd.f32 %v1725, %v1837
  %v1839 = vpop.f32.mrb[0].mxu0
  %v1840 = vadd.f32 %v1727, %v1839
  %v1841 = vpop.f32.mrb[0].mxu0
  %v1842 = vadd.f32 %v1729, %v1841
  %1843 = vmatprep.mubr.bf16.mxu0 0
  %1844 = vmatmul.mubr.bf16.gmra.mrb[0].mxu0 %v501
  %v1845 = vpop.f32.mrb[0].mxu0
  %v1846 = vadd.f32 %v1733, %v1845
  %v1847 = vpop.f32.mrb[0].mxu0
  %v1848 = vadd.f32 %v1735, %v1847
  %v1849 = vpop.f32.mrb[0].mxu0
  %v1850 = vadd.f32 %v1737, %v1849
  %v1851 = vpop.f32.mrb[0].mxu0
  %v1852 = vadd.f32 %v1739, %v1851
  %1853 = vmatprep.mubr.bf16.mxu0 0
  %1854 = vmatmul.mubr.bf16.gmra.mrb[0].mxu0 %v510
  %v1855 = vpop.f32.mrb[0].mxu0
  %v1856 = vadd.f32 %v1743, %v1855
  %v1857 = vpop.f32.mrb[0].mxu0
  %v1858 = vadd.f32 %v1745, %v1857
  %v1859 = vpop.f32.mrb[0].mxu0
  %v1860 = vadd.f32 %v1747, %v1859
  %v1861 = vpop.f32.mrb[0].mxu0
  %v1862 = vadd.f32 %v1749, %v1861
  %1863 = vmatprep.mubr.bf16.mxu0 0
  %1864 = vmatmul.mubr.bf16.gmra.mrb[0].mxu0 %v519
  %v1865 = vpop.f32.mrb[0].mxu0
  %v1866 = vadd.f32 %v1753, %v1865
  %v1867 = vpop.f32.mrb[0].mxu0
  %v1868 = vadd.f32 %v1755, %v1867
  %v1869 = vpop.f32.mrb[0].mxu0
  %v1870 = vadd.f32 %v1757, %v1869
  %v1871 = vpop.f32.mrb[0].mxu0
  %v1872 = vadd.f32 %v1759, %v1871
  %1873 = vmatprep.mubr.bf16.mxu0 0
  %1874 = vmatmul.mubr.bf16.gmra.mrb[0].mxu0 %v528
  %v1875 = vpop.f32.mrb[0].mxu0
  %v1876 = vadd.f32 %v1763, %v1875
  %v1877 = vpop.f32.mrb[0].mxu0
  %v1878 = vadd.f32 %v1765, %v1877
  %v1879 = vpop.f32.mrb[0].mxu0
  %v1880 = vadd.f32 %v1767, %v1879
  %v1881 = vpop.f32.mrb[0].mxu0
  %v1882 = vadd.f32 %v1769, %v1881
  %1883 = vmatprep.mubr.bf16.mxu0 0
  %1884 = vmatmul.mubr.bf16.gmra.mrb[0].mxu0 %v537
  %v1885 = vpop.f32.mrb[0].mxu0
  %v1886 = vadd.f32 %v1773, %v1885
  %v1887 = vpop.f32.mrb[0].mxu0
  %v1888 = vadd.f32 %v1775, %v1887
  %v1889 = vpop.f32.mrb[0].mxu0
  %v1890 = vadd.f32 %v1777, %v1889
  %v1891 = vpop.f32.mrb[0].mxu0
  %v1892 = vadd.f32 %v1779, %v1891
  %1893 = vmatprep.mubr.bf16.mxu0 0
  %1894 = vmatmul.mubr.bf16.gmra.mrb[0].mxu0 %v546
  %v1895 = vpop.f32.mrb[0].mxu0
  %v1896 = vadd.f32 %v1783, %v1895
  %v1897 = vpop.f32.mrb[0].mxu0
  %v1898 = vadd.f32 %v1785, %v1897
  %v1899 = vpop.f32.mrb[0].mxu0
  %v1900 = vadd.f32 %v1787, %v1899
  %v1901 = vpop.f32.mrb[0].mxu0
  %v1902 = vadd.f32 %v1789, %v1901
  %1903 = vdwg.mxu0
  %vm1904 = vcmp.gt.f32.partialorder %v1826, 0.0
  %vm1905 = vcmp.gt.f32.partialorder %v1828, 0.0
  %vm1906 = vcmp.gt.f32.partialorder %v1830, 0.0
  %vm1907 = vcmp.gt.f32.partialorder %v1832, 0.0
  %vm1908 = vcmp.gt.f32.partialorder %v1836, 0.0
  %vm1909 = vcmp.gt.f32.partialorder %v1838, 0.0
  %vm1910 = vcmp.gt.f32.partialorder %v1840, 0.0
  %vm1911 = vcmp.gt.f32.partialorder %v1842, 0.0
  %vm1912 = vcmp.gt.f32.partialorder %v1846, 0.0
  %vm1913 = vcmp.gt.f32.partialorder %v1848, 0.0
  %vm1914 = vcmp.gt.f32.partialorder %v1850, 0.0
  %vm1915 = vcmp.gt.f32.partialorder %v1852, 0.0
  %vm1916 = vcmp.gt.f32.partialorder %v1856, 0.0
  %vm1917 = vcmp.gt.f32.partialorder %v1858, 0.0
  %vm1918 = vcmp.gt.f32.partialorder %v1860, 0.0
  %vm1919 = vcmp.gt.f32.partialorder %v1862, 0.0
  %vm1920 = vcmp.gt.f32.partialorder %v1866, 0.0
  %vm1921 = vcmp.gt.f32.partialorder %v1868, 0.0
  %vm1922 = vcmp.gt.f32.partialorder %v1870, 0.0
  %vm1923 = vcmp.gt.f32.partialorder %v1872, 0.0
  %vm1924 = vcmp.gt.f32.partialorder %v1876, 0.0
  %vm1925 = vcmp.gt.f32.partialorder %v1878, 0.0
  %vm1926 = vcmp.gt.f32.partialorder %v1880, 0.0
  %vm1927 = vcmp.gt.f32.partialorder %v1882, 0.0
  %vm1928 = vcmp.gt.f32.partialorder %v1886, 0.0
  %vm1929 = vcmp.gt.f32.partialorder %v1888, 0.0
  %vm1930 = vcmp.gt.f32.partialorder %v1890, 0.0
  %vm1931 = vcmp.gt.f32.partialorder %v1892, 0.0
  %vm1932 = vcmp.gt.f32.partialorder %v1896, 0.0
  %vm1933 = vcmp.gt.f32.partialorder %v1898, 0.0
  %vm1934 = vcmp.gt.f32.partialorder %v1900, 0.0
  %vm1935 = vcmp.gt.f32.partialorder %v1902, 0.0
  %v1936 = vmul.f32 %v1826, 0.01
  %v1937 = vmul.f32 %v1828, 0.01
  %v1938 = vmul.f32 %v1830, 0.01
  %v1939 = vmul.f32 %v1832, 0.01
  %v1940 = vmul.f32 %v1836, 0.01
  %v1941 = vmul.f32 %v1838, 0.01
  %v1942 = vmul.f32 %v1840, 0.01
  %v1943 = vmul.f32 %v1842, 0.01
  %v1944 = vmul.f32 %v1846, 0.01
  %v1945 = vmul.f32 %v1848, 0.01
  %v1946 = vmul.f32 %v1850, 0.01
  %v1947 = vmul.f32 %v1852, 0.01
  %v1948 = vmul.f32 %v1856, 0.01
  %v1949 = vmul.f32 %v1858, 0.01
  %v1950 = vmul.f32 %v1860, 0.01
  %v1951 = vmul.f32 %v1862, 0.01
  %v1952 = vmul.f32 %v1866, 0.01
  %v1953 = vmul.f32 %v1868, 0.01
  %v1954 = vmul.f32 %v1870, 0.01
  %v1955 = vmul.f32 %v1872, 0.01
  %v1956 = vmul.f32 %v1876, 0.01
  %v1957 = vmul.f32 %v1878, 0.01
  %v1958 = vmul.f32 %v1880, 0.01
  %v1959 = vmul.f32 %v1882, 0.01
  %v1960 = vmul.f32 %v1886, 0.01
  %v1961 = vmul.f32 %v1888, 0.01
  %v1962 = vmul.f32 %v1890, 0.01
  %v1963 = vmul.f32 %v1892, 0.01
  %v1964 = vmul.f32 %v1896, 0.01
  %v1965 = vmul.f32 %v1898, 0.01
  %v1966 = vmul.f32 %v1900, 0.01
  %v1967 = vmul.f32 %v1902, 0.01
  %v1968 = vsel %vm1904, %v1826, %v1936
  %v1969 = vsel %vm1905, %v1828, %v1937
  %v1970 = vsel %vm1906, %v1830, %v1938
  %v1971 = vsel %vm1907, %v1832, %v1939
  %v1972 = vsel %vm1908, %v1836, %v1940
  %v1973 = vsel %vm1909, %v1838, %v1941
  %v1974 = vsel %vm1910, %v1840, %v1942
  %v1975 = vsel %vm1911, %v1842, %v1943
  %v1976 = vsel %vm1912, %v1846, %v1944
  %v1977 = vsel %vm1913, %v1848, %v1945
  %v1978 = vsel %vm1914, %v1850, %v1946
  %v1979 = vsel %vm1915, %v1852, %v1947
  %v1980 = vsel %vm1916, %v1856, %v1948
  %v1981 = vsel %vm1917, %v1858, %v1949
  %v1982 = vsel %vm1918, %v1860, %v1950
  %v1983 = vsel %vm1919, %v1862, %v1951
  %v1984 = vsel %vm1920, %v1866, %v1952
  %v1985 = vsel %vm1921, %v1868, %v1953
  %v1986 = vsel %vm1922, %v1870, %v1954
  %v1987 = vsel %vm1923, %v1872, %v1955
  %v1988 = vsel %vm1924, %v1876, %v1956
  %v1989 = vsel %vm1925, %v1878, %v1957
  %v1990 = vsel %vm1926, %v1880, %v1958
  %v1991 = vsel %vm1927, %v1882, %v1959
  %v1992 = vsel %vm1928, %v1886, %v1960
  %v1993 = vsel %vm1929, %v1888, %v1961
  %v1994 = vsel %vm1930, %v1890, %v1962
  %v1995 = vsel %vm1931, %v1892, %v1963
  %v1996 = vsel %vm1932, %v1896, %v1964
  %v1997 = vsel %vm1933, %v1898, %v1965
  %v1998 = vsel %vm1934, %v1900, %v1966
  %v1999 = vsel %vm1935, %v1902, %v1967
  %v2000 = vpack.c.bf16 %v1970, %v1968
  %v2001 = vpack.c.bf16 %v1971, %v1969
  %v2002 = vpack.c.bf16 %v1974, %v1972
  %v2003 = vpack.c.bf16 %v1975, %v1973
  %v2004 = vpack.c.bf16 %v1978, %v1976
  %v2005 = vpack.c.bf16 %v1979, %v1977
  %v2006 = vpack.c.bf16 %v1982, %v1980
  %v2007 = vpack.c.bf16 %v1983, %v1981
  %v2008 = vpack.c.bf16 %v1986, %v1984
  %v2009 = vpack.c.bf16 %v1987, %v1985
  %v2010 = vpack.c.bf16 %v1990, %v1988
  %v2011 = vpack.c.bf16 %v1991, %v1989
  %v2012 = vpack.c.bf16 %v1994, %v1992
  %v2013 = vpack.c.bf16 %v1995, %v1993
  %v2014 = vpack.c.bf16 %v1998, %v1996
  %v2015 = vpack.c.bf16 %v1999, %v1997
  %v2032 = vunpack.c.l.b16 %v2000
  %v2033 = vunpack.c.l.b16 %v2001
  %v2034 = vunpack.c.h.b16 %v2000
  %v2035 = vunpack.c.h.b16 %v2001
  %v2036 = vunpack.c.l.b16 %v2002
  %v2037 = vunpack.c.l.b16 %v2003
  %v2038 = vunpack.c.h.b16 %v2002
  %v2039 = vunpack.c.h.b16 %v2003
  %v2040 = vunpack.c.l.b16 %v2004
  %v2041 = vunpack.c.l.b16 %v2005
  %v2042 = vunpack.c.h.b16 %v2004
  %v2043 = vunpack.c.h.b16 %v2005
  %v2044 = vunpack.c.l.b16 %v2006
  %v2045 = vunpack.c.l.b16 %v2007
  %v2046 = vunpack.c.h.b16 %v2006
  %v2047 = vunpack.c.h.b16 %v2007
  %v2048 = vunpack.c.l.b16 %v2008
  %v2049 = vunpack.c.l.b16 %v2009
  %v2050 = vunpack.c.h.b16 %v2008
  %v2051 = vunpack.c.h.b16 %v2009
  %v2052 = vunpack.c.l.b16 %v2010
  %v2053 = vunpack.c.l.b16 %v2011
  %v2054 = vunpack.c.h.b16 %v2010
  %v2055 = vunpack.c.h.b16 %v2011
  %v2056 = vunpack.c.l.b16 %v2012
  %v2057 = vunpack.c.l.b16 %v2013
  %v2058 = vunpack.c.h.b16 %v2012
  %v2059 = vunpack.c.h.b16 %v2013
  %v2060 = vunpack.c.l.b16 %v2014
  %v2061 = vunpack.c.l.b16 %v2015
  %v2062 = vunpack.c.h.b16 %v2014
  %v2063 = vunpack.c.h.b16 %v2015
  %v2064 = vpack.c.b16 %v2033, %v2032
  %v2065 = vpack.c.b16 %v2035, %v2034
  %v2066 = vpack.c.b16 %v2037, %v2036
  %v2067 = vpack.c.b16 %v2039, %v2038
  %v2068 = vpack.c.b16 %v2041, %v2040
  %v2069 = vpack.c.b16 %v2043, %v2042
  %v2070 = vpack.c.b16 %v2045, %v2044
  %v2071 = vpack.c.b16 %v2047, %v2046
  %v2072 = vpack.c.b16 %v2049, %v2048
  %v2073 = vpack.c.b16 %v2051, %v2050
  %v2074 = vpack.c.b16 %v2053, %v2052
  %v2075 = vpack.c.b16 %v2055, %v2054
  %v2076 = vpack.c.b16 %v2057, %v2056
  %v2077 = vpack.c.b16 %v2059, %v2058
  %v2078 = vpack.c.b16 %v2061, %v2060
  %v2079 = vpack.c.b16 %v2063, %v2062
  %2096 = vst [vmem:[%s3] sm:$0xff] %v2064
  %2097 = vst [vmem:[%s3 + $0x8] sm:$0xff] %v2065
  %2098 = vst [vmem:[%s3 + $0x10] sm:$0xff] %v2066
  %2099 = vst [vmem:[%s3 + $0x18] sm:$0xff] %v2067
  %2100 = vst [vmem:[%s3 + $0x20] sm:$0xff] %v2068
  %2101 = vst [vmem:[%s3 + $0x28] sm:$0xff] %v2069
  %2102 = vst [vmem:[%s3 + $0x30] sm:$0xff] %v2070
  %2103 = vst [vmem:[%s3 + $0x38] sm:$0xff] %v2071
  %2104 = vst [vmem:[%s3 + $0x40] sm:$0xff] %v2072
  %2105 = vst [vmem:[%s3 + $0x48] sm:$0xff] %v2073
  %2106 = vst [vmem:[%s3 + $0x50] sm:$0xff] %v2074
  %2107 = vst [vmem:[%s3 + $0x58] sm:$0xff] %v2075
  %2108 = vst [vmem:[%s3 + $0x60] sm:$0xff] %v2076
  %2109 = vst [vmem:[%s3 + $0x68] sm:$0xff] %v2077
  %2110 = vst [vmem:[%s3 + $0x70] sm:$0xff] %v2078
  %2111 = vst [vmem:[%s3 + $0x78] sm:$0xff] %v2079
  // Predicated region
  $region14: #{discriminator_forward.4} parent=0 // pred_check
    _
  $region15: #{discriminator_forward.4} parent=0 // pred_check_branch
    %2113 = sbr.rel (0) target = $region17
  $region16: #{discriminator_forward.4} parent=0 // pred_region
    _
  $region17: #{discriminator_forward.4} parent=0 // pred_fallthru
    _
  // Predicated region
  $region18: #{discriminator_forward.4} parent=0 // pred_check
    _
  $region19: #{discriminator_forward.4} parent=0 // pred_check_branch
    %2115 = sbr.rel (0) target = $region21
  $region20: #{discriminator_forward.4} parent=0 // pred_region
    _
  $region21: #{discriminator_forward.4} parent=0 // pred_fallthru
    _

// kernel: discriminator_forward.5
$region0: #{discriminator_forward.5}
  #allocation0 [shape = 'u32[]', space=smem, size = 0x4, offset = 0x4, fixed_abs, tag = 'smem constant byte address 0x4 - core index']
  #allocation1 [shape = 'u32[144,128]{1,0:T(1,128)}', space=vmem, size = 0x12000, scoped, tag = 'internal scratch']
  %s0 = inlined_call_operand.vmem [shape: bf16[32,2304], index: 0, kind: input, shape index: {}]
  %s1 = inlined_call_operand.vmem [shape: bf16[2304,512], index: 1, kind: input, shape index: {}]
  %s2 = inlined_call_operand.vmem [shape: f32[1,512], index: 2, kind: input, shape index: {}]
  %s3 = inlined_call_operand.vmem [shape: f32[32,512], index: 3, kind: input, shape index: {}]
  %s4 = inlined_call_operand.vmem [shape: f32[32,1], index: 4, kind: output, shape index: {}]
  %s5 = sld [smem:[#allocation0]]
  $region26: #{discriminator_forward.5} parent=0
    _
  %s7 = ssub.s32 1, %s5
  %s8 = scalar_select 0, %s7, %s5
  // Predicated region
  $region2: #{discriminator_forward.5} parent=0 // pred_check
    _
  $region3: #{discriminator_forward.5} parent=0 // pred_check_branch
    %10 = sbr.rel (0) target = $region5
  $region4: #{discriminator_forward.5} parent=0 // pred_region
    _
  $region5: #{discriminator_forward.5} parent=0 // pred_fallthru
    _
  // Predicated region
  $region6: #{discriminator_forward.5} parent=0 // pred_check
    _
  $region7: #{discriminator_forward.5} parent=0 // pred_check_branch
    %12 = sbr.rel (0) target = $region9
  $region8: #{discriminator_forward.5} parent=0 // pred_region
    _
  $region9: #{discriminator_forward.5} parent=0 // pred_fallthru
    _
  // Predicated region
  $region10: #{discriminator_forward.5} parent=0 // pred_check
    _
  $region11: #{discriminator_forward.5} parent=0 // pred_check_branch
    %14 = sbr.rel (0) target = $region13
  $region12: #{discriminator_forward.5} parent=0 // pred_region
    _
  $region13: #{discriminator_forward.5} parent=0 // pred_fallthru
    _
  // Predicated region
  $region14: #{discriminator_forward.5} parent=0 // pred_check
    _
  $region15: #{discriminator_forward.5} parent=0 // pred_check_branch
    %16 = sbr.rel (0) target = $region17
  $region16: #{discriminator_forward.5} parent=0 // pred_region
    _
  $region17: #{discriminator_forward.5} parent=0 // pred_fallthru
    _
  %v17 = vld [vmem:[%s0] sm:$0xff]
  %v18 = vld [vmem:[%s0 + $0x8] sm:$0xff]
  %v19 = vld [vmem:[%s0 + $0x10] sm:$0xff]
  %v20 = vld [vmem:[%s0 + $0x18] sm:$0xff]
  %v21 = vld [vmem:[%s0 + $0x20] sm:$0xff]
  %v22 = vld [vmem:[%s0 + $0x28] sm:$0xff]
  %v23 = vld [vmem:[%s0 + $0x30] sm:$0xff]
  %v24 = vld [vmem:[%s0 + $0x38] sm:$0xff]
  %v25 = vld [vmem:[%s0 + $0x40] sm:$0xff]
  %v26 = vld [vmem:[%s0 + $0x48] sm:$0xff]
  %v27 = vld [vmem:[%s0 + $0x50] sm:$0xff]
  %v28 = vld [vmem:[%s0 + $0x58] sm:$0xff]
  %v29 = vld [vmem:[%s0 + $0x60] sm:$0xff]
  %v30 = vld [vmem:[%s0 + $0x68] sm:$0xff]
  %v31 = vld [vmem:[%s0 + $0x70] sm:$0xff]
  %v32 = vld [vmem:[%s0 + $0x78] sm:$0xff]
  %v33 = vld [vmem:[%s0 + $0x80] sm:$0xff]
  %v34 = vld [vmem:[%s0 + $0x88] sm:$0xff]
  %v35 = vld [vmem:[%s0 + $0x90] sm:$0xff]
  %v36 = vld [vmem:[%s0 + $0x98] sm:$0xff]
  %v37 = vld [vmem:[%s0 + $0xa0] sm:$0xff]
  %v38 = vld [vmem:[%s0 + $0xa8] sm:$0xff]
  %v39 = vld [vmem:[%s0 + $0xb0] sm:$0xff]
  %v40 = vld [vmem:[%s0 + $0xb8] sm:$0xff]
  %v41 = vld [vmem:[%s0 + $0xc0] sm:$0xff]
  %v42 = vld [vmem:[%s0 + $0xc8] sm:$0xff]
  %v43 = vld [vmem:[%s0 + $0xd0] sm:$0xff]
  %v44 = vld [vmem:[%s0 + $0xd8] sm:$0xff]
  %v45 = vld [vmem:[%s0 + $0xe0] sm:$0xff]
  %v46 = vld [vmem:[%s0 + $0xe8] sm:$0xff]
  %v47 = vld [vmem:[%s0 + $0xf0] sm:$0xff]
  %v48 = vld [vmem:[%s0 + $0xf8] sm:$0xff]
  %v49 = vld [vmem:[%s0 + $0x100] sm:$0xff]
  %v50 = vld [vmem:[%s0 + $0x108] sm:$0xff]
  %v51 = vld [vmem:[%s0 + $0x110] sm:$0xff]
  %v52 = vld [vmem:[%s0 + $0x118] sm:$0xff]
  %v53 = vld [vmem:[%s1] sm:$0xff]
  %v54 = vld [vmem:[%s1 + $0x8] sm:$0xff]
  %v55 = vld [vmem:[%s1 + $0x10] sm:$0xff]
  %v56 = vld [vmem:[%s1 + $0x18] sm:$0xff]
  %v57 = vld [vmem:[%s1 + $0x20] sm:$0xff]
  %v58 = vld [vmem:[%s1 + $0x28] sm:$0xff]
  %v59 = vld [vmem:[%s1 + $0x30] sm:$0xff]
  %v60 = vld [vmem:[%s1 + $0x38] sm:$0xff]
  %v61 = vld [vmem:[%s1 + $0x40] sm:$0xff]
  %v62 = vld [vmem:[%s1 + $0x48] sm:$0xff]
  %v63 = vld [vmem:[%s1 + $0x50] sm:$0xff]
  %v64 = vld [vmem:[%s1 + $0x58] sm:$0xff]
  %v65 = vld [vmem:[%s1 + $0x60] sm:$0xff]
  %v66 = vld [vmem:[%s1 + $0x68] sm:$0xff]
  %v67 = vld [vmem:[%s1 + $0x70] sm:$0xff]
  %v68 = vld [vmem:[%s1 + $0x78] sm:$0xff]
  %v69 = vld [vmem:[%s1 + $0x80] sm:$0xff]
  %v70 = vld [vmem:[%s1 + $0x88] sm:$0xff]
  %v71 = vld [vmem:[%s1 + $0x90] sm:$0xff]
  %v72 = vld [vmem:[%s1 + $0x98] sm:$0xff]
  %v73 = vld [vmem:[%s1 + $0xa0] sm:$0xff]
  %v74 = vld [vmem:[%s1 + $0xa8] sm:$0xff]
  %v75 = vld [vmem:[%s1 + $0xb0] sm:$0xff]
  %v76 = vld [vmem:[%s1 + $0xb8] sm:$0xff]
  %v77 = vld [vmem:[%s1 + $0xc0] sm:$0xff]
  %v78 = vld [vmem:[%s1 + $0xc8] sm:$0xff]
  %v79 = vld [vmem:[%s1 + $0xd0] sm:$0xff]
  %v80 = vld [vmem:[%s1 + $0xd8] sm:$0xff]
  %v81 = vld [vmem:[%s1 + $0xe0] sm:$0xff]
  %v82 = vld [vmem:[%s1 + $0xe8] sm:$0xff]
  %v83 = vld [vmem:[%s1 + $0xf0] sm:$0xff]
  %v84 = vld [vmem:[%s1 + $0xf8] sm:$0xff]
  %v85 = vld [vmem:[%s1 + $0x100] sm:$0xff]
  %v86 = vld [vmem:[%s1 + $0x108] sm:$0xff]
  %v87 = vld [vmem:[%s1 + $0x110] sm:$0xff]
  %v88 = vld [vmem:[%s1 + $0x118] sm:$0xff]
  %v89 = vld [vmem:[%s1 + $0x120] sm:$0xff]
  %v90 = vld [vmem:[%s1 + $0x128] sm:$0xff]
  %v91 = vld [vmem:[%s1 + $0x130] sm:$0xff]
  %v92 = vld [vmem:[%s1 + $0x138] sm:$0xff]
  %v93 = vld [vmem:[%s1 + $0x140] sm:$0xff]
  %v94 = vld [vmem:[%s1 + $0x148] sm:$0xff]
  %v95 = vld [vmem:[%s1 + $0x150] sm:$0xff]
  %v96 = vld [vmem:[%s1 + $0x158] sm:$0xff]
  %v97 = vld [vmem:[%s1 + $0x160] sm:$0xff]
  %v98 = vld [vmem:[%s1 + $0x168] sm:$0xff]
  %v99 = vld [vmem:[%s1 + $0x170] sm:$0xff]
  %v100 = vld [vmem:[%s1 + $0x178] sm:$0xff]
  %v101 = vld [vmem:[%s1 + $0x180] sm:$0xff]
  %v102 = vld [vmem:[%s1 + $0x188] sm:$0xff]
  %v103 = vld [vmem:[%s1 + $0x190] sm:$0xff]
  %v104 = vld [vmem:[%s1 + $0x198] sm:$0xff]
  %v105 = vld [vmem:[%s1 + $0x1a0] sm:$0xff]
  %v106 = vld [vmem:[%s1 + $0x1a8] sm:$0xff]
  %v107 = vld [vmem:[%s1 + $0x1b0] sm:$0xff]
  %v108 = vld [vmem:[%s1 + $0x1b8] sm:$0xff]
  %v109 = vld [vmem:[%s1 + $0x1c0] sm:$0xff]
  %v110 = vld [vmem:[%s1 + $0x1c8] sm:$0xff]
  %v111 = vld [vmem:[%s1 + $0x1d0] sm:$0xff]
  %v112 = vld [vmem:[%s1 + $0x1d8] sm:$0xff]
  %v113 = vld [vmem:[%s1 + $0x1e0] sm:$0xff]
  %v114 = vld [vmem:[%s1 + $0x1e8] sm:$0xff]
  %v115 = vld [vmem:[%s1 + $0x1f0] sm:$0xff]
  %v116 = vld [vmem:[%s1 + $0x1f8] sm:$0xff]
  %v117 = vld [vmem:[%s1 + $0x200] sm:$0xff]
  %v118 = vld [vmem:[%s1 + $0x208] sm:$0xff]
  %v119 = vld [vmem:[%s1 + $0x210] sm:$0xff]
  %v120 = vld [vmem:[%s1 + $0x218] sm:$0xff]
  %v121 = vld [vmem:[%s1 + $0x220] sm:$0xff]
  %v122 = vld [vmem:[%s1 + $0x228] sm:$0xff]
  %v123 = vld [vmem:[%s1 + $0x230] sm:$0xff]
  %v124 = vld [vmem:[%s1 + $0x238] sm:$0xff]
  %v125 = vld [vmem:[%s1 + $0x240] sm:$0xff]
  %v126 = vld [vmem:[%s1 + $0x248] sm:$0xff]
  %v127 = vld [vmem:[%s1 + $0x250] sm:$0xff]
  %v128 = vld [vmem:[%s1 + $0x258] sm:$0xff]
  %v129 = vld [vmem:[%s1 + $0x260] sm:$0xff]
  %v130 = vld [vmem:[%s1 + $0x268] sm:$0xff]
  %v131 = vld [vmem:[%s1 + $0x270] sm:$0xff]
  %v132 = vld [vmem:[%s1 + $0x278] sm:$0xff]
  %v133 = vld [vmem:[%s1 + $0x280] sm:$0xff]
  %v134 = vld [vmem:[%s1 + $0x288] sm:$0xff]
  %v135 = vld [vmem:[%s1 + $0x290] sm:$0xff]
  %v136 = vld [vmem:[%s1 + $0x298] sm:$0xff]
  %v137 = vld [vmem:[%s1 + $0x2a0] sm:$0xff]
  %v138 = vld [vmem:[%s1 + $0x2a8] sm:$0xff]
  %v139 = vld [vmem:[%s1 + $0x2b0] sm:$0xff]
  %v140 = vld [vmem:[%s1 + $0x2b8] sm:$0xff]
  %v141 = vld [vmem:[%s1 + $0x2c0] sm:$0xff]
  %v142 = vld [vmem:[%s1 + $0x2c8] sm:$0xff]
  %v143 = vld [vmem:[%s1 + $0x2d0] sm:$0xff]
  %v144 = vld [vmem:[%s1 + $0x2d8] sm:$0xff]
  %v145 = vld [vmem:[%s1 + $0x2e0] sm:$0xff]
  %v146 = vld [vmem:[%s1 + $0x2e8] sm:$0xff]
  %v147 = vld [vmem:[%s1 + $0x2f0] sm:$0xff]
  %v148 = vld [vmem:[%s1 + $0x2f8] sm:$0xff]
  %v149 = vld [vmem:[%s1 + $0x300] sm:$0xff]
  %v150 = vld [vmem:[%s1 + $0x308] sm:$0xff]
  %v151 = vld [vmem:[%s1 + $0x310] sm:$0xff]
  %v152 = vld [vmem:[%s1 + $0x318] sm:$0xff]
  %v153 = vld [vmem:[%s1 + $0x320] sm:$0xff]
  %v154 = vld [vmem:[%s1 + $0x328] sm:$0xff]
  %v155 = vld [vmem:[%s1 + $0x330] sm:$0xff]
  %v156 = vld [vmem:[%s1 + $0x338] sm:$0xff]
  %v157 = vld [vmem:[%s1 + $0x340] sm:$0xff]
  %v158 = vld [vmem:[%s1 + $0x348] sm:$0xff]
  %v159 = vld [vmem:[%s1 + $0x350] sm:$0xff]
  %v160 = vld [vmem:[%s1 + $0x358] sm:$0xff]
  %v161 = vld [vmem:[%s1 + $0x360] sm:$0xff]
  %v162 = vld [vmem:[%s1 + $0x368] sm:$0xff]
  %v163 = vld [vmem:[%s1 + $0x370] sm:$0xff]
  %v164 = vld [vmem:[%s1 + $0x378] sm:$0xff]
  %v165 = vld [vmem:[%s1 + $0x380] sm:$0xff]
  %v166 = vld [vmem:[%s1 + $0x388] sm:$0xff]
  %v167 = vld [vmem:[%s1 + $0x390] sm:$0xff]
  %v168 = vld [vmem:[%s1 + $0x398] sm:$0xff]
  %v169 = vld [vmem:[%s1 + $0x3a0] sm:$0xff]
  %v170 = vld [vmem:[%s1 + $0x3a8] sm:$0xff]
  %v171 = vld [vmem:[%s1 + $0x3b0] sm:$0xff]
  %v172 = vld [vmem:[%s1 + $0x3b8] sm:$0xff]
  %v173 = vld [vmem:[%s1 + $0x3c0] sm:$0xff]
  %v174 = vld [vmem:[%s1 + $0x3c8] sm:$0xff]
  %v175 = vld [vmem:[%s1 + $0x3d0] sm:$0xff]
  %v176 = vld [vmem:[%s1 + $0x3d8] sm:$0xff]
  %v177 = vld [vmem:[%s1 + $0x3e0] sm:$0xff]
  %v178 = vld [vmem:[%s1 + $0x3e8] sm:$0xff]
  %v179 = vld [vmem:[%s1 + $0x3f0] sm:$0xff]
  %v180 = vld [vmem:[%s1 + $0x3f8] sm:$0xff]
  %v181 = vld [vmem:[%s1 + $0x400] sm:$0xff]
  %v182 = vld [vmem:[%s1 + $0x408] sm:$0xff]
  %v183 = vld [vmem:[%s1 + $0x410] sm:$0xff]
  %v184 = vld [vmem:[%s1 + $0x418] sm:$0xff]
  %v185 = vld [vmem:[%s1 + $0x420] sm:$0xff]
  %v186 = vld [vmem:[%s1 + $0x428] sm:$0xff]
  %v187 = vld [vmem:[%s1 + $0x430] sm:$0xff]
  %v188 = vld [vmem:[%s1 + $0x438] sm:$0xff]
  %v189 = vld [vmem:[%s1 + $0x440] sm:$0xff]
  %v190 = vld [vmem:[%s1 + $0x448] sm:$0xff]
  %v191 = vld [vmem:[%s1 + $0x450] sm:$0xff]
  %v192 = vld [vmem:[%s1 + $0x458] sm:$0xff]
  %v193 = vld [vmem:[%s1 + $0x460] sm:$0xff]
  %v194 = vld [vmem:[%s1 + $0x468] sm:$0xff]
  %v195 = vld [vmem:[%s1 + $0x470] sm:$0xff]
  %v196 = vld [vmem:[%s1 + $0x478] sm:$0xff]
  %v197 = vld [vmem:[%s1 + $0x480] sm:$0xff]
  %v198 = vld [vmem:[%s1 + $0x488] sm:$0xff]
  %v199 = vld [vmem:[%s1 + $0x490] sm:$0xff]
  %v200 = vld [vmem:[%s1 + $0x498] sm:$0xff]
  %v201 = vld [vmem:[%s1 + $0x4a0] sm:$0xff]
  %v202 = vld [vmem:[%s1 + $0x4a8] sm:$0xff]
  %v203 = vld [vmem:[%s1 + $0x4b0] sm:$0xff]
  %v204 = vld [vmem:[%s1 + $0x4b8] sm:$0xff]
  %v205 = vld [vmem:[%s1 + $0x4c0] sm:$0xff]
  %v206 = vld [vmem:[%s1 + $0x4c8] sm:$0xff]
  %v207 = vld [vmem:[%s1 + $0x4d0] sm:$0xff]
  %v208 = vld [vmem:[%s1 + $0x4d8] sm:$0xff]
  %v209 = vld [vmem:[%s1 + $0x4e0] sm:$0xff]
  %v210 = vld [vmem:[%s1 + $0x4e8] sm:$0xff]
  %v211 = vld [vmem:[%s1 + $0x4f0] sm:$0xff]
  %v212 = vld [vmem:[%s1 + $0x4f8] sm:$0xff]
  %v213 = vld [vmem:[%s1 + $0x500] sm:$0xff]
  %v214 = vld [vmem:[%s1 + $0x508] sm:$0xff]
  %v215 = vld [vmem:[%s1 + $0x510] sm:$0xff]
  %v216 = vld [vmem:[%s1 + $0x518] sm:$0xff]
  %v217 = vld [vmem:[%s1 + $0x520] sm:$0xff]
  %v218 = vld [vmem:[%s1 + $0x528] sm:$0xff]
  %v219 = vld [vmem:[%s1 + $0x530] sm:$0xff]
  %v220 = vld [vmem:[%s1 + $0x538] sm:$0xff]
  %v221 = vld [vmem:[%s1 + $0x540] sm:$0xff]
  %v222 = vld [vmem:[%s1 + $0x548] sm:$0xff]
  %v223 = vld [vmem:[%s1 + $0x550] sm:$0xff]
  %v224 = vld [vmem:[%s1 + $0x558] sm:$0xff]
  %v225 = vld [vmem:[%s1 + $0x560] sm:$0xff]
  %v226 = vld [vmem:[%s1 + $0x568] sm:$0xff]
  %v227 = vld [vmem:[%s1 + $0x570] sm:$0xff]
  %v228 = vld [vmem:[%s1 + $0x578] sm:$0xff]
  %v229 = vld [vmem:[%s1 + $0x580] sm:$0xff]
  %v230 = vld [vmem:[%s1 + $0x588] sm:$0xff]
  %v231 = vld [vmem:[%s1 + $0x590] sm:$0xff]
  %v232 = vld [vmem:[%s1 + $0x598] sm:$0xff]
  %v233 = vld [vmem:[%s1 + $0x5a0] sm:$0xff]
  %v234 = vld [vmem:[%s1 + $0x5a8] sm:$0xff]
  %v235 = vld [vmem:[%s1 + $0x5b0] sm:$0xff]
  %v236 = vld [vmem:[%s1 + $0x5b8] sm:$0xff]
  %v237 = vld [vmem:[%s1 + $0x5c0] sm:$0xff]
  %v238 = vld [vmem:[%s1 + $0x5c8] sm:$0xff]
  %v239 = vld [vmem:[%s1 + $0x5d0] sm:$0xff]
  %v240 = vld [vmem:[%s1 + $0x5d8] sm:$0xff]
  %v241 = vld [vmem:[%s1 + $0x5e0] sm:$0xff]
  %v242 = vld [vmem:[%s1 + $0x5e8] sm:$0xff]
  %v243 = vld [vmem:[%s1 + $0x5f0] sm:$0xff]
  %v244 = vld [vmem:[%s1 + $0x5f8] sm:$0xff]
  %v245 = vld [vmem:[%s1 + $0x600] sm:$0xff]
  %v246 = vld [vmem:[%s1 + $0x608] sm:$0xff]
  %v247 = vld [vmem:[%s1 + $0x610] sm:$0xff]
  %v248 = vld [vmem:[%s1 + $0x618] sm:$0xff]
  %v249 = vld [vmem:[%s1 + $0x620] sm:$0xff]
  %v250 = vld [vmem:[%s1 + $0x628] sm:$0xff]
  %v251 = vld [vmem:[%s1 + $0x630] sm:$0xff]
  %v252 = vld [vmem:[%s1 + $0x638] sm:$0xff]
  %v253 = vld [vmem:[%s1 + $0x640] sm:$0xff]
  %v254 = vld [vmem:[%s1 + $0x648] sm:$0xff]
  %v255 = vld [vmem:[%s1 + $0x650] sm:$0xff]
  %v256 = vld [vmem:[%s1 + $0x658] sm:$0xff]
  %v257 = vld [vmem:[%s1 + $0x660] sm:$0xff]
  %v258 = vld [vmem:[%s1 + $0x668] sm:$0xff]
  %v259 = vld [vmem:[%s1 + $0x670] sm:$0xff]
  %v260 = vld [vmem:[%s1 + $0x678] sm:$0xff]
  %v261 = vld [vmem:[%s1 + $0x680] sm:$0xff]
  %v262 = vld [vmem:[%s1 + $0x688] sm:$0xff]
  %v263 = vld [vmem:[%s1 + $0x690] sm:$0xff]
  %v264 = vld [vmem:[%s1 + $0x698] sm:$0xff]
  %v265 = vld [vmem:[%s1 + $0x6a0] sm:$0xff]
  %v266 = vld [vmem:[%s1 + $0x6a8] sm:$0xff]
  %v267 = vld [vmem:[%s1 + $0x6b0] sm:$0xff]
  %v268 = vld [vmem:[%s1 + $0x6b8] sm:$0xff]
  %v269 = vld [vmem:[%s1 + $0x6c0] sm:$0xff]
  %v270 = vld [vmem:[%s1 + $0x6c8] sm:$0xff]
  %v271 = vld [vmem:[%s1 + $0x6d0] sm:$0xff]
  %v272 = vld [vmem:[%s1 + $0x6d8] sm:$0xff]
  %v273 = vld [vmem:[%s1 + $0x6e0] sm:$0xff]
  %v274 = vld [vmem:[%s1 + $0x6e8] sm:$0xff]
  %v275 = vld [vmem:[%s1 + $0x6f0] sm:$0xff]
  %v276 = vld [vmem:[%s1 + $0x6f8] sm:$0xff]
  %v277 = vld [vmem:[%s1 + $0x700] sm:$0xff]
  %v278 = vld [vmem:[%s1 + $0x708] sm:$0xff]
  %v279 = vld [vmem:[%s1 + $0x710] sm:$0xff]
  %v280 = vld [vmem:[%s1 + $0x718] sm:$0xff]
  %v281 = vld [vmem:[%s1 + $0x720] sm:$0xff]
  %v282 = vld [vmem:[%s1 + $0x728] sm:$0xff]
  %v283 = vld [vmem:[%s1 + $0x730] sm:$0xff]
  %v284 = vld [vmem:[%s1 + $0x738] sm:$0xff]
  %v285 = vld [vmem:[%s1 + $0x740] sm:$0xff]
  %v286 = vld [vmem:[%s1 + $0x748] sm:$0xff]
  %v287 = vld [vmem:[%s1 + $0x750] sm:$0xff]
  %v288 = vld [vmem:[%s1 + $0x758] sm:$0xff]
  %v289 = vld [vmem:[%s1 + $0x760] sm:$0xff]
  %v290 = vld [vmem:[%s1 + $0x768] sm:$0xff]
  %v291 = vld [vmem:[%s1 + $0x770] sm:$0xff]
  %v292 = vld [vmem:[%s1 + $0x778] sm:$0xff]
  %v293 = vld [vmem:[%s1 + $0x780] sm:$0xff]
  %v294 = vld [vmem:[%s1 + $0x788] sm:$0xff]
  %v295 = vld [vmem:[%s1 + $0x790] sm:$0xff]
  %v296 = vld [vmem:[%s1 + $0x798] sm:$0xff]
  %v297 = vld [vmem:[%s1 + $0x7a0] sm:$0xff]
  %v298 = vld [vmem:[%s1 + $0x7a8] sm:$0xff]
  %v299 = vld [vmem:[%s1 + $0x7b0] sm:$0xff]
  %v300 = vld [vmem:[%s1 + $0x7b8] sm:$0xff]
  %v301 = vld [vmem:[%s1 + $0x7c0] sm:$0xff]
  %v302 = vld [vmem:[%s1 + $0x7c8] sm:$0xff]
  %v303 = vld [vmem:[%s1 + $0x7d0] sm:$0xff]
  %v304 = vld [vmem:[%s1 + $0x7d8] sm:$0xff]
  %v305 = vld [vmem:[%s1 + $0x7e0] sm:$0xff]
  %v306 = vld [vmem:[%s1 + $0x7e8] sm:$0xff]
  %v307 = vld [vmem:[%s1 + $0x7f0] sm:$0xff]
  %v308 = vld [vmem:[%s1 + $0x7f8] sm:$0xff]
  %v309 = vld [vmem:[%s1 + $0x800] sm:$0xff]
  %v310 = vld [vmem:[%s1 + $0x808] sm:$0xff]
  %v311 = vld [vmem:[%s1 + $0x810] sm:$0xff]
  %v312 = vld [vmem:[%s1 + $0x818] sm:$0xff]
  %v313 = vld [vmem:[%s1 + $0x820] sm:$0xff]
  %v314 = vld [vmem:[%s1 + $0x828] sm:$0xff]
  %v315 = vld [vmem:[%s1 + $0x830] sm:$0xff]
  %v316 = vld [vmem:[%s1 + $0x838] sm:$0xff]
  %v317 = vld [vmem:[%s1 + $0x840] sm:$0xff]
  %v318 = vld [vmem:[%s1 + $0x848] sm:$0xff]
  %v319 = vld [vmem:[%s1 + $0x850] sm:$0xff]
  %v320 = vld [vmem:[%s1 + $0x858] sm:$0xff]
  %v321 = vld [vmem:[%s1 + $0x860] sm:$0xff]
  %v322 = vld [vmem:[%s1 + $0x868] sm:$0xff]
  %v323 = vld [vmem:[%s1 + $0x870] sm:$0xff]
  %v324 = vld [vmem:[%s1 + $0x878] sm:$0xff]
  %v325 = vld [vmem:[%s1 + $0x880] sm:$0xff]
  %v326 = vld [vmem:[%s1 + $0x888] sm:$0xff]
  %v327 = vld [vmem:[%s1 + $0x890] sm:$0xff]
  %v328 = vld [vmem:[%s1 + $0x898] sm:$0xff]
  %v329 = vld [vmem:[%s1 + $0x8a0] sm:$0xff]
  %v330 = vld [vmem:[%s1 + $0x8a8] sm:$0xff]
  %v331 = vld [vmem:[%s1 + $0x8b0] sm:$0xff]
  %v332 = vld [vmem:[%s1 + $0x8b8] sm:$0xff]
  %v333 = vld [vmem:[%s1 + $0x8c0] sm:$0xff]
  %v334 = vld [vmem:[%s1 + $0x8c8] sm:$0xff]
  %v335 = vld [vmem:[%s1 + $0x8d0] sm:$0xff]
  %v336 = vld [vmem:[%s1 + $0x8d8] sm:$0xff]
  %v337 = vld [vmem:[%s1 + $0x8e0] sm:$0xff]
  %v338 = vld [vmem:[%s1 + $0x8e8] sm:$0xff]
  %v339 = vld [vmem:[%s1 + $0x8f0] sm:$0xff]
  %v340 = vld [vmem:[%s1 + $0x8f8] sm:$0xff]
  %v341 = vld [vmem:[%s1 + $0x900] sm:$0xff]
  %v342 = vld [vmem:[%s1 + $0x908] sm:$0xff]
  %v343 = vld [vmem:[%s1 + $0x910] sm:$0xff]
  %v344 = vld [vmem:[%s1 + $0x918] sm:$0xff]
  %v345 = vld [vmem:[%s1 + $0x920] sm:$0xff]
  %v346 = vld [vmem:[%s1 + $0x928] sm:$0xff]
  %v347 = vld [vmem:[%s1 + $0x930] sm:$0xff]
  %v348 = vld [vmem:[%s1 + $0x938] sm:$0xff]
  %v349 = vld [vmem:[%s1 + $0x940] sm:$0xff]
  %v350 = vld [vmem:[%s1 + $0x948] sm:$0xff]
  %v351 = vld [vmem:[%s1 + $0x950] sm:$0xff]
  %v352 = vld [vmem:[%s1 + $0x958] sm:$0xff]
  %v353 = vld [vmem:[%s1 + $0x960] sm:$0xff]
  %v354 = vld [vmem:[%s1 + $0x968] sm:$0xff]
  %v355 = vld [vmem:[%s1 + $0x970] sm:$0xff]
  %v356 = vld [vmem:[%s1 + $0x978] sm:$0xff]
  %v357 = vld [vmem:[%s1 + $0x980] sm:$0xff]
  %v358 = vld [vmem:[%s1 + $0x988] sm:$0xff]
  %v359 = vld [vmem:[%s1 + $0x990] sm:$0xff]
  %v360 = vld [vmem:[%s1 + $0x998] sm:$0xff]
  %v361 = vld [vmem:[%s1 + $0x9a0] sm:$0xff]
  %v362 = vld [vmem:[%s1 + $0x9a8] sm:$0xff]
  %v363 = vld [vmem:[%s1 + $0x9b0] sm:$0xff]
  %v364 = vld [vmem:[%s1 + $0x9b8] sm:$0xff]
  %v365 = vld [vmem:[%s1 + $0x9c0] sm:$0xff]
  %v366 = vld [vmem:[%s1 + $0x9c8] sm:$0xff]
  %v367 = vld [vmem:[%s1 + $0x9d0] sm:$0xff]
  %v368 = vld [vmem:[%s1 + $0x9d8] sm:$0xff]
  %v369 = vld [vmem:[%s1 + $0x9e0] sm:$0xff]
  %v370 = vld [vmem:[%s1 + $0x9e8] sm:$0xff]
  %v371 = vld [vmem:[%s1 + $0x9f0] sm:$0xff]
  %v372 = vld [vmem:[%s1 + $0x9f8] sm:$0xff]
  %v373 = vld [vmem:[%s1 + $0xa00] sm:$0xff]
  %v374 = vld [vmem:[%s1 + $0xa08] sm:$0xff]
  %v375 = vld [vmem:[%s1 + $0xa10] sm:$0xff]
  %v376 = vld [vmem:[%s1 + $0xa18] sm:$0xff]
  %v377 = vld [vmem:[%s1 + $0xa20] sm:$0xff]
  %v378 = vld [vmem:[%s1 + $0xa28] sm:$0xff]
  %v379 = vld [vmem:[%s1 + $0xa30] sm:$0xff]
  %v380 = vld [vmem:[%s1 + $0xa38] sm:$0xff]
  %v381 = vld [vmem:[%s1 + $0xa40] sm:$0xff]
  %v382 = vld [vmem:[%s1 + $0xa48] sm:$0xff]
  %v383 = vld [vmem:[%s1 + $0xa50] sm:$0xff]
  %v384 = vld [vmem:[%s1 + $0xa58] sm:$0xff]
  %v385 = vld [vmem:[%s1 + $0xa60] sm:$0xff]
  %v386 = vld [vmem:[%s1 + $0xa68] sm:$0xff]
  %v387 = vld [vmem:[%s1 + $0xa70] sm:$0xff]
  %v388 = vld [vmem:[%s1 + $0xa78] sm:$0xff]
  %v389 = vld [vmem:[%s1 + $0xa80] sm:$0xff]
  %v390 = vld [vmem:[%s1 + $0xa88] sm:$0xff]
  %v391 = vld [vmem:[%s1 + $0xa90] sm:$0xff]
  %v392 = vld [vmem:[%s1 + $0xa98] sm:$0xff]
  %v393 = vld [vmem:[%s1 + $0xaa0] sm:$0xff]
  %v394 = vld [vmem:[%s1 + $0xaa8] sm:$0xff]
  %v395 = vld [vmem:[%s1 + $0xab0] sm:$0xff]
  %v396 = vld [vmem:[%s1 + $0xab8] sm:$0xff]
  %v397 = vld [vmem:[%s1 + $0xac0] sm:$0xff]
  %v398 = vld [vmem:[%s1 + $0xac8] sm:$0xff]
  %v399 = vld [vmem:[%s1 + $0xad0] sm:$0xff]
  %v400 = vld [vmem:[%s1 + $0xad8] sm:$0xff]
  %v401 = vld [vmem:[%s1 + $0xae0] sm:$0xff]
  %v402 = vld [vmem:[%s1 + $0xae8] sm:$0xff]
  %v403 = vld [vmem:[%s1 + $0xaf0] sm:$0xff]
  %v404 = vld [vmem:[%s1 + $0xaf8] sm:$0xff]
  %v405 = vld [vmem:[%s1 + $0xb00] sm:$0xff]
  %v406 = vld [vmem:[%s1 + $0xb08] sm:$0xff]
  %v407 = vld [vmem:[%s1 + $0xb10] sm:$0xff]
  %v408 = vld [vmem:[%s1 + $0xb18] sm:$0xff]
  %v409 = vld [vmem:[%s1 + $0xb20] sm:$0xff]
  %v410 = vld [vmem:[%s1 + $0xb28] sm:$0xff]
  %v411 = vld [vmem:[%s1 + $0xb30] sm:$0xff]
  %v412 = vld [vmem:[%s1 + $0xb38] sm:$0xff]
  %v413 = vld [vmem:[%s1 + $0xb40] sm:$0xff]
  %v414 = vld [vmem:[%s1 + $0xb48] sm:$0xff]
  %v415 = vld [vmem:[%s1 + $0xb50] sm:$0xff]
  %v416 = vld [vmem:[%s1 + $0xb58] sm:$0xff]
  %v417 = vld [vmem:[%s1 + $0xb60] sm:$0xff]
  %v418 = vld [vmem:[%s1 + $0xb68] sm:$0xff]
  %v419 = vld [vmem:[%s1 + $0xb70] sm:$0xff]
  %v420 = vld [vmem:[%s1 + $0xb78] sm:$0xff]
  %v421 = vld [vmem:[%s1 + $0xb80] sm:$0xff]
  %v422 = vld [vmem:[%s1 + $0xb88] sm:$0xff]
  %v423 = vld [vmem:[%s1 + $0xb90] sm:$0xff]
  %v424 = vld [vmem:[%s1 + $0xb98] sm:$0xff]
  %v425 = vld [vmem:[%s1 + $0xba0] sm:$0xff]
  %v426 = vld [vmem:[%s1 + $0xba8] sm:$0xff]
  %v427 = vld [vmem:[%s1 + $0xbb0] sm:$0xff]
  %v428 = vld [vmem:[%s1 + $0xbb8] sm:$0xff]
  %v429 = vld [vmem:[%s1 + $0xbc0] sm:$0xff]
  %v430 = vld [vmem:[%s1 + $0xbc8] sm:$0xff]
  %v431 = vld [vmem:[%s1 + $0xbd0] sm:$0xff]
  %v432 = vld [vmem:[%s1 + $0xbd8] sm:$0xff]
  %v433 = vld [vmem:[%s1 + $0xbe0] sm:$0xff]
  %v434 = vld [vmem:[%s1 + $0xbe8] sm:$0xff]
  %v435 = vld [vmem:[%s1 + $0xbf0] sm:$0xff]
  %v436 = vld [vmem:[%s1 + $0xbf8] sm:$0xff]
  %v437 = vld [vmem:[%s1 + $0xc00] sm:$0xff]
  %v438 = vld [vmem:[%s1 + $0xc08] sm:$0xff]
  %v439 = vld [vmem:[%s1 + $0xc10] sm:$0xff]
  %v440 = vld [vmem:[%s1 + $0xc18] sm:$0xff]
  %v441 = vld [vmem:[%s1 + $0xc20] sm:$0xff]
  %v442 = vld [vmem:[%s1 + $0xc28] sm:$0xff]
  %v443 = vld [vmem:[%s1 + $0xc30] sm:$0xff]
  %v444 = vld [vmem:[%s1 + $0xc38] sm:$0xff]
  %v445 = vld [vmem:[%s1 + $0xc40] sm:$0xff]
  %v446 = vld [vmem:[%s1 + $0xc48] sm:$0xff]
  %v447 = vld [vmem:[%s1 + $0xc50] sm:$0xff]
  %v448 = vld [vmem:[%s1 + $0xc58] sm:$0xff]
  %v449 = vld [vmem:[%s1 + $0xc60] sm:$0xff]
  %v450 = vld [vmem:[%s1 + $0xc68] sm:$0xff]
  %v451 = vld [vmem:[%s1 + $0xc70] sm:$0xff]
  %v452 = vld [vmem:[%s1 + $0xc78] sm:$0xff]
  %v453 = vld [vmem:[%s1 + $0xc80] sm:$0xff]
  %v454 = vld [vmem:[%s1 + $0xc88] sm:$0xff]
  %v455 = vld [vmem:[%s1 + $0xc90] sm:$0xff]
  %v456 = vld [vmem:[%s1 + $0xc98] sm:$0xff]
  %v457 = vld [vmem:[%s1 + $0xca0] sm:$0xff]
  %v458 = vld [vmem:[%s1 + $0xca8] sm:$0xff]
  %v459 = vld [vmem:[%s1 + $0xcb0] sm:$0xff]
  %v460 = vld [vmem:[%s1 + $0xcb8] sm:$0xff]
  %v461 = vld [vmem:[%s1 + $0xcc0] sm:$0xff]
  %v462 = vld [vmem:[%s1 + $0xcc8] sm:$0xff]
  %v463 = vld [vmem:[%s1 + $0xcd0] sm:$0xff]
  %v464 = vld [vmem:[%s1 + $0xcd8] sm:$0xff]
  %v465 = vld [vmem:[%s1 + $0xce0] sm:$0xff]
  %v466 = vld [vmem:[%s1 + $0xce8] sm:$0xff]
  %v467 = vld [vmem:[%s1 + $0xcf0] sm:$0xff]
  %v468 = vld [vmem:[%s1 + $0xcf8] sm:$0xff]
  %v469 = vld [vmem:[%s1 + $0xd00] sm:$0xff]
  %v470 = vld [vmem:[%s1 + $0xd08] sm:$0xff]
  %v471 = vld [vmem:[%s1 + $0xd10] sm:$0xff]
  %v472 = vld [vmem:[%s1 + $0xd18] sm:$0xff]
  %v473 = vld [vmem:[%s1 + $0xd20] sm:$0xff]
  %v474 = vld [vmem:[%s1 + $0xd28] sm:$0xff]
  %v475 = vld [vmem:[%s1 + $0xd30] sm:$0xff]
  %v476 = vld [vmem:[%s1 + $0xd38] sm:$0xff]
  %v477 = vld [vmem:[%s1 + $0xd40] sm:$0xff]
  %v478 = vld [vmem:[%s1 + $0xd48] sm:$0xff]
  %v479 = vld [vmem:[%s1 + $0xd50] sm:$0xff]
  %v480 = vld [vmem:[%s1 + $0xd58] sm:$0xff]
  %v481 = vld [vmem:[%s1 + $0xd60] sm:$0xff]
  %v482 = vld [vmem:[%s1 + $0xd68] sm:$0xff]
  %v483 = vld [vmem:[%s1 + $0xd70] sm:$0xff]
  %v484 = vld [vmem:[%s1 + $0xd78] sm:$0xff]
  %v485 = vld [vmem:[%s1 + $0xd80] sm:$0xff]
  %v486 = vld [vmem:[%s1 + $0xd88] sm:$0xff]
  %v487 = vld [vmem:[%s1 + $0xd90] sm:$0xff]
  %v488 = vld [vmem:[%s1 + $0xd98] sm:$0xff]
  %v489 = vld [vmem:[%s1 + $0xda0] sm:$0xff]
  %v490 = vld [vmem:[%s1 + $0xda8] sm:$0xff]
  %v491 = vld [vmem:[%s1 + $0xdb0] sm:$0xff]
  %v492 = vld [vmem:[%s1 + $0xdb8] sm:$0xff]
  %v493 = vld [vmem:[%s1 + $0xdc0] sm:$0xff]
  %v494 = vld [vmem:[%s1 + $0xdc8] sm:$0xff]
  %v495 = vld [vmem:[%s1 + $0xdd0] sm:$0xff]
  %v496 = vld [vmem:[%s1 + $0xdd8] sm:$0xff]
  %v497 = vld [vmem:[%s1 + $0xde0] sm:$0xff]
  %v498 = vld [vmem:[%s1 + $0xde8] sm:$0xff]
  %v499 = vld [vmem:[%s1 + $0xdf0] sm:$0xff]
  %v500 = vld [vmem:[%s1 + $0xdf8] sm:$0xff]
  %v501 = vld [vmem:[%s1 + $0xe00] sm:$0xff]
  %v502 = vld [vmem:[%s1 + $0xe08] sm:$0xff]
  %v503 = vld [vmem:[%s1 + $0xe10] sm:$0xff]
  %v504 = vld [vmem:[%s1 + $0xe18] sm:$0xff]
  %v505 = vld [vmem:[%s1 + $0xe20] sm:$0xff]
  %v506 = vld [vmem:[%s1 + $0xe28] sm:$0xff]
  %v507 = vld [vmem:[%s1 + $0xe30] sm:$0xff]
  %v508 = vld [vmem:[%s1 + $0xe38] sm:$0xff]
  %v509 = vld [vmem:[%s1 + $0xe40] sm:$0xff]
  %v510 = vld [vmem:[%s1 + $0xe48] sm:$0xff]
  %v511 = vld [vmem:[%s1 + $0xe50] sm:$0xff]
  %v512 = vld [vmem:[%s1 + $0xe58] sm:$0xff]
  %v513 = vld [vmem:[%s1 + $0xe60] sm:$0xff]
  %v514 = vld [vmem:[%s1 + $0xe68] sm:$0xff]
  %v515 = vld [vmem:[%s1 + $0xe70] sm:$0xff]
  %v516 = vld [vmem:[%s1 + $0xe78] sm:$0xff]
  %v517 = vld [vmem:[%s1 + $0xe80] sm:$0xff]
  %v518 = vld [vmem:[%s1 + $0xe88] sm:$0xff]
  %v519 = vld [vmem:[%s1 + $0xe90] sm:$0xff]
  %v520 = vld [vmem:[%s1 + $0xe98] sm:$0xff]
  %v521 = vld [vmem:[%s1 + $0xea0] sm:$0xff]
  %v522 = vld [vmem:[%s1 + $0xea8] sm:$0xff]
  %v523 = vld [vmem:[%s1 + $0xeb0] sm:$0xff]
  %v524 = vld [vmem:[%s1 + $0xeb8] sm:$0xff]
  %v525 = vld [vmem:[%s1 + $0xec0] sm:$0xff]
  %v526 = vld [vmem:[%s1 + $0xec8] sm:$0xff]
  %v527 = vld [vmem:[%s1 + $0xed0] sm:$0xff]
  %v528 = vld [vmem:[%s1 + $0xed8] sm:$0xff]
  %v529 = vld [vmem:[%s1 + $0xee0] sm:$0xff]
  %v530 = vld [vmem:[%s1 + $0xee8] sm:$0xff]
  %v531 = vld [vmem:[%s1 + $0xef0] sm:$0xff]
  %v532 = vld [vmem:[%s1 + $0xef8] sm:$0xff]
  %v533 = vld [vmem:[%s1 + $0xf00] sm:$0xff]
  %v534 = vld [vmem:[%s1 + $0xf08] sm:$0xff]
  %v535 = vld [vmem:[%s1 + $0xf10] sm:$0xff]
  %v536 = vld [vmem:[%s1 + $0xf18] sm:$0xff]
  %v537 = vld [vmem:[%s1 + $0xf20] sm:$0xff]
  %v538 = vld [vmem:[%s1 + $0xf28] sm:$0xff]
  %v539 = vld [vmem:[%s1 + $0xf30] sm:$0xff]
  %v540 = vld [vmem:[%s1 + $0xf38] sm:$0xff]
  %v541 = vld [vmem:[%s1 + $0xf40] sm:$0xff]
  %v542 = vld [vmem:[%s1 + $0xf48] sm:$0xff]
  %v543 = vld [vmem:[%s1 + $0xf50] sm:$0xff]
  %v544 = vld [vmem:[%s1 + $0xf58] sm:$0xff]
  %v545 = vld [vmem:[%s1 + $0xf60] sm:$0xff]
  %v546 = vld [vmem:[%s1 + $0xf68] sm:$0xff]
  %v547 = vld [vmem:[%s1 + $0xf70] sm:$0xff]
  %v548 = vld [vmem:[%s1 + $0xf78] sm:$0xff]
  %v549 = vld [vmem:[%s1 + $0xf80] sm:$0xff]
  %v550 = vld [vmem:[%s1 + $0xf88] sm:$0xff]
  %v551 = vld [vmem:[%s1 + $0xf90] sm:$0xff]
  %v552 = vld [vmem:[%s1 + $0xf98] sm:$0xff]
  %v553 = vld [vmem:[%s1 + $0xfa0] sm:$0xff]
  %v554 = vld [vmem:[%s1 + $0xfa8] sm:$0xff]
  %v555 = vld [vmem:[%s1 + $0xfb0] sm:$0xff]
  %v556 = vld [vmem:[%s1 + $0xfb8] sm:$0xff]
  %v557 = vld [vmem:[%s1 + $0xfc0] sm:$0xff]
  %v558 = vld [vmem:[%s1 + $0xfc8] sm:$0xff]
  %v559 = vld [vmem:[%s1 + $0xfd0] sm:$0xff]
  %v560 = vld [vmem:[%s1 + $0xfd8] sm:$0xff]
  %v561 = vld [vmem:[%s1 + $0xfe0] sm:$0xff]
  %v562 = vld [vmem:[%s1 + $0xfe8] sm:$0xff]
  %v563 = vld [vmem:[%s1 + $0xff0] sm:$0xff]
  %v564 = vld [vmem:[%s1 + $0xff8] sm:$0xff]
  %v565 = vld [vmem:[%s1 + $0x1000] sm:$0xff]
  %v566 = vld [vmem:[%s1 + $0x1008] sm:$0xff]
  %v567 = vld [vmem:[%s1 + $0x1010] sm:$0xff]
  %v568 = vld [vmem:[%s1 + $0x1018] sm:$0xff]
  %v569 = vld [vmem:[%s1 + $0x1020] sm:$0xff]
  %v570 = vld [vmem:[%s1 + $0x1028] sm:$0xff]
  %v571 = vld [vmem:[%s1 + $0x1030] sm:$0xff]
  %v572 = vld [vmem:[%s1 + $0x1038] sm:$0xff]
  %v573 = vld [vmem:[%s1 + $0x1040] sm:$0xff]
  %v574 = vld [vmem:[%s1 + $0x1048] sm:$0xff]
  %v575 = vld [vmem:[%s1 + $0x1050] sm:$0xff]
  %v576 = vld [vmem:[%s1 + $0x1058] sm:$0xff]
  %v577 = vld [vmem:[%s1 + $0x1060] sm:$0xff]
  %v578 = vld [vmem:[%s1 + $0x1068] sm:$0xff]
  %v579 = vld [vmem:[%s1 + $0x1070] sm:$0xff]
  %v580 = vld [vmem:[%s1 + $0x1078] sm:$0xff]
  %v581 = vld [vmem:[%s1 + $0x1080] sm:$0xff]
  %v582 = vld [vmem:[%s1 + $0x1088] sm:$0xff]
  %v583 = vld [vmem:[%s1 + $0x1090] sm:$0xff]
  %v584 = vld [vmem:[%s1 + $0x1098] sm:$0xff]
  %v585 = vld [vmem:[%s1 + $0x10a0] sm:$0xff]
  %v586 = vld [vmem:[%s1 + $0x10a8] sm:$0xff]
  %v587 = vld [vmem:[%s1 + $0x10b0] sm:$0xff]
  %v588 = vld [vmem:[%s1 + $0x10b8] sm:$0xff]
  %v589 = vld [vmem:[%s1 + $0x10c0] sm:$0xff]
  %v590 = vld [vmem:[%s1 + $0x10c8] sm:$0xff]
  %v591 = vld [vmem:[%s1 + $0x10d0] sm:$0xff]
  %v592 = vld [vmem:[%s1 + $0x10d8] sm:$0xff]
  %v593 = vld [vmem:[%s1 + $0x10e0] sm:$0xff]
  %v594 = vld [vmem:[%s1 + $0x10e8] sm:$0xff]
  %v595 = vld [vmem:[%s1 + $0x10f0] sm:$0xff]
  %v596 = vld [vmem:[%s1 + $0x10f8] sm:$0xff]
  %v597 = vld [vmem:[%s1 + $0x1100] sm:$0xff]
  %v598 = vld [vmem:[%s1 + $0x1108] sm:$0xff]
  %v599 = vld [vmem:[%s1 + $0x1110] sm:$0xff]
  %v600 = vld [vmem:[%s1 + $0x1118] sm:$0xff]
  %v601 = vld [vmem:[%s1 + $0x1120] sm:$0xff]
  %v602 = vld [vmem:[%s1 + $0x1128] sm:$0xff]
  %v603 = vld [vmem:[%s1 + $0x1130] sm:$0xff]
  %v604 = vld [vmem:[%s1 + $0x1138] sm:$0xff]
  %v605 = vld [vmem:[%s1 + $0x1140] sm:$0xff]
  %v606 = vld [vmem:[%s1 + $0x1148] sm:$0xff]
  %v607 = vld [vmem:[%s1 + $0x1150] sm:$0xff]
  %v608 = vld [vmem:[%s1 + $0x1158] sm:$0xff]
  %v609 = vld [vmem:[%s1 + $0x1160] sm:$0xff]
  %v610 = vld [vmem:[%s1 + $0x1168] sm:$0xff]
  %v611 = vld [vmem:[%s1 + $0x1170] sm:$0xff]
  %v612 = vld [vmem:[%s1 + $0x1178] sm:$0xff]
  %v613 = vld [vmem:[%s1 + $0x1180] sm:$0xff]
  %v614 = vld [vmem:[%s1 + $0x1188] sm:$0xff]
  %v615 = vld [vmem:[%s1 + $0x1190] sm:$0xff]
  %v616 = vld [vmem:[%s1 + $0x1198] sm:$0xff]
  %v617 = vld [vmem:[%s1 + $0x11a0] sm:$0xff]
  %v618 = vld [vmem:[%s1 + $0x11a8] sm:$0xff]
  %v619 = vld [vmem:[%s1 + $0x11b0] sm:$0xff]
  %v620 = vld [vmem:[%s1 + $0x11b8] sm:$0xff]
  %v621 = vld [vmem:[%s1 + $0x11c0] sm:$0xff]
  %v622 = vld [vmem:[%s1 + $0x11c8] sm:$0xff]
  %v623 = vld [vmem:[%s1 + $0x11d0] sm:$0xff]
  %v624 = vld [vmem:[%s1 + $0x11d8] sm:$0xff]
  %v625 = vld [vmem:[%s1 + $0x11e0] sm:$0xff]
  %v626 = vld [vmem:[%s1 + $0x11e8] sm:$0xff]
  %v627 = vld [vmem:[%s1 + $0x11f0] sm:$0xff]
  %v628 = vld [vmem:[%s1 + $0x11f8] sm:$0xff]
  %v629 = vld [vmem:[%s2] sm:$0xf]
  %v631 = vlaneseq
  %v632 = vshrl.u32 %v631, 7
  %v633 = vsub.s32 0, %v632
  %v634 = vrot.slane %v629, %v633
  %v635 = vlaneseq
  %v636 = vshrl.u32 %v635, 7
  %v637 = vsub.s32 1, %v636
  %v638 = vrot.slane %v629, %v637
  %v639 = vlaneseq
  %v640 = vshrl.u32 %v639, 7
  %v641 = vsub.s32 2, %v640
  %v642 = vrot.slane %v629, %v641
  %v643 = vlaneseq
  %v644 = vshrl.u32 %v643, 7
  %v645 = vsub.s32 3, %v644
  %v646 = vrot.slane %v629, %v645
  %v687 = vunpack.c.l.b16 %v17
  %v688 = vunpack.c.h.b16 %v17
  %v689 = vunpack.c.l.b16 %v18
  %v690 = vunpack.c.h.b16 %v18
  %v691 = vunpack.c.l.b16 %v19
  %v692 = vunpack.c.h.b16 %v19
  %v693 = vunpack.c.l.b16 %v20
  %v694 = vunpack.c.h.b16 %v20
  %v695 = vunpack.c.l.b16 %v21
  %v696 = vunpack.c.h.b16 %v21
  %v697 = vunpack.c.l.b16 %v22
  %v698 = vunpack.c.h.b16 %v22
  %v699 = vunpack.c.l.b16 %v23
  %v700 = vunpack.c.h.b16 %v23
  %v701 = vunpack.c.l.b16 %v24
  %v702 = vunpack.c.h.b16 %v24
  %v703 = vunpack.c.l.b16 %v25
  %v704 = vunpack.c.h.b16 %v25
  %v705 = vunpack.c.l.b16 %v26
  %v706 = vunpack.c.h.b16 %v26
  %v707 = vunpack.c.l.b16 %v27
  %v708 = vunpack.c.h.b16 %v27
  %v709 = vunpack.c.l.b16 %v28
  %v710 = vunpack.c.h.b16 %v28
  %v711 = vunpack.c.l.b16 %v29
  %v712 = vunpack.c.h.b16 %v29
  %v713 = vunpack.c.l.b16 %v30
  %v714 = vunpack.c.h.b16 %v30
  %v715 = vunpack.c.l.b16 %v31
  %v716 = vunpack.c.h.b16 %v31
  %v717 = vunpack.c.l.b16 %v32
  %v718 = vunpack.c.h.b16 %v32
  %v719 = vunpack.c.l.b16 %v33
  %v720 = vunpack.c.h.b16 %v33
  %v721 = vunpack.c.l.b16 %v34
  %v722 = vunpack.c.h.b16 %v34
  %v723 = vunpack.c.l.b16 %v35
  %v724 = vunpack.c.h.b16 %v35
  %v725 = vunpack.c.l.b16 %v36
  %v726 = vunpack.c.h.b16 %v36
  %v727 = vunpack.c.l.b16 %v37
  %v728 = vunpack.c.h.b16 %v37
  %v729 = vunpack.c.l.b16 %v38
  %v730 = vunpack.c.h.b16 %v38
  %v731 = vunpack.c.l.b16 %v39
  %v732 = vunpack.c.h.b16 %v39
  %v733 = vunpack.c.l.b16 %v40
  %v734 = vunpack.c.h.b16 %v40
  %v735 = vunpack.c.l.b16 %v41
  %v736 = vunpack.c.h.b16 %v41
  %v737 = vunpack.c.l.b16 %v42
  %v738 = vunpack.c.h.b16 %v42
  %v739 = vunpack.c.l.b16 %v43
  %v740 = vunpack.c.h.b16 %v43
  %v741 = vunpack.c.l.b16 %v44
  %v742 = vunpack.c.h.b16 %v44
  %v743 = vunpack.c.l.b16 %v45
  %v744 = vunpack.c.h.b16 %v45
  %v745 = vunpack.c.l.b16 %v46
  %v746 = vunpack.c.h.b16 %v46
  %v747 = vunpack.c.l.b16 %v47
  %v748 = vunpack.c.h.b16 %v47
  %v749 = vunpack.c.l.b16 %v48
  %v750 = vunpack.c.h.b16 %v48
  %v751 = vunpack.c.l.b16 %v49
  %v752 = vunpack.c.h.b16 %v49
  %v753 = vunpack.c.l.b16 %v50
  %v754 = vunpack.c.h.b16 %v50
  %v755 = vunpack.c.l.b16 %v51
  %v756 = vunpack.c.h.b16 %v51
  %v757 = vunpack.c.l.b16 %v52
  %v758 = vunpack.c.h.b16 %v52
  %v759 = vpack.c.b16 %v705, %v687
  %v760 = vpack.c.b16 %v706, %v688
  %v761 = vpack.c.b16 %v707, %v689
  %v762 = vpack.c.b16 %v708, %v690
  %v763 = vpack.c.b16 %v709, %v691
  %v764 = vpack.c.b16 %v710, %v692
  %v765 = vpack.c.b16 %v711, %v693
  %v766 = vpack.c.b16 %v712, %v694
  %v767 = vpack.c.b16 %v713, %v695
  %v768 = vpack.c.b16 %v714, %v696
  %v769 = vpack.c.b16 %v715, %v697
  %v770 = vpack.c.b16 %v716, %v698
  %v771 = vpack.c.b16 %v717, %v699
  %v772 = vpack.c.b16 %v718, %v700
  %v773 = vpack.c.b16 %v719, %v701
  %v774 = vpack.c.b16 %v720, %v702
  %v775 = vpack.c.b16 %v721, %v703
  %v776 = vpack.c.b16 %v722, %v704
  %v777 = vpack.c.b16 %v741, %v723
  %v778 = vpack.c.b16 %v742, %v724
  %v779 = vpack.c.b16 %v743, %v725
  %v780 = vpack.c.b16 %v744, %v726
  %v781 = vpack.c.b16 %v745, %v727
  %v782 = vpack.c.b16 %v746, %v728
  %v783 = vpack.c.b16 %v747, %v729
  %v784 = vpack.c.b16 %v748, %v730
  %v785 = vpack.c.b16 %v749, %v731
  %v786 = vpack.c.b16 %v750, %v732
  %v787 = vpack.c.b16 %v751, %v733
  %v788 = vpack.c.b16 %v752, %v734
  %v789 = vpack.c.b16 %v753, %v735
  %v790 = vpack.c.b16 %v754, %v736
  %v791 = vpack.c.b16 %v755, %v737
  %v792 = vpack.c.b16 %v756, %v738
  %v793 = vpack.c.b16 %v757, %v739
  %v794 = vpack.c.b16 %v758, %v740
  %v1407 = vunpack.c.l.b16 %v53
  %v1408 = vunpack.c.h.b16 %v53
  %v1409 = vunpack.c.l.b16 %v54
  %v1410 = vunpack.c.h.b16 %v54
  %v1411 = vunpack.c.l.b16 %v55
  %v1412 = vunpack.c.h.b16 %v55
  %v1413 = vunpack.c.l.b16 %v56
  %v1414 = vunpack.c.h.b16 %v56
  %v1415 = vunpack.c.l.b16 %v57
  %v1416 = vunpack.c.h.b16 %v57
  %v1417 = vunpack.c.l.b16 %v58
  %v1418 = vunpack.c.h.b16 %v58
  %v1419 = vunpack.c.l.b16 %v59
  %v1420 = vunpack.c.h.b16 %v59
  %v1421 = vunpack.c.l.b16 %v60
  %v1422 = vunpack.c.h.b16 %v60
  %v1423 = vunpack.c.l.b16 %v61
  %v1424 = vunpack.c.h.b16 %v61
  %v1425 = vunpack.c.l.b16 %v62
  %v1426 = vunpack.c.h.b16 %v62
  %v1427 = vunpack.c.l.b16 %v63
  %v1428 = vunpack.c.h.b16 %v63
  %v1429 = vunpack.c.l.b16 %v64
  %v1430 = vunpack.c.h.b16 %v64
  %v1431 = vunpack.c.l.b16 %v65
  %v1432 = vunpack.c.h.b16 %v65
  %v1433 = vunpack.c.l.b16 %v66
  %v1434 = vunpack.c.h.b16 %v66
  %v1435 = vunpack.c.l.b16 %v67
  %v1436 = vunpack.c.h.b16 %v67
  %v1437 = vunpack.c.l.b16 %v68
  %v1438 = vunpack.c.h.b16 %v68
  %v1439 = vunpack.c.l.b16 %v69
  %v1440 = vunpack.c.h.b16 %v69
  %v1441 = vunpack.c.l.b16 %v70
  %v1442 = vunpack.c.h.b16 %v70
  %v1443 = vunpack.c.l.b16 %v71
  %v1444 = vunpack.c.h.b16 %v71
  %v1445 = vunpack.c.l.b16 %v72
  %v1446 = vunpack.c.h.b16 %v72
  %v1447 = vunpack.c.l.b16 %v73
  %v1448 = vunpack.c.h.b16 %v73
  %v1449 = vunpack.c.l.b16 %v74
  %v1450 = vunpack.c.h.b16 %v74
  %v1451 = vunpack.c.l.b16 %v75
  %v1452 = vunpack.c.h.b16 %v75
  %v1453 = vunpack.c.l.b16 %v76
  %v1454 = vunpack.c.h.b16 %v76
  %v1455 = vunpack.c.l.b16 %v77
  %v1456 = vunpack.c.h.b16 %v77
  %v1457 = vunpack.c.l.b16 %v78
  %v1458 = vunpack.c.h.b16 %v78
  %v1459 = vunpack.c.l.b16 %v79
  %v1460 = vunpack.c.h.b16 %v79
  %v1461 = vunpack.c.l.b16 %v80
  %v1462 = vunpack.c.h.b16 %v80
  %v1463 = vunpack.c.l.b16 %v81
  %v1464 = vunpack.c.h.b16 %v81
  %v1465 = vunpack.c.l.b16 %v82
  %v1466 = vunpack.c.h.b16 %v82
  %v1467 = vunpack.c.l.b16 %v83
  %v1468 = vunpack.c.h.b16 %v83
  %v1469 = vunpack.c.l.b16 %v84
  %v1470 = vunpack.c.h.b16 %v84
  %v1471 = vunpack.c.l.b16 %v85
  %v1472 = vunpack.c.h.b16 %v85
  %v1473 = vunpack.c.l.b16 %v86
  %v1474 = vunpack.c.h.b16 %v86
  %v1475 = vunpack.c.l.b16 %v87
  %v1476 = vunpack.c.h.b16 %v87
  %v1477 = vunpack.c.l.b16 %v88
  %v1478 = vunpack.c.h.b16 %v88
  %v1479 = vunpack.c.l.b16 %v89
  %v1480 = vunpack.c.h.b16 %v89
  %v1481 = vunpack.c.l.b16 %v90
  %v1482 = vunpack.c.h.b16 %v90
  %v1483 = vunpack.c.l.b16 %v91
  %v1484 = vunpack.c.h.b16 %v91
  %v1485 = vunpack.c.l.b16 %v92
  %v1486 = vunpack.c.h.b16 %v92
  %v1487 = vunpack.c.l.b16 %v93
  %v1488 = vunpack.c.h.b16 %v93
  %v1489 = vunpack.c.l.b16 %v94
  %v1490 = vunpack.c.h.b16 %v94
  %v1491 = vunpack.c.l.b16 %v95
  %v1492 = vunpack.c.h.b16 %v95
  %v1493 = vunpack.c.l.b16 %v96
  %v1494 = vunpack.c.h.b16 %v96
  %v1495 = vunpack.c.l.b16 %v97
  %v1496 = vunpack.c.h.b16 %v97
  %v1497 = vunpack.c.l.b16 %v98
  %v1498 = vunpack.c.h.b16 %v98
  %v1499 = vunpack.c.l.b16 %v99
  %v1500 = vunpack.c.h.b16 %v99
  %v1501 = vunpack.c.l.b16 %v100
  %v1502 = vunpack.c.h.b16 %v100
  %v1503 = vunpack.c.l.b16 %v101
  %v1504 = vunpack.c.h.b16 %v101
  %v1505 = vunpack.c.l.b16 %v102
  %v1506 = vunpack.c.h.b16 %v102
  %v1507 = vunpack.c.l.b16 %v103
  %v1508 = vunpack.c.h.b16 %v103
  %v1509 = vunpack.c.l.b16 %v104
  %v1510 = vunpack.c.h.b16 %v104
  %v1511 = vunpack.c.l.b16 %v105
  %v1512 = vunpack.c.h.b16 %v105
  %v1513 = vunpack.c.l.b16 %v106
  %v1514 = vunpack.c.h.b16 %v106
  %v1515 = vunpack.c.l.b16 %v107
  %v1516 = vunpack.c.h.b16 %v107
  %v1517 = vunpack.c.l.b16 %v108
  %v1518 = vunpack.c.h.b16 %v108
  %v1519 = vunpack.c.l.b16 %v109
  %v1520 = vunpack.c.h.b16 %v109
  %v1521 = vunpack.c.l.b16 %v110
  %v1522 = vunpack.c.h.b16 %v110
  %v1523 = vunpack.c.l.b16 %v111
  %v1524 = vunpack.c.h.b16 %v111
  %v1525 = vunpack.c.l.b16 %v112
  %v1526 = vunpack.c.h.b16 %v112
  %v1527 = vunpack.c.l.b16 %v113
  %v1528 = vunpack.c.h.b16 %v113
  %v1529 = vunpack.c.l.b16 %v114
  %v1530 = vunpack.c.h.b16 %v114
  %v1531 = vunpack.c.l.b16 %v115
  %v1532 = vunpack.c.h.b16 %v115
  %v1533 = vunpack.c.l.b16 %v116
  %v1534 = vunpack.c.h.b16 %v116
  %v1535 = vunpack.c.l.b16 %v117
  %v1536 = vunpack.c.h.b16 %v117
  %v1537 = vunpack.c.l.b16 %v118
  %v1538 = vunpack.c.h.b16 %v118
  %v1539 = vunpack.c.l.b16 %v119
  %v1540 = vunpack.c.h.b16 %v119
  %v1541 = vunpack.c.l.b16 %v120
  %v1542 = vunpack.c.h.b16 %v120
  %v1543 = vunpack.c.l.b16 %v121
  %v1544 = vunpack.c.h.b16 %v121
  %v1545 = vunpack.c.l.b16 %v122
  %v1546 = vunpack.c.h.b16 %v122
  %v1547 = vunpack.c.l.b16 %v123
  %v1548 = vunpack.c.h.b16 %v123
  %v1549 = vunpack.c.l.b16 %v124
  %v1550 = vunpack.c.h.b16 %v124
  %v1551 = vunpack.c.l.b16 %v125
  %v1552 = vunpack.c.h.b16 %v125
  %v1553 = vunpack.c.l.b16 %v126
  %v1554 = vunpack.c.h.b16 %v126
  %v1555 = vunpack.c.l.b16 %v127
  %v1556 = vunpack.c.h.b16 %v127
  %v1557 = vunpack.c.l.b16 %v128
  %v1558 = vunpack.c.h.b16 %v128
  %v1559 = vunpack.c.l.b16 %v129
  %v1560 = vunpack.c.h.b16 %v129
  %v1561 = vunpack.c.l.b16 %v130
  %v1562 = vunpack.c.h.b16 %v130
  %v1563 = vunpack.c.l.b16 %v131
  %v1564 = vunpack.c.h.b16 %v131
  %v1565 = vunpack.c.l.b16 %v132
  %v1566 = vunpack.c.h.b16 %v132
  %v1567 = vunpack.c.l.b16 %v133
  %v1568 = vunpack.c.h.b16 %v133
  %v1569 = vunpack.c.l.b16 %v134
  %v1570 = vunpack.c.h.b16 %v134
  %v1571 = vunpack.c.l.b16 %v135
  %v1572 = vunpack.c.h.b16 %v135
  %v1573 = vunpack.c.l.b16 %v136
  %v1574 = vunpack.c.h.b16 %v136
  %v1575 = vunpack.c.l.b16 %v137
  %v1576 = vunpack.c.h.b16 %v137
  %v1577 = vunpack.c.l.b16 %v138
  %v1578 = vunpack.c.h.b16 %v138
  %v1579 = vunpack.c.l.b16 %v139
  %v1580 = vunpack.c.h.b16 %v139
  %v1581 = vunpack.c.l.b16 %v140
  %v1582 = vunpack.c.h.b16 %v140
  %v1583 = vunpack.c.l.b16 %v141
  %v1584 = vunpack.c.h.b16 %v141
  %v1585 = vunpack.c.l.b16 %v142
  %v1586 = vunpack.c.h.b16 %v142
  %v1587 = vunpack.c.l.b16 %v143
  %v1588 = vunpack.c.h.b16 %v143
  %v1589 = vunpack.c.l.b16 %v144
  %v1590 = vunpack.c.h.b16 %v144
  %v1591 = vunpack.c.l.b16 %v145
  %v1592 = vunpack.c.h.b16 %v145
  %v1593 = vunpack.c.l.b16 %v146
  %v1594 = vunpack.c.h.b16 %v146
  %v1595 = vunpack.c.l.b16 %v147
  %v1596 = vunpack.c.h.b16 %v147
  %v1597 = vunpack.c.l.b16 %v148
  %v1598 = vunpack.c.h.b16 %v148
  %v1599 = vunpack.c.l.b16 %v149
  %v1600 = vunpack.c.h.b16 %v149
  %v1601 = vunpack.c.l.b16 %v150
  %v1602 = vunpack.c.h.b16 %v150
  %v1603 = vunpack.c.l.b16 %v151
  %v1604 = vunpack.c.h.b16 %v151
  %v1605 = vunpack.c.l.b16 %v152
  %v1606 = vunpack.c.h.b16 %v152
  %v1607 = vunpack.c.l.b16 %v153
  %v1608 = vunpack.c.h.b16 %v153
  %v1609 = vunpack.c.l.b16 %v154
  %v1610 = vunpack.c.h.b16 %v154
  %v1611 = vunpack.c.l.b16 %v155
  %v1612 = vunpack.c.h.b16 %v155
  %v1613 = vunpack.c.l.b16 %v156
  %v1614 = vunpack.c.h.b16 %v156
  %v1615 = vunpack.c.l.b16 %v157
  %v1616 = vunpack.c.h.b16 %v157
  %v1617 = vunpack.c.l.b16 %v158
  %v1618 = vunpack.c.h.b16 %v158
  %v1619 = vunpack.c.l.b16 %v159
  %v1620 = vunpack.c.h.b16 %v159
  %v1621 = vunpack.c.l.b16 %v160
  %v1622 = vunpack.c.h.b16 %v160
  %v1623 = vunpack.c.l.b16 %v161
  %v1624 = vunpack.c.h.b16 %v161
  %v1625 = vunpack.c.l.b16 %v162
  %v1626 = vunpack.c.h.b16 %v162
  %v1627 = vunpack.c.l.b16 %v163
  %v1628 = vunpack.c.h.b16 %v163
  %v1629 = vunpack.c.l.b16 %v164
  %v1630 = vunpack.c.h.b16 %v164
  %v1631 = vunpack.c.l.b16 %v165
  %v1632 = vunpack.c.h.b16 %v165
  %v1633 = vunpack.c.l.b16 %v166
  %v1634 = vunpack.c.h.b16 %v166
  %v1635 = vunpack.c.l.b16 %v167
  %v1636 = vunpack.c.h.b16 %v167
  %v1637 = vunpack.c.l.b16 %v168
  %v1638 = vunpack.c.h.b16 %v168
  %v1639 = vunpack.c.l.b16 %v169
  %v1640 = vunpack.c.h.b16 %v169
  %v1641 = vunpack.c.l.b16 %v170
  %v1642 = vunpack.c.h.b16 %v170
  %v1643 = vunpack.c.l.b16 %v171
  %v1644 = vunpack.c.h.b16 %v171
  %v1645 = vunpack.c.l.b16 %v172
  %v1646 = vunpack.c.h.b16 %v172
  %v1647 = vunpack.c.l.b16 %v173
  %v1648 = vunpack.c.h.b16 %v173
  %v1649 = vunpack.c.l.b16 %v174
  %v1650 = vunpack.c.h.b16 %v174
  %v1651 = vunpack.c.l.b16 %v175
  %v1652 = vunpack.c.h.b16 %v175
  %v1653 = vunpack.c.l.b16 %v176
  %v1654 = vunpack.c.h.b16 %v176
  %v1655 = vunpack.c.l.b16 %v177
  %v1656 = vunpack.c.h.b16 %v177
  %v1657 = vunpack.c.l.b16 %v178
  %v1658 = vunpack.c.h.b16 %v178
  %v1659 = vunpack.c.l.b16 %v179
  %v1660 = vunpack.c.h.b16 %v179
  %v1661 = vunpack.c.l.b16 %v180
  %v1662 = vunpack.c.h.b16 %v180
  %v1663 = vunpack.c.l.b16 %v181
  %v1664 = vunpack.c.h.b16 %v181
  %v1665 = vunpack.c.l.b16 %v182
  %v1666 = vunpack.c.h.b16 %v182
  %v1667 = vunpack.c.l.b16 %v183
  %v1668 = vunpack.c.h.b16 %v183
  %v1669 = vunpack.c.l.b16 %v184
  %v1670 = vunpack.c.h.b16 %v184
  %v1671 = vunpack.c.l.b16 %v185
  %v1672 = vunpack.c.h.b16 %v185
  %v1673 = vunpack.c.l.b16 %v186
  %v1674 = vunpack.c.h.b16 %v186
  %v1675 = vunpack.c.l.b16 %v187
  %v1676 = vunpack.c.h.b16 %v187
  %v1677 = vunpack.c.l.b16 %v188
  %v1678 = vunpack.c.h.b16 %v188
  %v1679 = vunpack.c.l.b16 %v189
  %v1680 = vunpack.c.h.b16 %v189
  %v1681 = vunpack.c.l.b16 %v190
  %v1682 = vunpack.c.h.b16 %v190
  %v1683 = vunpack.c.l.b16 %v191
  %v1684 = vunpack.c.h.b16 %v191
  %v1685 = vunpack.c.l.b16 %v192
  %v1686 = vunpack.c.h.b16 %v192
  %v1687 = vunpack.c.l.b16 %v193
  %v1688 = vunpack.c.h.b16 %v193
  %v1689 = vunpack.c.l.b16 %v194
  %v1690 = vunpack.c.h.b16 %v194
  %v1691 = vunpack.c.l.b16 %v195
  %v1692 = vunpack.c.h.b16 %v195
  %v1693 = vunpack.c.l.b16 %v196
  %v1694 = vunpack.c.h.b16 %v196
  %v1695 = vunpack.c.l.b16 %v197
  %v1696 = vunpack.c.h.b16 %v197
  %v1697 = vunpack.c.l.b16 %v198
  %v1698 = vunpack.c.h.b16 %v198
  %v1699 = vunpack.c.l.b16 %v199
  %v1700 = vunpack.c.h.b16 %v199
  %v1701 = vunpack.c.l.b16 %v200
  %v1702 = vunpack.c.h.b16 %v200
  %v1703 = vunpack.c.l.b16 %v201
  %v1704 = vunpack.c.h.b16 %v201
  %v1705 = vunpack.c.l.b16 %v202
  %v1706 = vunpack.c.h.b16 %v202
  %v1707 = vunpack.c.l.b16 %v203
  %v1708 = vunpack.c.h.b16 %v203
  %v1709 = vunpack.c.l.b16 %v204
  %v1710 = vunpack.c.h.b16 %v204
  %v1711 = vunpack.c.l.b16 %v205
  %v1712 = vunpack.c.h.b16 %v205
  %v1713 = vunpack.c.l.b16 %v206
  %v1714 = vunpack.c.h.b16 %v206
  %v1715 = vunpack.c.l.b16 %v207
  %v1716 = vunpack.c.h.b16 %v207
  %v1717 = vunpack.c.l.b16 %v208
  %v1718 = vunpack.c.h.b16 %v208
  %v1719 = vunpack.c.l.b16 %v209
  %v1720 = vunpack.c.h.b16 %v209
  %v1721 = vunpack.c.l.b16 %v210
  %v1722 = vunpack.c.h.b16 %v210
  %v1723 = vunpack.c.l.b16 %v211
  %v1724 = vunpack.c.h.b16 %v211
  %v1725 = vunpack.c.l.b16 %v212
  %v1726 = vunpack.c.h.b16 %v212
  %v1727 = vunpack.c.l.b16 %v213
  %v1728 = vunpack.c.h.b16 %v213
  %v1729 = vunpack.c.l.b16 %v214
  %v1730 = vunpack.c.h.b16 %v214
  %v1731 = vunpack.c.l.b16 %v215
  %v1732 = vunpack.c.h.b16 %v215
  %v1733 = vunpack.c.l.b16 %v216
  %v1734 = vunpack.c.h.b16 %v216
  %v1735 = vunpack.c.l.b16 %v217
  %v1736 = vunpack.c.h.b16 %v217
  %v1737 = vunpack.c.l.b16 %v218
  %v1738 = vunpack.c.h.b16 %v218
  %v1739 = vunpack.c.l.b16 %v219
  %v1740 = vunpack.c.h.b16 %v219
  %v1741 = vunpack.c.l.b16 %v220
  %v1742 = vunpack.c.h.b16 %v220
  %v1743 = vunpack.c.l.b16 %v221
  %v1744 = vunpack.c.h.b16 %v221
  %v1745 = vunpack.c.l.b16 %v222
  %v1746 = vunpack.c.h.b16 %v222
  %v1747 = vunpack.c.l.b16 %v223
  %v1748 = vunpack.c.h.b16 %v223
  %v1749 = vunpack.c.l.b16 %v224
  %v1750 = vunpack.c.h.b16 %v224
  %v1751 = vunpack.c.l.b16 %v225
  %v1752 = vunpack.c.h.b16 %v225
  %v1753 = vunpack.c.l.b16 %v226
  %v1754 = vunpack.c.h.b16 %v226
  %v1755 = vunpack.c.l.b16 %v227
  %v1756 = vunpack.c.h.b16 %v227
  %v1757 = vunpack.c.l.b16 %v228
  %v1758 = vunpack.c.h.b16 %v228
  %v1759 = vunpack.c.l.b16 %v229
  %v1760 = vunpack.c.h.b16 %v229
  %v1761 = vunpack.c.l.b16 %v230
  %v1762 = vunpack.c.h.b16 %v230
  %v1763 = vunpack.c.l.b16 %v231
  %v1764 = vunpack.c.h.b16 %v231
  %v1765 = vunpack.c.l.b16 %v232
  %v1766 = vunpack.c.h.b16 %v232
  %v1767 = vunpack.c.l.b16 %v233
  %v1768 = vunpack.c.h.b16 %v233
  %v1769 = vunpack.c.l.b16 %v234
  %v1770 = vunpack.c.h.b16 %v234
  %v1771 = vunpack.c.l.b16 %v235
  %v1772 = vunpack.c.h.b16 %v235
  %v1773 = vunpack.c.l.b16 %v236
  %v1774 = vunpack.c.h.b16 %v236
  %v1775 = vunpack.c.l.b16 %v237
  %v1776 = vunpack.c.h.b16 %v237
  %v1777 = vunpack.c.l.b16 %v238
  %v1778 = vunpack.c.h.b16 %v238
  %v1779 = vunpack.c.l.b16 %v239
  %v1780 = vunpack.c.h.b16 %v239
  %v1781 = vunpack.c.l.b16 %v240
  %v1782 = vunpack.c.h.b16 %v240
  %v1783 = vunpack.c.l.b16 %v241
  %v1784 = vunpack.c.h.b16 %v241
  %v1785 = vunpack.c.l.b16 %v242
  %v1786 = vunpack.c.h.b16 %v242
  %v1787 = vunpack.c.l.b16 %v243
  %v1788 = vunpack.c.h.b16 %v243
  %v1789 = vunpack.c.l.b16 %v244
  %v1790 = vunpack.c.h.b16 %v244
  %v1791 = vunpack.c.l.b16 %v245
  %v1792 = vunpack.c.h.b16 %v245
  %v1793 = vunpack.c.l.b16 %v246
  %v1794 = vunpack.c.h.b16 %v246
  %v1795 = vunpack.c.l.b16 %v247
  %v1796 = vunpack.c.h.b16 %v247
  %v1797 = vunpack.c.l.b16 %v248
  %v1798 = vunpack.c.h.b16 %v248
  %v1799 = vunpack.c.l.b16 %v249
  %v1800 = vunpack.c.h.b16 %v249
  %v1801 = vunpack.c.l.b16 %v250
  %v1802 = vunpack.c.h.b16 %v250
  %v1803 = vunpack.c.l.b16 %v251
  %v1804 = vunpack.c.h.b16 %v251
  %v1805 = vunpack.c.l.b16 %v252
  %v1806 = vunpack.c.h.b16 %v252
  %v1807 = vunpack.c.l.b16 %v253
  %v1808 = vunpack.c.h.b16 %v253
  %v1809 = vunpack.c.l.b16 %v254
  %v1810 = vunpack.c.h.b16 %v254
  %v1811 = vunpack.c.l.b16 %v255
  %v1812 = vunpack.c.h.b16 %v255
  %v1813 = vunpack.c.l.b16 %v256
  %v1814 = vunpack.c.h.b16 %v256
  %v1815 = vunpack.c.l.b16 %v257
  %v1816 = vunpack.c.h.b16 %v257
  %v1817 = vunpack.c.l.b16 %v258
  %v1818 = vunpack.c.h.b16 %v258
  %v1819 = vunpack.c.l.b16 %v259
  %v1820 = vunpack.c.h.b16 %v259
  %v1821 = vunpack.c.l.b16 %v260
  %v1822 = vunpack.c.h.b16 %v260
  %v1823 = vunpack.c.l.b16 %v261
  %v1824 = vunpack.c.h.b16 %v261
  %v1825 = vunpack.c.l.b16 %v262
  %v1826 = vunpack.c.h.b16 %v262
  %v1827 = vunpack.c.l.b16 %v263
  %v1828 = vunpack.c.h.b16 %v263
  %v1829 = vunpack.c.l.b16 %v264
  %v1830 = vunpack.c.h.b16 %v264
  %v1831 = vunpack.c.l.b16 %v265
  %v1832 = vunpack.c.h.b16 %v265
  %v1833 = vunpack.c.l.b16 %v266
  %v1834 = vunpack.c.h.b16 %v266
  %v1835 = vunpack.c.l.b16 %v267
  %v1836 = vunpack.c.h.b16 %v267
  %v1837 = vunpack.c.l.b16 %v268
  %v1838 = vunpack.c.h.b16 %v268
  %v1839 = vunpack.c.l.b16 %v269
  %v1840 = vunpack.c.h.b16 %v269
  %v1841 = vunpack.c.l.b16 %v270
  %v1842 = vunpack.c.h.b16 %v270
  %v1843 = vunpack.c.l.b16 %v271
  %v1844 = vunpack.c.h.b16 %v271
  %v1845 = vunpack.c.l.b16 %v272
  %v1846 = vunpack.c.h.b16 %v272
  %v1847 = vunpack.c.l.b16 %v273
  %v1848 = vunpack.c.h.b16 %v273
  %v1849 = vunpack.c.l.b16 %v274
  %v1850 = vunpack.c.h.b16 %v274
  %v1851 = vunpack.c.l.b16 %v275
  %v1852 = vunpack.c.h.b16 %v275
  %v1853 = vunpack.c.l.b16 %v276
  %v1854 = vunpack.c.h.b16 %v276
  %v1855 = vunpack.c.l.b16 %v277
  %v1856 = vunpack.c.h.b16 %v277
  %v1857 = vunpack.c.l.b16 %v278
  %v1858 = vunpack.c.h.b16 %v278
  %v1859 = vunpack.c.l.b16 %v279
  %v1860 = vunpack.c.h.b16 %v279
  %v1861 = vunpack.c.l.b16 %v280
  %v1862 = vunpack.c.h.b16 %v280
  %v1863 = vunpack.c.l.b16 %v281
  %v1864 = vunpack.c.h.b16 %v281
  %v1865 = vunpack.c.l.b16 %v282
  %v1866 = vunpack.c.h.b16 %v282
  %v1867 = vunpack.c.l.b16 %v283
  %v1868 = vunpack.c.h.b16 %v283
  %v1869 = vunpack.c.l.b16 %v284
  %v1870 = vunpack.c.h.b16 %v284
  %v1871 = vunpack.c.l.b16 %v285
  %v1872 = vunpack.c.h.b16 %v285
  %v1873 = vunpack.c.l.b16 %v286
  %v1874 = vunpack.c.h.b16 %v286
  %v1875 = vunpack.c.l.b16 %v287
  %v1876 = vunpack.c.h.b16 %v287
  %v1877 = vunpack.c.l.b16 %v288
  %v1878 = vunpack.c.h.b16 %v288
  %v1879 = vunpack.c.l.b16 %v289
  %v1880 = vunpack.c.h.b16 %v289
  %v1881 = vunpack.c.l.b16 %v290
  %v1882 = vunpack.c.h.b16 %v290
  %v1883 = vunpack.c.l.b16 %v291
  %v1884 = vunpack.c.h.b16 %v291
  %v1885 = vunpack.c.l.b16 %v292
  %v1886 = vunpack.c.h.b16 %v292
  %v1887 = vunpack.c.l.b16 %v293
  %v1888 = vunpack.c.h.b16 %v293
  %v1889 = vunpack.c.l.b16 %v294
  %v1890 = vunpack.c.h.b16 %v294
  %v1891 = vunpack.c.l.b16 %v295
  %v1892 = vunpack.c.h.b16 %v295
  %v1893 = vunpack.c.l.b16 %v296
  %v1894 = vunpack.c.h.b16 %v296
  %v1895 = vunpack.c.l.b16 %v297
  %v1896 = vunpack.c.h.b16 %v297
  %v1897 = vunpack.c.l.b16 %v298
  %v1898 = vunpack.c.h.b16 %v298
  %v1899 = vunpack.c.l.b16 %v299
  %v1900 = vunpack.c.h.b16 %v299
  %v1901 = vunpack.c.l.b16 %v300
  %v1902 = vunpack.c.h.b16 %v300
  %v1903 = vunpack.c.l.b16 %v301
  %v1904 = vunpack.c.h.b16 %v301
  %v1905 = vunpack.c.l.b16 %v302
  %v1906 = vunpack.c.h.b16 %v302
  %v1907 = vunpack.c.l.b16 %v303
  %v1908 = vunpack.c.h.b16 %v303
  %v1909 = vunpack.c.l.b16 %v304
  %v1910 = vunpack.c.h.b16 %v304
  %v1911 = vunpack.c.l.b16 %v305
  %v1912 = vunpack.c.h.b16 %v305
  %v1913 = vunpack.c.l.b16 %v306
  %v1914 = vunpack.c.h.b16 %v306
  %v1915 = vunpack.c.l.b16 %v307
  %v1916 = vunpack.c.h.b16 %v307
  %v1917 = vunpack.c.l.b16 %v308
  %v1918 = vunpack.c.h.b16 %v308
  %v1919 = vunpack.c.l.b16 %v309
  %v1920 = vunpack.c.h.b16 %v309
  %v1921 = vunpack.c.l.b16 %v310
  %v1922 = vunpack.c.h.b16 %v310
  %v1923 = vunpack.c.l.b16 %v311
  %v1924 = vunpack.c.h.b16 %v311
  %v1925 = vunpack.c.l.b16 %v312
  %v1926 = vunpack.c.h.b16 %v312
  %v1927 = vunpack.c.l.b16 %v313
  %v1928 = vunpack.c.h.b16 %v313
  %v1929 = vunpack.c.l.b16 %v314
  %v1930 = vunpack.c.h.b16 %v314
  %v1931 = vunpack.c.l.b16 %v315
  %v1932 = vunpack.c.h.b16 %v315
  %v1933 = vunpack.c.l.b16 %v316
  %v1934 = vunpack.c.h.b16 %v316
  %v1935 = vunpack.c.l.b16 %v317
  %v1936 = vunpack.c.h.b16 %v317
  %v1937 = vunpack.c.l.b16 %v318
  %v1938 = vunpack.c.h.b16 %v318
  %v1939 = vunpack.c.l.b16 %v319
  %v1940 = vunpack.c.h.b16 %v319
  %v1941 = vunpack.c.l.b16 %v320
  %v1942 = vunpack.c.h.b16 %v320
  %v1943 = vunpack.c.l.b16 %v321
  %v1944 = vunpack.c.h.b16 %v321
  %v1945 = vunpack.c.l.b16 %v322
  %v1946 = vunpack.c.h.b16 %v322
  %v1947 = vunpack.c.l.b16 %v323
  %v1948 = vunpack.c.h.b16 %v323
  %v1949 = vunpack.c.l.b16 %v324
  %v1950 = vunpack.c.h.b16 %v324
  %v1951 = vunpack.c.l.b16 %v325
  %v1952 = vunpack.c.h.b16 %v325
  %v1953 = vunpack.c.l.b16 %v326
  %v1954 = vunpack.c.h.b16 %v326
  %v1955 = vunpack.c.l.b16 %v327
  %v1956 = vunpack.c.h.b16 %v327
  %v1957 = vunpack.c.l.b16 %v328
  %v1958 = vunpack.c.h.b16 %v328
  %v1959 = vunpack.c.l.b16 %v329
  %v1960 = vunpack.c.h.b16 %v329
  %v1961 = vunpack.c.l.b16 %v330
  %v1962 = vunpack.c.h.b16 %v330
  %v1963 = vunpack.c.l.b16 %v331
  %v1964 = vunpack.c.h.b16 %v331
  %v1965 = vunpack.c.l.b16 %v332
  %v1966 = vunpack.c.h.b16 %v332
  %v1967 = vunpack.c.l.b16 %v333
  %v1968 = vunpack.c.h.b16 %v333
  %v1969 = vunpack.c.l.b16 %v334
  %v1970 = vunpack.c.h.b16 %v334
  %v1971 = vunpack.c.l.b16 %v335
  %v1972 = vunpack.c.h.b16 %v335
  %v1973 = vunpack.c.l.b16 %v336
  %v1974 = vunpack.c.h.b16 %v336
  %v1975 = vunpack.c.l.b16 %v337
  %v1976 = vunpack.c.h.b16 %v337
  %v1977 = vunpack.c.l.b16 %v338
  %v1978 = vunpack.c.h.b16 %v338
  %v1979 = vunpack.c.l.b16 %v339
  %v1980 = vunpack.c.h.b16 %v339
  %v1981 = vunpack.c.l.b16 %v340
  %v1982 = vunpack.c.h.b16 %v340
  %v1983 = vunpack.c.l.b16 %v341
  %v1984 = vunpack.c.h.b16 %v341
  %v1985 = vunpack.c.l.b16 %v342
  %v1986 = vunpack.c.h.b16 %v342
  %v1987 = vunpack.c.l.b16 %v343
  %v1988 = vunpack.c.h.b16 %v343
  %v1989 = vunpack.c.l.b16 %v344
  %v1990 = vunpack.c.h.b16 %v344
  %v1991 = vunpack.c.l.b16 %v345
  %v1992 = vunpack.c.h.b16 %v345
  %v1993 = vunpack.c.l.b16 %v346
  %v1994 = vunpack.c.h.b16 %v346
  %v1995 = vunpack.c.l.b16 %v347
  %v1996 = vunpack.c.h.b16 %v347
  %v1997 = vunpack.c.l.b16 %v348
  %v1998 = vunpack.c.h.b16 %v348
  %v1999 = vunpack.c.l.b16 %v349
  %v2000 = vunpack.c.h.b16 %v349
  %v2001 = vunpack.c.l.b16 %v350
  %v2002 = vunpack.c.h.b16 %v350
  %v2003 = vunpack.c.l.b16 %v351
  %v2004 = vunpack.c.h.b16 %v351
  %v2005 = vunpack.c.l.b16 %v352
  %v2006 = vunpack.c.h.b16 %v352
  %v2007 = vunpack.c.l.b16 %v353
  %v2008 = vunpack.c.h.b16 %v353
  %v2009 = vunpack.c.l.b16 %v354
  %v2010 = vunpack.c.h.b16 %v354
  %v2011 = vunpack.c.l.b16 %v355
  %v2012 = vunpack.c.h.b16 %v355
  %v2013 = vunpack.c.l.b16 %v356
  %v2014 = vunpack.c.h.b16 %v356
  %v2015 = vunpack.c.l.b16 %v357
  %v2016 = vunpack.c.h.b16 %v357
  %v2017 = vunpack.c.l.b16 %v358
  %v2018 = vunpack.c.h.b16 %v358
  %v2019 = vunpack.c.l.b16 %v359
  %v2020 = vunpack.c.h.b16 %v359
  %v2021 = vunpack.c.l.b16 %v360
  %v2022 = vunpack.c.h.b16 %v360
  %v2023 = vunpack.c.l.b16 %v361
  %v2024 = vunpack.c.h.b16 %v361
  %v2025 = vunpack.c.l.b16 %v362
  %v2026 = vunpack.c.h.b16 %v362
  %v2027 = vunpack.c.l.b16 %v363
  %v2028 = vunpack.c.h.b16 %v363
  %v2029 = vunpack.c.l.b16 %v364
  %v2030 = vunpack.c.h.b16 %v364
  %v2031 = vunpack.c.l.b16 %v365
  %v2032 = vunpack.c.h.b16 %v365
  %v2033 = vunpack.c.l.b16 %v366
  %v2034 = vunpack.c.h.b16 %v366
  %v2035 = vunpack.c.l.b16 %v367
  %v2036 = vunpack.c.h.b16 %v367
  %v2037 = vunpack.c.l.b16 %v368
  %v2038 = vunpack.c.h.b16 %v368
  %v2039 = vunpack.c.l.b16 %v369
  %v2040 = vunpack.c.h.b16 %v369
  %v2041 = vunpack.c.l.b16 %v370
  %v2042 = vunpack.c.h.b16 %v370
  %v2043 = vunpack.c.l.b16 %v371
  %v2044 = vunpack.c.h.b16 %v371
  %v2045 = vunpack.c.l.b16 %v372
  %v2046 = vunpack.c.h.b16 %v372
  %v2047 = vunpack.c.l.b16 %v373
  %v2048 = vunpack.c.h.b16 %v373
  %v2049 = vunpack.c.l.b16 %v374
  %v2050 = vunpack.c.h.b16 %v374
  %v2051 = vunpack.c.l.b16 %v375
  %v2052 = vunpack.c.h.b16 %v375
  %v2053 = vunpack.c.l.b16 %v376
  %v2054 = vunpack.c.h.b16 %v376
  %v2055 = vunpack.c.l.b16 %v377
  %v2056 = vunpack.c.h.b16 %v377
  %v2057 = vunpack.c.l.b16 %v378
  %v2058 = vunpack.c.h.b16 %v378
  %v2059 = vunpack.c.l.b16 %v379
  %v2060 = vunpack.c.h.b16 %v379
  %v2061 = vunpack.c.l.b16 %v380
  %v2062 = vunpack.c.h.b16 %v380
  %v2063 = vunpack.c.l.b16 %v381
  %v2064 = vunpack.c.h.b16 %v381
  %v2065 = vunpack.c.l.b16 %v382
  %v2066 = vunpack.c.h.b16 %v382
  %v2067 = vunpack.c.l.b16 %v383
  %v2068 = vunpack.c.h.b16 %v383
  %v2069 = vunpack.c.l.b16 %v384
  %v2070 = vunpack.c.h.b16 %v384
  %v2071 = vunpack.c.l.b16 %v385
  %v2072 = vunpack.c.h.b16 %v385
  %v2073 = vunpack.c.l.b16 %v386
  %v2074 = vunpack.c.h.b16 %v386
  %v2075 = vunpack.c.l.b16 %v387
  %v2076 = vunpack.c.h.b16 %v387
  %v2077 = vunpack.c.l.b16 %v388
  %v2078 = vunpack.c.h.b16 %v388
  %v2079 = vunpack.c.l.b16 %v389
  %v2080 = vunpack.c.h.b16 %v389
  %v2081 = vunpack.c.l.b16 %v390
  %v2082 = vunpack.c.h.b16 %v390
  %v2083 = vunpack.c.l.b16 %v391
  %v2084 = vunpack.c.h.b16 %v391
  %v2085 = vunpack.c.l.b16 %v392
  %v2086 = vunpack.c.h.b16 %v392
  %v2087 = vunpack.c.l.b16 %v393
  %v2088 = vunpack.c.h.b16 %v393
  %v2089 = vunpack.c.l.b16 %v394
  %v2090 = vunpack.c.h.b16 %v394
  %v2091 = vunpack.c.l.b16 %v395
  %v2092 = vunpack.c.h.b16 %v395
  %v2093 = vunpack.c.l.b16 %v396
  %v2094 = vunpack.c.h.b16 %v396
  %v2095 = vunpack.c.l.b16 %v397
  %v2096 = vunpack.c.h.b16 %v397
  %v2097 = vunpack.c.l.b16 %v398
  %v2098 = vunpack.c.h.b16 %v398
  %v2099 = vunpack.c.l.b16 %v399
  %v2100 = vunpack.c.h.b16 %v399
  %v2101 = vunpack.c.l.b16 %v400
  %v2102 = vunpack.c.h.b16 %v400
  %v2103 = vunpack.c.l.b16 %v401
  %v2104 = vunpack.c.h.b16 %v401
  %v2105 = vunpack.c.l.b16 %v402
  %v2106 = vunpack.c.h.b16 %v402
  %v2107 = vunpack.c.l.b16 %v403
  %v2108 = vunpack.c.h.b16 %v403
  %v2109 = vunpack.c.l.b16 %v404
  %v2110 = vunpack.c.h.b16 %v404
  %v2111 = vunpack.c.l.b16 %v405
  %v2112 = vunpack.c.h.b16 %v405
  %v2113 = vunpack.c.l.b16 %v406
  %v2114 = vunpack.c.h.b16 %v406
  %v2115 = vunpack.c.l.b16 %v407
  %v2116 = vunpack.c.h.b16 %v407
  %v2117 = vunpack.c.l.b16 %v408
  %v2118 = vunpack.c.h.b16 %v408
  %v2119 = vunpack.c.l.b16 %v409
  %v2120 = vunpack.c.h.b16 %v409
  %v2121 = vunpack.c.l.b16 %v410
  %v2122 = vunpack.c.h.b16 %v410
  %v2123 = vunpack.c.l.b16 %v411
  %v2124 = vunpack.c.h.b16 %v411
  %v2125 = vunpack.c.l.b16 %v412
  %v2126 = vunpack.c.h.b16 %v412
  %v2127 = vunpack.c.l.b16 %v413
  %v2128 = vunpack.c.h.b16 %v413
  %v2129 = vunpack.c.l.b16 %v414
  %v2130 = vunpack.c.h.b16 %v414
  %v2131 = vunpack.c.l.b16 %v415
  %v2132 = vunpack.c.h.b16 %v415
  %v2133 = vunpack.c.l.b16 %v416
  %v2134 = vunpack.c.h.b16 %v416
  %v2135 = vunpack.c.l.b16 %v417
  %v2136 = vunpack.c.h.b16 %v417
  %v2137 = vunpack.c.l.b16 %v418
  %v2138 = vunpack.c.h.b16 %v418
  %v2139 = vunpack.c.l.b16 %v419
  %v2140 = vunpack.c.h.b16 %v419
  %v2141 = vunpack.c.l.b16 %v420
  %v2142 = vunpack.c.h.b16 %v420
  %v2143 = vunpack.c.l.b16 %v421
  %v2144 = vunpack.c.h.b16 %v421
  %v2145 = vunpack.c.l.b16 %v422
  %v2146 = vunpack.c.h.b16 %v422
  %v2147 = vunpack.c.l.b16 %v423
  %v2148 = vunpack.c.h.b16 %v423
  %v2149 = vunpack.c.l.b16 %v424
  %v2150 = vunpack.c.h.b16 %v424
  %v2151 = vunpack.c.l.b16 %v425
  %v2152 = vunpack.c.h.b16 %v425
  %v2153 = vunpack.c.l.b16 %v426
  %v2154 = vunpack.c.h.b16 %v426
  %v2155 = vunpack.c.l.b16 %v427
  %v2156 = vunpack.c.h.b16 %v427
  %v2157 = vunpack.c.l.b16 %v428
  %v2158 = vunpack.c.h.b16 %v428
  %v2159 = vunpack.c.l.b16 %v429
  %v2160 = vunpack.c.h.b16 %v429
  %v2161 = vunpack.c.l.b16 %v430
  %v2162 = vunpack.c.h.b16 %v430
  %v2163 = vunpack.c.l.b16 %v431
  %v2164 = vunpack.c.h.b16 %v431
  %v2165 = vunpack.c.l.b16 %v432
  %v2166 = vunpack.c.h.b16 %v432
  %v2167 = vunpack.c.l.b16 %v433
  %v2168 = vunpack.c.h.b16 %v433
  %v2169 = vunpack.c.l.b16 %v434
  %v2170 = vunpack.c.h.b16 %v434
  %v2171 = vunpack.c.l.b16 %v435
  %v2172 = vunpack.c.h.b16 %v435
  %v2173 = vunpack.c.l.b16 %v436
  %v2174 = vunpack.c.h.b16 %v436
  %v2175 = vunpack.c.l.b16 %v437
  %v2176 = vunpack.c.h.b16 %v437
  %v2177 = vunpack.c.l.b16 %v438
  %v2178 = vunpack.c.h.b16 %v438
  %v2179 = vunpack.c.l.b16 %v439
  %v2180 = vunpack.c.h.b16 %v439
  %v2181 = vunpack.c.l.b16 %v440
  %v2182 = vunpack.c.h.b16 %v440
  %v2183 = vunpack.c.l.b16 %v441
  %v2184 = vunpack.c.h.b16 %v441
  %v2185 = vunpack.c.l.b16 %v442
  %v2186 = vunpack.c.h.b16 %v442
  %v2187 = vunpack.c.l.b16 %v443
  %v2188 = vunpack.c.h.b16 %v443
  %v2189 = vunpack.c.l.b16 %v444
  %v2190 = vunpack.c.h.b16 %v444
  %v2191 = vunpack.c.l.b16 %v445
  %v2192 = vunpack.c.h.b16 %v445
  %v2193 = vunpack.c.l.b16 %v446
  %v2194 = vunpack.c.h.b16 %v446
  %v2195 = vunpack.c.l.b16 %v447
  %v2196 = vunpack.c.h.b16 %v447
  %v2197 = vunpack.c.l.b16 %v448
  %v2198 = vunpack.c.h.b16 %v448
  %v2199 = vunpack.c.l.b16 %v449
  %v2200 = vunpack.c.h.b16 %v449
  %v2201 = vunpack.c.l.b16 %v450
  %v2202 = vunpack.c.h.b16 %v450
  %v2203 = vunpack.c.l.b16 %v451
  %v2204 = vunpack.c.h.b16 %v451
  %v2205 = vunpack.c.l.b16 %v452
  %v2206 = vunpack.c.h.b16 %v452
  %v2207 = vunpack.c.l.b16 %v453
  %v2208 = vunpack.c.h.b16 %v453
  %v2209 = vunpack.c.l.b16 %v454
  %v2210 = vunpack.c.h.b16 %v454
  %v2211 = vunpack.c.l.b16 %v455
  %v2212 = vunpack.c.h.b16 %v455
  %v2213 = vunpack.c.l.b16 %v456
  %v2214 = vunpack.c.h.b16 %v456
  %v2215 = vunpack.c.l.b16 %v457
  %v2216 = vunpack.c.h.b16 %v457
  %v2217 = vunpack.c.l.b16 %v458
  %v2218 = vunpack.c.h.b16 %v458
  %v2219 = vunpack.c.l.b16 %v459
  %v2220 = vunpack.c.h.b16 %v459
  %v2221 = vunpack.c.l.b16 %v460
  %v2222 = vunpack.c.h.b16 %v460
  %v2223 = vunpack.c.l.b16 %v461
  %v2224 = vunpack.c.h.b16 %v461
  %v2225 = vunpack.c.l.b16 %v462
  %v2226 = vunpack.c.h.b16 %v462
  %v2227 = vunpack.c.l.b16 %v463
  %v2228 = vunpack.c.h.b16 %v463
  %v2229 = vunpack.c.l.b16 %v464
  %v2230 = vunpack.c.h.b16 %v464
  %v2231 = vunpack.c.l.b16 %v465
  %v2232 = vunpack.c.h.b16 %v465
  %v2233 = vunpack.c.l.b16 %v466
  %v2234 = vunpack.c.h.b16 %v466
  %v2235 = vunpack.c.l.b16 %v467
  %v2236 = vunpack.c.h.b16 %v467
  %v2237 = vunpack.c.l.b16 %v468
  %v2238 = vunpack.c.h.b16 %v468
  %v2239 = vunpack.c.l.b16 %v469
  %v2240 = vunpack.c.h.b16 %v469
  %v2241 = vunpack.c.l.b16 %v470
  %v2242 = vunpack.c.h.b16 %v470
  %v2243 = vunpack.c.l.b16 %v471
  %v2244 = vunpack.c.h.b16 %v471
  %v2245 = vunpack.c.l.b16 %v472
  %v2246 = vunpack.c.h.b16 %v472
  %v2247 = vunpack.c.l.b16 %v473
  %v2248 = vunpack.c.h.b16 %v473
  %v2249 = vunpack.c.l.b16 %v474
  %v2250 = vunpack.c.h.b16 %v474
  %v2251 = vunpack.c.l.b16 %v475
  %v2252 = vunpack.c.h.b16 %v475
  %v2253 = vunpack.c.l.b16 %v476
  %v2254 = vunpack.c.h.b16 %v476
  %v2255 = vunpack.c.l.b16 %v477
  %v2256 = vunpack.c.h.b16 %v477
  %v2257 = vunpack.c.l.b16 %v478
  %v2258 = vunpack.c.h.b16 %v478
  %v2259 = vunpack.c.l.b16 %v479
  %v2260 = vunpack.c.h.b16 %v479
  %v2261 = vunpack.c.l.b16 %v480
  %v2262 = vunpack.c.h.b16 %v480
  %v2263 = vunpack.c.l.b16 %v481
  %v2264 = vunpack.c.h.b16 %v481
  %v2265 = vunpack.c.l.b16 %v482
  %v2266 = vunpack.c.h.b16 %v482
  %v2267 = vunpack.c.l.b16 %v483
  %v2268 = vunpack.c.h.b16 %v483
  %v2269 = vunpack.c.l.b16 %v484
  %v2270 = vunpack.c.h.b16 %v484
  %v2271 = vunpack.c.l.b16 %v485
  %v2272 = vunpack.c.h.b16 %v485
  %v2273 = vunpack.c.l.b16 %v486
  %v2274 = vunpack.c.h.b16 %v486
  %v2275 = vunpack.c.l.b16 %v487
  %v2276 = vunpack.c.h.b16 %v487
  %v2277 = vunpack.c.l.b16 %v488
  %v2278 = vunpack.c.h.b16 %v488
  %v2279 = vunpack.c.l.b16 %v489
  %v2280 = vunpack.c.h.b16 %v489
  %v2281 = vunpack.c.l.b16 %v490
  %v2282 = vunpack.c.h.b16 %v490
  %v2283 = vunpack.c.l.b16 %v491
  %v2284 = vunpack.c.h.b16 %v491
  %v2285 = vunpack.c.l.b16 %v492
  %v2286 = vunpack.c.h.b16 %v492
  %v2287 = vunpack.c.l.b16 %v493
  %v2288 = vunpack.c.h.b16 %v493
  %v2289 = vunpack.c.l.b16 %v494
  %v2290 = vunpack.c.h.b16 %v494
  %v2291 = vunpack.c.l.b16 %v495
  %v2292 = vunpack.c.h.b16 %v495
  %v2293 = vunpack.c.l.b16 %v496
  %v2294 = vunpack.c.h.b16 %v496
  %v2295 = vunpack.c.l.b16 %v497
  %v2296 = vunpack.c.h.b16 %v497
  %v2297 = vunpack.c.l.b16 %v498
  %v2298 = vunpack.c.h.b16 %v498
  %v2299 = vunpack.c.l.b16 %v499
  %v2300 = vunpack.c.h.b16 %v499
  %v2301 = vunpack.c.l.b16 %v500
  %v2302 = vunpack.c.h.b16 %v500
  %v2303 = vunpack.c.l.b16 %v501
  %v2304 = vunpack.c.h.b16 %v501
  %v2305 = vunpack.c.l.b16 %v502
  %v2306 = vunpack.c.h.b16 %v502
  %v2307 = vunpack.c.l.b16 %v503
  %v2308 = vunpack.c.h.b16 %v503
  %v2309 = vunpack.c.l.b16 %v504
  %v2310 = vunpack.c.h.b16 %v504
  %v2311 = vunpack.c.l.b16 %v505
  %v2312 = vunpack.c.h.b16 %v505
  %v2313 = vunpack.c.l.b16 %v506
  %v2314 = vunpack.c.h.b16 %v506
  %v2315 = vunpack.c.l.b16 %v507
  %v2316 = vunpack.c.h.b16 %v507
  %v2317 = vunpack.c.l.b16 %v508
  %v2318 = vunpack.c.h.b16 %v508
  %v2319 = vunpack.c.l.b16 %v509
  %v2320 = vunpack.c.h.b16 %v509
  %v2321 = vunpack.c.l.b16 %v510
  %v2322 = vunpack.c.h.b16 %v510
  %v2323 = vunpack.c.l.b16 %v511
  %v2324 = vunpack.c.h.b16 %v511
  %v2325 = vunpack.c.l.b16 %v512
  %v2326 = vunpack.c.h.b16 %v512
  %v2327 = vunpack.c.l.b16 %v513
  %v2328 = vunpack.c.h.b16 %v513
  %v2329 = vunpack.c.l.b16 %v514
  %v2330 = vunpack.c.h.b16 %v514
  %v2331 = vunpack.c.l.b16 %v515
  %v2332 = vunpack.c.h.b16 %v515
  %v2333 = vunpack.c.l.b16 %v516
  %v2334 = vunpack.c.h.b16 %v516
  %v2335 = vunpack.c.l.b16 %v517
  %v2336 = vunpack.c.h.b16 %v517
  %v2337 = vunpack.c.l.b16 %v518
  %v2338 = vunpack.c.h.b16 %v518
  %v2339 = vunpack.c.l.b16 %v519
  %v2340 = vunpack.c.h.b16 %v519
  %v2341 = vunpack.c.l.b16 %v520
  %v2342 = vunpack.c.h.b16 %v520
  %v2343 = vunpack.c.l.b16 %v521
  %v2344 = vunpack.c.h.b16 %v521
  %v2345 = vunpack.c.l.b16 %v522
  %v2346 = vunpack.c.h.b16 %v522
  %v2347 = vunpack.c.l.b16 %v523
  %v2348 = vunpack.c.h.b16 %v523
  %v2349 = vunpack.c.l.b16 %v524
  %v2350 = vunpack.c.h.b16 %v524
  %v2351 = vunpack.c.l.b16 %v525
  %v2352 = vunpack.c.h.b16 %v525
  %v2353 = vunpack.c.l.b16 %v526
  %v2354 = vunpack.c.h.b16 %v526
  %v2355 = vunpack.c.l.b16 %v527
  %v2356 = vunpack.c.h.b16 %v527
  %v2357 = vunpack.c.l.b16 %v528
  %v2358 = vunpack.c.h.b16 %v528
  %v2359 = vunpack.c.l.b16 %v529
  %v2360 = vunpack.c.h.b16 %v529
  %v2361 = vunpack.c.l.b16 %v530
  %v2362 = vunpack.c.h.b16 %v530
  %v2363 = vunpack.c.l.b16 %v531
  %v2364 = vunpack.c.h.b16 %v531
  %v2365 = vunpack.c.l.b16 %v532
  %v2366 = vunpack.c.h.b16 %v532
  %v2367 = vunpack.c.l.b16 %v533
  %v2368 = vunpack.c.h.b16 %v533
  %v2369 = vunpack.c.l.b16 %v534
  %v2370 = vunpack.c.h.b16 %v534
  %v2371 = vunpack.c.l.b16 %v535
  %v2372 = vunpack.c.h.b16 %v535
  %v2373 = vunpack.c.l.b16 %v536
  %v2374 = vunpack.c.h.b16 %v536
  %v2375 = vunpack.c.l.b16 %v537
  %v2376 = vunpack.c.h.b16 %v537
  %v2377 = vunpack.c.l.b16 %v538
  %v2378 = vunpack.c.h.b16 %v538
  %v2379 = vunpack.c.l.b16 %v539
  %v2380 = vunpack.c.h.b16 %v539
  %v2381 = vunpack.c.l.b16 %v540
  %v2382 = vunpack.c.h.b16 %v540
  %v2383 = vunpack.c.l.b16 %v541
  %v2384 = vunpack.c.h.b16 %v541
  %v2385 = vunpack.c.l.b16 %v542
  %v2386 = vunpack.c.h.b16 %v542
  %v2387 = vunpack.c.l.b16 %v543
  %v2388 = vunpack.c.h.b16 %v543
  %v2389 = vunpack.c.l.b16 %v544
  %v2390 = vunpack.c.h.b16 %v544
  %v2391 = vunpack.c.l.b16 %v545
  %v2392 = vunpack.c.h.b16 %v545
  %v2393 = vunpack.c.l.b16 %v546
  %v2394 = vunpack.c.h.b16 %v546
  %v2395 = vunpack.c.l.b16 %v547
  %v2396 = vunpack.c.h.b16 %v547
  %v2397 = vunpack.c.l.b16 %v548
  %v2398 = vunpack.c.h.b16 %v548
  %v2399 = vunpack.c.l.b16 %v549
  %v2400 = vunpack.c.h.b16 %v549
  %v2401 = vunpack.c.l.b16 %v550
  %v2402 = vunpack.c.h.b16 %v550
  %v2403 = vunpack.c.l.b16 %v551
  %v2404 = vunpack.c.h.b16 %v551
  %v2405 = vunpack.c.l.b16 %v552
  %v2406 = vunpack.c.h.b16 %v552
  %v2407 = vunpack.c.l.b16 %v553
  %v2408 = vunpack.c.h.b16 %v553
  %v2409 = vunpack.c.l.b16 %v554
  %v2410 = vunpack.c.h.b16 %v554
  %v2411 = vunpack.c.l.b16 %v555
  %v2412 = vunpack.c.h.b16 %v555
  %v2413 = vunpack.c.l.b16 %v556
  %v2414 = vunpack.c.h.b16 %v556
  %v2415 = vunpack.c.l.b16 %v557
  %v2416 = vunpack.c.h.b16 %v557
  %v2417 = vunpack.c.l.b16 %v558
  %v2418 = vunpack.c.h.b16 %v558
  %v2419 = vunpack.c.l.b16 %v559
  %v2420 = vunpack.c.h.b16 %v559
  %v2421 = vunpack.c.l.b16 %v560
  %v2422 = vunpack.c.h.b16 %v560
  %v2423 = vunpack.c.l.b16 %v561
  %v2424 = vunpack.c.h.b16 %v561
  %v2425 = vunpack.c.l.b16 %v562
  %v2426 = vunpack.c.h.b16 %v562
  %v2427 = vunpack.c.l.b16 %v563
  %v2428 = vunpack.c.h.b16 %v563
  %v2429 = vunpack.c.l.b16 %v564
  %v2430 = vunpack.c.h.b16 %v564
  %v2431 = vunpack.c.l.b16 %v565
  %v2432 = vunpack.c.h.b16 %v565
  %v2433 = vunpack.c.l.b16 %v566
  %v2434 = vunpack.c.h.b16 %v566
  %v2435 = vunpack.c.l.b16 %v567
  %v2436 = vunpack.c.h.b16 %v567
  %v2437 = vunpack.c.l.b16 %v568
  %v2438 = vunpack.c.h.b16 %v568
  %v2439 = vunpack.c.l.b16 %v569
  %v2440 = vunpack.c.h.b16 %v569
  %v2441 = vunpack.c.l.b16 %v570
  %v2442 = vunpack.c.h.b16 %v570
  %v2443 = vunpack.c.l.b16 %v571
  %v2444 = vunpack.c.h.b16 %v571
  %v2445 = vunpack.c.l.b16 %v572
  %v2446 = vunpack.c.h.b16 %v572
  %v2447 = vunpack.c.l.b16 %v573
  %v2448 = vunpack.c.h.b16 %v573
  %v2449 = vunpack.c.l.b16 %v574
  %v2450 = vunpack.c.h.b16 %v574
  %v2451 = vunpack.c.l.b16 %v575
  %v2452 = vunpack.c.h.b16 %v575
  %v2453 = vunpack.c.l.b16 %v576
  %v2454 = vunpack.c.h.b16 %v576
  %v2455 = vunpack.c.l.b16 %v577
  %v2456 = vunpack.c.h.b16 %v577
  %v2457 = vunpack.c.l.b16 %v578
  %v2458 = vunpack.c.h.b16 %v578
  %v2459 = vunpack.c.l.b16 %v579
  %v2460 = vunpack.c.h.b16 %v579
  %v2461 = vunpack.c.l.b16 %v580
  %v2462 = vunpack.c.h.b16 %v580
  %v2463 = vunpack.c.l.b16 %v581
  %v2464 = vunpack.c.h.b16 %v581
  %v2465 = vunpack.c.l.b16 %v582
  %v2466 = vunpack.c.h.b16 %v582
  %v2467 = vunpack.c.l.b16 %v583
  %v2468 = vunpack.c.h.b16 %v583
  %v2469 = vunpack.c.l.b16 %v584
  %v2470 = vunpack.c.h.b16 %v584
  %v2471 = vunpack.c.l.b16 %v585
  %v2472 = vunpack.c.h.b16 %v585
  %v2473 = vunpack.c.l.b16 %v586
  %v2474 = vunpack.c.h.b16 %v586
  %v2475 = vunpack.c.l.b16 %v587
  %v2476 = vunpack.c.h.b16 %v587
  %v2477 = vunpack.c.l.b16 %v588
  %v2478 = vunpack.c.h.b16 %v588
  %v2479 = vunpack.c.l.b16 %v589
  %v2480 = vunpack.c.h.b16 %v589
  %v2481 = vunpack.c.l.b16 %v590
  %v2482 = vunpack.c.h.b16 %v590
  %v2483 = vunpack.c.l.b16 %v591
  %v2484 = vunpack.c.h.b16 %v591
  %v2485 = vunpack.c.l.b16 %v592
  %v2486 = vunpack.c.h.b16 %v592
  %v2487 = vunpack.c.l.b16 %v593
  %v2488 = vunpack.c.h.b16 %v593
  %v2489 = vunpack.c.l.b16 %v594
  %v2490 = vunpack.c.h.b16 %v594
  %v2491 = vunpack.c.l.b16 %v595
  %v2492 = vunpack.c.h.b16 %v595
  %v2493 = vunpack.c.l.b16 %v596
  %v2494 = vunpack.c.h.b16 %v596
  %v2495 = vunpack.c.l.b16 %v597
  %v2496 = vunpack.c.h.b16 %v597
  %v2497 = vunpack.c.l.b16 %v598
  %v2498 = vunpack.c.h.b16 %v598
  %v2499 = vunpack.c.l.b16 %v599
  %v2500 = vunpack.c.h.b16 %v599
  %v2501 = vunpack.c.l.b16 %v600
  %v2502 = vunpack.c.h.b16 %v600
  %v2503 = vunpack.c.l.b16 %v601
  %v2504 = vunpack.c.h.b16 %v601
  %v2505 = vunpack.c.l.b16 %v602
  %v2506 = vunpack.c.h.b16 %v602
  %v2507 = vunpack.c.l.b16 %v603
  %v2508 = vunpack.c.h.b16 %v603
  %v2509 = vunpack.c.l.b16 %v604
  %v2510 = vunpack.c.h.b16 %v604
  %v2511 = vunpack.c.l.b16 %v605
  %v2512 = vunpack.c.h.b16 %v605
  %v2513 = vunpack.c.l.b16 %v606
  %v2514 = vunpack.c.h.b16 %v606
  %v2515 = vunpack.c.l.b16 %v607
  %v2516 = vunpack.c.h.b16 %v607
  %v2517 = vunpack.c.l.b16 %v608
  %v2518 = vunpack.c.h.b16 %v608
  %v2519 = vunpack.c.l.b16 %v609
  %v2520 = vunpack.c.h.b16 %v609
  %v2521 = vunpack.c.l.b16 %v610
  %v2522 = vunpack.c.h.b16 %v610
  %v2523 = vunpack.c.l.b16 %v611
  %v2524 = vunpack.c.h.b16 %v611
  %v2525 = vunpack.c.l.b16 %v612
  %v2526 = vunpack.c.h.b16 %v612
  %v2527 = vunpack.c.l.b16 %v613
  %v2528 = vunpack.c.h.b16 %v613
  %v2529 = vunpack.c.l.b16 %v614
  %v2530 = vunpack.c.h.b16 %v614
  %v2531 = vunpack.c.l.b16 %v615
  %v2532 = vunpack.c.h.b16 %v615
  %v2533 = vunpack.c.l.b16 %v616
  %v2534 = vunpack.c.h.b16 %v616
  %v2535 = vunpack.c.l.b16 %v617
  %v2536 = vunpack.c.h.b16 %v617
  %v2537 = vunpack.c.l.b16 %v618
  %v2538 = vunpack.c.h.b16 %v618
  %v2539 = vunpack.c.l.b16 %v619
  %v2540 = vunpack.c.h.b16 %v619
  %v2541 = vunpack.c.l.b16 %v620
  %v2542 = vunpack.c.h.b16 %v620
  %v2543 = vunpack.c.l.b16 %v621
  %v2544 = vunpack.c.h.b16 %v621
  %v2545 = vunpack.c.l.b16 %v622
  %v2546 = vunpack.c.h.b16 %v622
  %v2547 = vunpack.c.l.b16 %v623
  %v2548 = vunpack.c.h.b16 %v623
  %v2549 = vunpack.c.l.b16 %v624
  %v2550 = vunpack.c.h.b16 %v624
  %v2551 = vunpack.c.l.b16 %v625
  %v2552 = vunpack.c.h.b16 %v625
  %v2553 = vunpack.c.l.b16 %v626
  %v2554 = vunpack.c.h.b16 %v626
  %v2555 = vunpack.c.l.b16 %v627
  %v2556 = vunpack.c.h.b16 %v627
  %v2557 = vunpack.c.l.b16 %v628
  %v2558 = vunpack.c.h.b16 %v628
  %v2559 = vpack.c.b16 %v1411, %v1407
  %v2560 = vpack.c.b16 %v1412, %v1408
  %v2561 = vpack.c.b16 %v1413, %v1409
  %v2562 = vpack.c.b16 %v1414, %v1410
  %v2563 = vpack.c.b16 %v1419, %v1415
  %v2564 = vpack.c.b16 %v1420, %v1416
  %v2565 = vpack.c.b16 %v1421, %v1417
  %v2566 = vpack.c.b16 %v1422, %v1418
  %v2567 = vpack.c.b16 %v1427, %v1423
  %v2568 = vpack.c.b16 %v1428, %v1424
  %v2569 = vpack.c.b16 %v1429, %v1425
  %v2570 = vpack.c.b16 %v1430, %v1426
  %v2571 = vpack.c.b16 %v1435, %v1431
  %v2572 = vpack.c.b16 %v1436, %v1432
  %v2573 = vpack.c.b16 %v1437, %v1433
  %v2574 = vpack.c.b16 %v1438, %v1434
  %v2575 = vpack.c.b16 %v1443, %v1439
  %v2576 = vpack.c.b16 %v1444, %v1440
  %v2577 = vpack.c.b16 %v1445, %v1441
  %v2578 = vpack.c.b16 %v1446, %v1442
  %v2579 = vpack.c.b16 %v1451, %v1447
  %v2580 = vpack.c.b16 %v1452, %v1448
  %v2581 = vpack.c.b16 %v1453, %v1449
  %v2582 = vpack.c.b16 %v1454, %v1450
  %v2583 = vpack.c.b16 %v1459, %v1455
  %v2584 = vpack.c.b16 %v1460, %v1456
  %v2585 = vpack.c.b16 %v1461, %v1457
  %v2586 = vpack.c.b16 %v1462, %v1458
  %v2587 = vpack.c.b16 %v1467, %v1463
  %v2588 = vpack.c.b16 %v1468, %v1464
  %v2589 = vpack.c.b16 %v1469, %v1465
  %v2590 = vpack.c.b16 %v1470, %v1466
  %v2591 = vpack.c.b16 %v1475, %v1471
  %v2592 = vpack.c.b16 %v1476, %v1472
  %v2593 = vpack.c.b16 %v1477, %v1473
  %v2594 = vpack.c.b16 %v1478, %v1474
  %v2595 = vpack.c.b16 %v1483, %v1479
  %v2596 = vpack.c.b16 %v1484, %v1480
  %v2597 = vpack.c.b16 %v1485, %v1481
  %v2598 = vpack.c.b16 %v1486, %v1482
  %v2599 = vpack.c.b16 %v1491, %v1487
  %v2600 = vpack.c.b16 %v1492, %v1488
  %v2601 = vpack.c.b16 %v1493, %v1489
  %v2602 = vpack.c.b16 %v1494, %v1490
  %v2603 = vpack.c.b16 %v1499, %v1495
  %v2604 = vpack.c.b16 %v1500, %v1496
  %v2605 = vpack.c.b16 %v1501, %v1497
  %v2606 = vpack.c.b16 %v1502, %v1498
  %v2607 = vpack.c.b16 %v1507, %v1503
  %v2608 = vpack.c.b16 %v1508, %v1504
  %v2609 = vpack.c.b16 %v1509, %v1505
  %v2610 = vpack.c.b16 %v1510, %v1506
  %v2611 = vpack.c.b16 %v1515, %v1511
  %v2612 = vpack.c.b16 %v1516, %v1512
  %v2613 = vpack.c.b16 %v1517, %v1513
  %v2614 = vpack.c.b16 %v1518, %v1514
  %v2615 = vpack.c.b16 %v1523, %v1519
  %v2616 = vpack.c.b16 %v1524, %v1520
  %v2617 = vpack.c.b16 %v1525, %v1521
  %v2618 = vpack.c.b16 %v1526, %v1522
  %v2619 = vpack.c.b16 %v1531, %v1527
  %v2620 = vpack.c.b16 %v1532, %v1528
  %v2621 = vpack.c.b16 %v1533, %v1529
  %v2622 = vpack.c.b16 %v1534, %v1530
  %v2623 = vpack.c.b16 %v1539, %v1535
  %v2624 = vpack.c.b16 %v1540, %v1536
  %v2625 = vpack.c.b16 %v1541, %v1537
  %v2626 = vpack.c.b16 %v1542, %v1538
  %v2627 = vpack.c.b16 %v1547, %v1543
  %v2628 = vpack.c.b16 %v1548, %v1544
  %v2629 = vpack.c.b16 %v1549, %v1545
  %v2630 = vpack.c.b16 %v1550, %v1546
  %v2631 = vpack.c.b16 %v1555, %v1551
  %v2632 = vpack.c.b16 %v1556, %v1552
  %v2633 = vpack.c.b16 %v1557, %v1553
  %v2634 = vpack.c.b16 %v1558, %v1554
  %v2635 = vpack.c.b16 %v1563, %v1559
  %v2636 = vpack.c.b16 %v1564, %v1560
  %v2637 = vpack.c.b16 %v1565, %v1561
  %v2638 = vpack.c.b16 %v1566, %v1562
  %v2639 = vpack.c.b16 %v1571, %v1567
  %v2640 = vpack.c.b16 %v1572, %v1568
  %v2641 = vpack.c.b16 %v1573, %v1569
  %v2642 = vpack.c.b16 %v1574, %v1570
  %v2643 = vpack.c.b16 %v1579, %v1575
  %v2644 = vpack.c.b16 %v1580, %v1576
  %v2645 = vpack.c.b16 %v1581, %v1577
  %v2646 = vpack.c.b16 %v1582, %v1578
  %v2647 = vpack.c.b16 %v1587, %v1583
  %v2648 = vpack.c.b16 %v1588, %v1584
  %v2649 = vpack.c.b16 %v1589, %v1585
  %v2650 = vpack.c.b16 %v1590, %v1586
  %v2651 = vpack.c.b16 %v1595, %v1591
  %v2652 = vpack.c.b16 %v1596, %v1592
  %v2653 = vpack.c.b16 %v1597, %v1593
  %v2654 = vpack.c.b16 %v1598, %v1594
  %v2655 = vpack.c.b16 %v1603, %v1599
  %v2656 = vpack.c.b16 %v1604, %v1600
  %v2657 = vpack.c.b16 %v1605, %v1601
  %v2658 = vpack.c.b16 %v1606, %v1602
  %v2659 = vpack.c.b16 %v1611, %v1607
  %v2660 = vpack.c.b16 %v1612, %v1608
  %v2661 = vpack.c.b16 %v1613, %v1609
  %v2662 = vpack.c.b16 %v1614, %v1610
  %v2663 = vpack.c.b16 %v1619, %v1615
  %v2664 = vpack.c.b16 %v1620, %v1616
  %v2665 = vpack.c.b16 %v1621, %v1617
  %v2666 = vpack.c.b16 %v1622, %v1618
  %v2667 = vpack.c.b16 %v1627, %v1623
  %v2668 = vpack.c.b16 %v1628, %v1624
  %v2669 = vpack.c.b16 %v1629, %v1625
  %v2670 = vpack.c.b16 %v1630, %v1626
  %v2671 = vpack.c.b16 %v1635, %v1631
  %v2672 = vpack.c.b16 %v1636, %v1632
  %v2673 = vpack.c.b16 %v1637, %v1633
  %v2674 = vpack.c.b16 %v1638, %v1634
  %v2675 = vpack.c.b16 %v1643, %v1639
  %v2676 = vpack.c.b16 %v1644, %v1640
  %v2677 = vpack.c.b16 %v1645, %v1641
  %v2678 = vpack.c.b16 %v1646, %v1642
  %v2679 = vpack.c.b16 %v1651, %v1647
  %v2680 = vpack.c.b16 %v1652, %v1648
  %v2681 = vpack.c.b16 %v1653, %v1649
  %v2682 = vpack.c.b16 %v1654, %v1650
  %v2683 = vpack.c.b16 %v1659, %v1655
  %v2684 = vpack.c.b16 %v1660, %v1656
  %v2685 = vpack.c.b16 %v1661, %v1657
  %v2686 = vpack.c.b16 %v1662, %v1658
  %v2687 = vpack.c.b16 %v1667, %v1663
  %v2688 = vpack.c.b16 %v1668, %v1664
  %v2689 = vpack.c.b16 %v1669, %v1665
  %v2690 = vpack.c.b16 %v1670, %v1666
  %v2691 = vpack.c.b16 %v1675, %v1671
  %v2692 = vpack.c.b16 %v1676, %v1672
  %v2693 = vpack.c.b16 %v1677, %v1673
  %v2694 = vpack.c.b16 %v1678, %v1674
  %v2695 = vpack.c.b16 %v1683, %v1679
  %v2696 = vpack.c.b16 %v1684, %v1680
  %v2697 = vpack.c.b16 %v1685, %v1681
  %v2698 = vpack.c.b16 %v1686, %v1682
  %v2699 = vpack.c.b16 %v1691, %v1687
  %v2700 = vpack.c.b16 %v1692, %v1688
  %v2701 = vpack.c.b16 %v1693, %v1689
  %v2702 = vpack.c.b16 %v1694, %v1690
  %v2703 = vpack.c.b16 %v1699, %v1695
  %v2704 = vpack.c.b16 %v1700, %v1696
  %v2705 = vpack.c.b16 %v1701, %v1697
  %v2706 = vpack.c.b16 %v1702, %v1698
  %v2707 = vpack.c.b16 %v1707, %v1703
  %v2708 = vpack.c.b16 %v1708, %v1704
  %v2709 = vpack.c.b16 %v1709, %v1705
  %v2710 = vpack.c.b16 %v1710, %v1706
  %v2711 = vpack.c.b16 %v1715, %v1711
  %v2712 = vpack.c.b16 %v1716, %v1712
  %v2713 = vpack.c.b16 %v1717, %v1713
  %v2714 = vpack.c.b16 %v1718, %v1714
  %v2715 = vpack.c.b16 %v1723, %v1719
  %v2716 = vpack.c.b16 %v1724, %v1720
  %v2717 = vpack.c.b16 %v1725, %v1721
  %v2718 = vpack.c.b16 %v1726, %v1722
  %v2719 = vpack.c.b16 %v1731, %v1727
  %v2720 = vpack.c.b16 %v1732, %v1728
  %v2721 = vpack.c.b16 %v1733, %v1729
  %v2722 = vpack.c.b16 %v1734, %v1730
  %v2723 = vpack.c.b16 %v1739, %v1735
  %v2724 = vpack.c.b16 %v1740, %v1736
  %v2725 = vpack.c.b16 %v1741, %v1737
  %v2726 = vpack.c.b16 %v1742, %v1738
  %v2727 = vpack.c.b16 %v1747, %v1743
  %v2728 = vpack.c.b16 %v1748, %v1744
  %v2729 = vpack.c.b16 %v1749, %v1745
  %v2730 = vpack.c.b16 %v1750, %v1746
  %v2731 = vpack.c.b16 %v1755, %v1751
  %v2732 = vpack.c.b16 %v1756, %v1752
  %v2733 = vpack.c.b16 %v1757, %v1753
  %v2734 = vpack.c.b16 %v1758, %v1754
  %v2735 = vpack.c.b16 %v1763, %v1759
  %v2736 = vpack.c.b16 %v1764, %v1760
  %v2737 = vpack.c.b16 %v1765, %v1761
  %v2738 = vpack.c.b16 %v1766, %v1762
  %v2739 = vpack.c.b16 %v1771, %v1767
  %v2740 = vpack.c.b16 %v1772, %v1768
  %v2741 = vpack.c.b16 %v1773, %v1769
  %v2742 = vpack.c.b16 %v1774, %v1770
  %v2743 = vpack.c.b16 %v1779, %v1775
  %v2744 = vpack.c.b16 %v1780, %v1776
  %v2745 = vpack.c.b16 %v1781, %v1777
  %v2746 = vpack.c.b16 %v1782, %v1778
  %v2747 = vpack.c.b16 %v1787, %v1783
  %v2748 = vpack.c.b16 %v1788, %v1784
  %v2749 = vpack.c.b16 %v1789, %v1785
  %v2750 = vpack.c.b16 %v1790, %v1786
  %v2751 = vpack.c.b16 %v1795, %v1791
  %v2752 = vpack.c.b16 %v1796, %v1792
  %v2753 = vpack.c.b16 %v1797, %v1793
  %v2754 = vpack.c.b16 %v1798, %v1794
  %v2755 = vpack.c.b16 %v1803, %v1799
  %v2756 = vpack.c.b16 %v1804, %v1800
  %v2757 = vpack.c.b16 %v1805, %v1801
  %v2758 = vpack.c.b16 %v1806, %v1802
  %v2759 = vpack.c.b16 %v1811, %v1807
  %v2760 = vpack.c.b16 %v1812, %v1808
  %v2761 = vpack.c.b16 %v1813, %v1809
  %v2762 = vpack.c.b16 %v1814, %v1810
  %v2763 = vpack.c.b16 %v1819, %v1815
  %v2764 = vpack.c.b16 %v1820, %v1816
  %v2765 = vpack.c.b16 %v1821, %v1817
  %v2766 = vpack.c.b16 %v1822, %v1818
  %v2767 = vpack.c.b16 %v1827, %v1823
  %v2768 = vpack.c.b16 %v1828, %v1824
  %v2769 = vpack.c.b16 %v1829, %v1825
  %v2770 = vpack.c.b16 %v1830, %v1826
  %v2771 = vpack.c.b16 %v1835, %v1831
  %v2772 = vpack.c.b16 %v1836, %v1832
  %v2773 = vpack.c.b16 %v1837, %v1833
  %v2774 = vpack.c.b16 %v1838, %v1834
  %v2775 = vpack.c.b16 %v1843, %v1839
  %v2776 = vpack.c.b16 %v1844, %v1840
  %v2777 = vpack.c.b16 %v1845, %v1841
  %v2778 = vpack.c.b16 %v1846, %v1842
  %v2779 = vpack.c.b16 %v1851, %v1847
  %v2780 = vpack.c.b16 %v1852, %v1848
  %v2781 = vpack.c.b16 %v1853, %v1849
  %v2782 = vpack.c.b16 %v1854, %v1850
  %v2783 = vpack.c.b16 %v1859, %v1855
  %v2784 = vpack.c.b16 %v1860, %v1856
  %v2785 = vpack.c.b16 %v1861, %v1857
  %v2786 = vpack.c.b16 %v1862, %v1858
  %v2787 = vpack.c.b16 %v1867, %v1863
  %v2788 = vpack.c.b16 %v1868, %v1864
  %v2789 = vpack.c.b16 %v1869, %v1865
  %v2790 = vpack.c.b16 %v1870, %v1866
  %v2791 = vpack.c.b16 %v1875, %v1871
  %v2792 = vpack.c.b16 %v1876, %v1872
  %v2793 = vpack.c.b16 %v1877, %v1873
  %v2794 = vpack.c.b16 %v1878, %v1874
  %v2795 = vpack.c.b16 %v1883, %v1879
  %v2796 = vpack.c.b16 %v1884, %v1880
  %v2797 = vpack.c.b16 %v1885, %v1881
  %v2798 = vpack.c.b16 %v1886, %v1882
  %v2799 = vpack.c.b16 %v1891, %v1887
  %v2800 = vpack.c.b16 %v1892, %v1888
  %v2801 = vpack.c.b16 %v1893, %v1889
  %v2802 = vpack.c.b16 %v1894, %v1890
  %v2803 = vpack.c.b16 %v1899, %v1895
  %v2804 = vpack.c.b16 %v1900, %v1896
  %v2805 = vpack.c.b16 %v1901, %v1897
  %v2806 = vpack.c.b16 %v1902, %v1898
  %v2807 = vpack.c.b16 %v1907, %v1903
  %v2808 = vpack.c.b16 %v1908, %v1904
  %v2809 = vpack.c.b16 %v1909, %v1905
  %v2810 = vpack.c.b16 %v1910, %v1906
  %v2811 = vpack.c.b16 %v1915, %v1911
  %v2812 = vpack.c.b16 %v1916, %v1912
  %v2813 = vpack.c.b16 %v1917, %v1913
  %v2814 = vpack.c.b16 %v1918, %v1914
  %v2815 = vpack.c.b16 %v1923, %v1919
  %v2816 = vpack.c.b16 %v1924, %v1920
  %v2817 = vpack.c.b16 %v1925, %v1921
  %v2818 = vpack.c.b16 %v1926, %v1922
  %v2819 = vpack.c.b16 %v1931, %v1927
  %v2820 = vpack.c.b16 %v1932, %v1928
  %v2821 = vpack.c.b16 %v1933, %v1929
  %v2822 = vpack.c.b16 %v1934, %v1930
  %v2823 = vpack.c.b16 %v1939, %v1935
  %v2824 = vpack.c.b16 %v1940, %v1936
  %v2825 = vpack.c.b16 %v1941, %v1937
  %v2826 = vpack.c.b16 %v1942, %v1938
  %v2827 = vpack.c.b16 %v1947, %v1943
  %v2828 = vpack.c.b16 %v1948, %v1944
  %v2829 = vpack.c.b16 %v1949, %v1945
  %v2830 = vpack.c.b16 %v1950, %v1946
  %v2831 = vpack.c.b16 %v1955, %v1951
  %v2832 = vpack.c.b16 %v1956, %v1952
  %v2833 = vpack.c.b16 %v1957, %v1953
  %v2834 = vpack.c.b16 %v1958, %v1954
  %v2835 = vpack.c.b16 %v1963, %v1959
  %v2836 = vpack.c.b16 %v1964, %v1960
  %v2837 = vpack.c.b16 %v1965, %v1961
  %v2838 = vpack.c.b16 %v1966, %v1962
  %v2839 = vpack.c.b16 %v1971, %v1967
  %v2840 = vpack.c.b16 %v1972, %v1968
  %v2841 = vpack.c.b16 %v1973, %v1969
  %v2842 = vpack.c.b16 %v1974, %v1970
  %v2843 = vpack.c.b16 %v1979, %v1975
  %v2844 = vpack.c.b16 %v1980, %v1976
  %v2845 = vpack.c.b16 %v1981, %v1977
  %v2846 = vpack.c.b16 %v1982, %v1978
  %v2847 = vpack.c.b16 %v1987, %v1983
  %v2848 = vpack.c.b16 %v1988, %v1984
  %v2849 = vpack.c.b16 %v1989, %v1985
  %v2850 = vpack.c.b16 %v1990, %v1986
  %v2851 = vpack.c.b16 %v1995, %v1991
  %v2852 = vpack.c.b16 %v1996, %v1992
  %v2853 = vpack.c.b16 %v1997, %v1993
  %v2854 = vpack.c.b16 %v1998, %v1994
  %v2855 = vpack.c.b16 %v2003, %v1999
  %v2856 = vpack.c.b16 %v2004, %v2000
  %v2857 = vpack.c.b16 %v2005, %v2001
  %v2858 = vpack.c.b16 %v2006, %v2002
  %v2859 = vpack.c.b16 %v2011, %v2007
  %v2860 = vpack.c.b16 %v2012, %v2008
  %v2861 = vpack.c.b16 %v2013, %v2009
  %v2862 = vpack.c.b16 %v2014, %v2010
  %v2863 = vpack.c.b16 %v2019, %v2015
  %v2864 = vpack.c.b16 %v2020, %v2016
  %v2865 = vpack.c.b16 %v2021, %v2017
  %v2866 = vpack.c.b16 %v2022, %v2018
  %v2867 = vpack.c.b16 %v2027, %v2023
  %v2868 = vpack.c.b16 %v2028, %v2024
  %v2869 = vpack.c.b16 %v2029, %v2025
  %v2870 = vpack.c.b16 %v2030, %v2026
  %v2871 = vpack.c.b16 %v2035, %v2031
  %v2872 = vpack.c.b16 %v2036, %v2032
  %v2873 = vpack.c.b16 %v2037, %v2033
  %v2874 = vpack.c.b16 %v2038, %v2034
  %v2875 = vpack.c.b16 %v2043, %v2039
  %v2876 = vpack.c.b16 %v2044, %v2040
  %v2877 = vpack.c.b16 %v2045, %v2041
  %v2878 = vpack.c.b16 %v2046, %v2042
  %v2879 = vpack.c.b16 %v2051, %v2047
  %v2880 = vpack.c.b16 %v2052, %v2048
  %v2881 = vpack.c.b16 %v2053, %v2049
  %v2882 = vpack.c.b16 %v2054, %v2050
  %v2883 = vpack.c.b16 %v2059, %v2055
  %v2884 = vpack.c.b16 %v2060, %v2056
  %v2885 = vpack.c.b16 %v2061, %v2057
  %v2886 = vpack.c.b16 %v2062, %v2058
  %v2887 = vpack.c.b16 %v2067, %v2063
  %v2888 = vpack.c.b16 %v2068, %v2064
  %v2889 = vpack.c.b16 %v2069, %v2065
  %v2890 = vpack.c.b16 %v2070, %v2066
  %v2891 = vpack.c.b16 %v2075, %v2071
  %v2892 = vpack.c.b16 %v2076, %v2072
  %v2893 = vpack.c.b16 %v2077, %v2073
  %v2894 = vpack.c.b16 %v2078, %v2074
  %v2895 = vpack.c.b16 %v2083, %v2079
  %v2896 = vpack.c.b16 %v2084, %v2080
  %v2897 = vpack.c.b16 %v2085, %v2081
  %v2898 = vpack.c.b16 %v2086, %v2082
  %v2899 = vpack.c.b16 %v2091, %v2087
  %v2900 = vpack.c.b16 %v2092, %v2088
  %v2901 = vpack.c.b16 %v2093, %v2089
  %v2902 = vpack.c.b16 %v2094, %v2090
  %v2903 = vpack.c.b16 %v2099, %v2095
  %v2904 = vpack.c.b16 %v2100, %v2096
  %v2905 = vpack.c.b16 %v2101, %v2097
  %v2906 = vpack.c.b16 %v2102, %v2098
  %v2907 = vpack.c.b16 %v2107, %v2103
  %v2908 = vpack.c.b16 %v2108, %v2104
  %v2909 = vpack.c.b16 %v2109, %v2105
  %v2910 = vpack.c.b16 %v2110, %v2106
  %v2911 = vpack.c.b16 %v2115, %v2111
  %v2912 = vpack.c.b16 %v2116, %v2112
  %v2913 = vpack.c.b16 %v2117, %v2113
  %v2914 = vpack.c.b16 %v2118, %v2114
  %v2915 = vpack.c.b16 %v2123, %v2119
  %v2916 = vpack.c.b16 %v2124, %v2120
  %v2917 = vpack.c.b16 %v2125, %v2121
  %v2918 = vpack.c.b16 %v2126, %v2122
  %v2919 = vpack.c.b16 %v2131, %v2127
  %v2920 = vpack.c.b16 %v2132, %v2128
  %v2921 = vpack.c.b16 %v2133, %v2129
  %v2922 = vpack.c.b16 %v2134, %v2130
  %v2923 = vpack.c.b16 %v2139, %v2135
  %v2924 = vpack.c.b16 %v2140, %v2136
  %v2925 = vpack.c.b16 %v2141, %v2137
  %v2926 = vpack.c.b16 %v2142, %v2138
  %v2927 = vpack.c.b16 %v2147, %v2143
  %v2928 = vpack.c.b16 %v2148, %v2144
  %v2929 = vpack.c.b16 %v2149, %v2145
  %v2930 = vpack.c.b16 %v2150, %v2146
  %v2931 = vpack.c.b16 %v2155, %v2151
  %v2932 = vpack.c.b16 %v2156, %v2152
  %v2933 = vpack.c.b16 %v2157, %v2153
  %v2934 = vpack.c.b16 %v2158, %v2154
  %v2935 = vpack.c.b16 %v2163, %v2159
  %v2936 = vpack.c.b16 %v2164, %v2160
  %v2937 = vpack.c.b16 %v2165, %v2161
  %v2938 = vpack.c.b16 %v2166, %v2162
  %v2939 = vpack.c.b16 %v2171, %v2167
  %v2940 = vpack.c.b16 %v2172, %v2168
  %v2941 = vpack.c.b16 %v2173, %v2169
  %v2942 = vpack.c.b16 %v2174, %v2170
  %v2943 = vpack.c.b16 %v2179, %v2175
  %v2944 = vpack.c.b16 %v2180, %v2176
  %v2945 = vpack.c.b16 %v2181, %v2177
  %v2946 = vpack.c.b16 %v2182, %v2178
  %v2947 = vpack.c.b16 %v2187, %v2183
  %v2948 = vpack.c.b16 %v2188, %v2184
  %v2949 = vpack.c.b16 %v2189, %v2185
  %v2950 = vpack.c.b16 %v2190, %v2186
  %v2951 = vpack.c.b16 %v2195, %v2191
  %v2952 = vpack.c.b16 %v2196, %v2192
  %v2953 = vpack.c.b16 %v2197, %v2193
  %v2954 = vpack.c.b16 %v2198, %v2194
  %v2955 = vpack.c.b16 %v2203, %v2199
  %v2956 = vpack.c.b16 %v2204, %v2200
  %v2957 = vpack.c.b16 %v2205, %v2201
  %v2958 = vpack.c.b16 %v2206, %v2202
  %v2959 = vpack.c.b16 %v2211, %v2207
  %v2960 = vpack.c.b16 %v2212, %v2208
  %v2961 = vpack.c.b16 %v2213, %v2209
  %v2962 = vpack.c.b16 %v2214, %v2210
  %v2963 = vpack.c.b16 %v2219, %v2215
  %v2964 = vpack.c.b16 %v2220, %v2216
  %v2965 = vpack.c.b16 %v2221, %v2217
  %v2966 = vpack.c.b16 %v2222, %v2218
  %v2967 = vpack.c.b16 %v2227, %v2223
  %v2968 = vpack.c.b16 %v2228, %v2224
  %v2969 = vpack.c.b16 %v2229, %v2225
  %v2970 = vpack.c.b16 %v2230, %v2226
  %v2971 = vpack.c.b16 %v2235, %v2231
  %v2972 = vpack.c.b16 %v2236, %v2232
  %v2973 = vpack.c.b16 %v2237, %v2233
  %v2974 = vpack.c.b16 %v2238, %v2234
  %v2975 = vpack.c.b16 %v2243, %v2239
  %v2976 = vpack.c.b16 %v2244, %v2240
  %v2977 = vpack.c.b16 %v2245, %v2241
  %v2978 = vpack.c.b16 %v2246, %v2242
  %v2979 = vpack.c.b16 %v2251, %v2247
  %v2980 = vpack.c.b16 %v2252, %v2248
  %v2981 = vpack.c.b16 %v2253, %v2249
  %v2982 = vpack.c.b16 %v2254, %v2250
  %v2983 = vpack.c.b16 %v2259, %v2255
  %v2984 = vpack.c.b16 %v2260, %v2256
  %v2985 = vpack.c.b16 %v2261, %v2257
  %v2986 = vpack.c.b16 %v2262, %v2258
  %v2987 = vpack.c.b16 %v2267, %v2263
  %v2988 = vpack.c.b16 %v2268, %v2264
  %v2989 = vpack.c.b16 %v2269, %v2265
  %v2990 = vpack.c.b16 %v2270, %v2266
  %v2991 = vpack.c.b16 %v2275, %v2271
  %v2992 = vpack.c.b16 %v2276, %v2272
  %v2993 = vpack.c.b16 %v2277, %v2273
  %v2994 = vpack.c.b16 %v2278, %v2274
  %v2995 = vpack.c.b16 %v2283, %v2279
  %v2996 = vpack.c.b16 %v2284, %v2280
  %v2997 = vpack.c.b16 %v2285, %v2281
  %v2998 = vpack.c.b16 %v2286, %v2282
  %v2999 = vpack.c.b16 %v2291, %v2287
  %v3000 = vpack.c.b16 %v2292, %v2288
  %v3001 = vpack.c.b16 %v2293, %v2289
  %v3002 = vpack.c.b16 %v2294, %v2290
  %v3003 = vpack.c.b16 %v2299, %v2295
  %v3004 = vpack.c.b16 %v2300, %v2296
  %v3005 = vpack.c.b16 %v2301, %v2297
  %v3006 = vpack.c.b16 %v2302, %v2298
  %v3007 = vpack.c.b16 %v2307, %v2303
  %v3008 = vpack.c.b16 %v2308, %v2304
  %v3009 = vpack.c.b16 %v2309, %v2305
  %v3010 = vpack.c.b16 %v2310, %v2306
  %v3011 = vpack.c.b16 %v2315, %v2311
  %v3012 = vpack.c.b16 %v2316, %v2312
  %v3013 = vpack.c.b16 %v2317, %v2313
  %v3014 = vpack.c.b16 %v2318, %v2314
  %v3015 = vpack.c.b16 %v2323, %v2319
  %v3016 = vpack.c.b16 %v2324, %v2320
  %v3017 = vpack.c.b16 %v2325, %v2321
  %v3018 = vpack.c.b16 %v2326, %v2322
  %v3019 = vpack.c.b16 %v2331, %v2327
  %v3020 = vpack.c.b16 %v2332, %v2328
  %v3021 = vpack.c.b16 %v2333, %v2329
  %v3022 = vpack.c.b16 %v2334, %v2330
  %v3023 = vpack.c.b16 %v2339, %v2335
  %v3024 = vpack.c.b16 %v2340, %v2336
  %v3025 = vpack.c.b16 %v2341, %v2337
  %v3026 = vpack.c.b16 %v2342, %v2338
  %v3027 = vpack.c.b16 %v2347, %v2343
  %v3028 = vpack.c.b16 %v2348, %v2344
  %v3029 = vpack.c.b16 %v2349, %v2345
  %v3030 = vpack.c.b16 %v2350, %v2346
  %v3031 = vpack.c.b16 %v2355, %v2351
  %v3032 = vpack.c.b16 %v2356, %v2352
  %v3033 = vpack.c.b16 %v2357, %v2353
  %v3034 = vpack.c.b16 %v2358, %v2354
  %v3035 = vpack.c.b16 %v2363, %v2359
  %v3036 = vpack.c.b16 %v2364, %v2360
  %v3037 = vpack.c.b16 %v2365, %v2361
  %v3038 = vpack.c.b16 %v2366, %v2362
  %v3039 = vpack.c.b16 %v2371, %v2367
  %v3040 = vpack.c.b16 %v2372, %v2368
  %v3041 = vpack.c.b16 %v2373, %v2369
  %v3042 = vpack.c.b16 %v2374, %v2370
  %v3043 = vpack.c.b16 %v2379, %v2375
  %v3044 = vpack.c.b16 %v2380, %v2376
  %v3045 = vpack.c.b16 %v2381, %v2377
  %v3046 = vpack.c.b16 %v2382, %v2378
  %v3047 = vpack.c.b16 %v2387, %v2383
  %v3048 = vpack.c.b16 %v2388, %v2384
  %v3049 = vpack.c.b16 %v2389, %v2385
  %v3050 = vpack.c.b16 %v2390, %v2386
  %v3051 = vpack.c.b16 %v2395, %v2391
  %v3052 = vpack.c.b16 %v2396, %v2392
  %v3053 = vpack.c.b16 %v2397, %v2393
  %v3054 = vpack.c.b16 %v2398, %v2394
  %v3055 = vpack.c.b16 %v2403, %v2399
  %v3056 = vpack.c.b16 %v2404, %v2400
  %v3057 = vpack.c.b16 %v2405, %v2401
  %v3058 = vpack.c.b16 %v2406, %v2402
  %v3059 = vpack.c.b16 %v2411, %v2407
  %v3060 = vpack.c.b16 %v2412, %v2408
  %v3061 = vpack.c.b16 %v2413, %v2409
  %v3062 = vpack.c.b16 %v2414, %v2410
  %v3063 = vpack.c.b16 %v2419, %v2415
  %v3064 = vpack.c.b16 %v2420, %v2416
  %v3065 = vpack.c.b16 %v2421, %v2417
  %v3066 = vpack.c.b16 %v2422, %v2418
  %v3067 = vpack.c.b16 %v2427, %v2423
  %v3068 = vpack.c.b16 %v2428, %v2424
  %v3069 = vpack.c.b16 %v2429, %v2425
  %v3070 = vpack.c.b16 %v2430, %v2426
  %v3071 = vpack.c.b16 %v2435, %v2431
  %v3072 = vpack.c.b16 %v2436, %v2432
  %v3073 = vpack.c.b16 %v2437, %v2433
  %v3074 = vpack.c.b16 %v2438, %v2434
  %v3075 = vpack.c.b16 %v2443, %v2439
  %v3076 = vpack.c.b16 %v2444, %v2440
  %v3077 = vpack.c.b16 %v2445, %v2441
  %v3078 = vpack.c.b16 %v2446, %v2442
  %v3079 = vpack.c.b16 %v2451, %v2447
  %v3080 = vpack.c.b16 %v2452, %v2448
  %v3081 = vpack.c.b16 %v2453, %v2449
  %v3082 = vpack.c.b16 %v2454, %v2450
  %v3083 = vpack.c.b16 %v2459, %v2455
  %v3084 = vpack.c.b16 %v2460, %v2456
  %v3085 = vpack.c.b16 %v2461, %v2457
  %v3086 = vpack.c.b16 %v2462, %v2458
  %v3087 = vpack.c.b16 %v2467, %v2463
  %v3088 = vpack.c.b16 %v2468, %v2464
  %v3089 = vpack.c.b16 %v2469, %v2465
  %v3090 = vpack.c.b16 %v2470, %v2466
  %v3091 = vpack.c.b16 %v2475, %v2471
  %v3092 = vpack.c.b16 %v2476, %v2472
  %v3093 = vpack.c.b16 %v2477, %v2473
  %v3094 = vpack.c.b16 %v2478, %v2474
  %v3095 = vpack.c.b16 %v2483, %v2479
  %v3096 = vpack.c.b16 %v2484, %v2480
  %v3097 = vpack.c.b16 %v2485, %v2481
  %v3098 = vpack.c.b16 %v2486, %v2482
  %v3099 = vpack.c.b16 %v2491, %v2487
  %v3100 = vpack.c.b16 %v2492, %v2488
  %v3101 = vpack.c.b16 %v2493, %v2489
  %v3102 = vpack.c.b16 %v2494, %v2490
  %v3103 = vpack.c.b16 %v2499, %v2495
  %v3104 = vpack.c.b16 %v2500, %v2496
  %v3105 = vpack.c.b16 %v2501, %v2497
  %v3106 = vpack.c.b16 %v2502, %v2498
  %v3107 = vpack.c.b16 %v2507, %v2503
  %v3108 = vpack.c.b16 %v2508, %v2504
  %v3109 = vpack.c.b16 %v2509, %v2505
  %v3110 = vpack.c.b16 %v2510, %v2506
  %v3111 = vpack.c.b16 %v2515, %v2511
  %v3112 = vpack.c.b16 %v2516, %v2512
  %v3113 = vpack.c.b16 %v2517, %v2513
  %v3114 = vpack.c.b16 %v2518, %v2514
  %v3115 = vpack.c.b16 %v2523, %v2519
  %v3116 = vpack.c.b16 %v2524, %v2520
  %v3117 = vpack.c.b16 %v2525, %v2521
  %v3118 = vpack.c.b16 %v2526, %v2522
  %v3119 = vpack.c.b16 %v2531, %v2527
  %v3120 = vpack.c.b16 %v2532, %v2528
  %v3121 = vpack.c.b16 %v2533, %v2529
  %v3122 = vpack.c.b16 %v2534, %v2530
  %v3123 = vpack.c.b16 %v2539, %v2535
  %v3124 = vpack.c.b16 %v2540, %v2536
  %v3125 = vpack.c.b16 %v2541, %v2537
  %v3126 = vpack.c.b16 %v2542, %v2538
  %v3127 = vpack.c.b16 %v2547, %v2543
  %v3128 = vpack.c.b16 %v2548, %v2544
  %v3129 = vpack.c.b16 %v2549, %v2545
  %v3130 = vpack.c.b16 %v2550, %v2546
  %v3131 = vpack.c.b16 %v2555, %v2551
  %v3132 = vpack.c.b16 %v2556, %v2552
  %v3133 = vpack.c.b16 %v2557, %v2553
  %v3134 = vpack.c.b16 %v2558, %v2554
  %3711 = vmatprep.subr.bf16.mxu0 %v2560
  %3712 = vmatpush1.bf16.msra.mxu0 %v2559
  %3713 = vmatprep.subr.bf16.mxu0 %v2564
  %3714 = vmatpush1.bf16.msra.mxu0 %v2563
  %3715 = vmatprep.subr.bf16.mxu0 %v2568
  %3716 = vmatpush1.bf16.msra.mxu0 %v2567
  %3717 = vmatprep.subr.bf16.mxu0 %v2572
  %3718 = vmatpush1.bf16.msra.mxu0 %v2571
  %3719 = vmatprep.subr.bf16.mxu0 %v2576
  %3720 = vmatpush1.bf16.msra.mxu0 %v2575
  %3721 = vmatprep.subr.bf16.mxu0 %v2580
  %3722 = vmatpush1.bf16.msra.mxu0 %v2579
  %3723 = vmatprep.subr.bf16.mxu0 %v2584
  %3724 = vmatpush1.bf16.msra.mxu0 %v2583
  %3725 = vmatprep.subr.bf16.mxu0 %v2588
  %3726 = vmatpush1.bf16.msra.mxu0 %v2587
  %3727 = vmatprep.subr.bf16.mxu0 %v2592
  %3728 = vmatpush1.bf16.msra.mxu0 %v2591
  %3729 = vmatprep.subr.bf16.mxu0 %v2596
  %3730 = vmatpush1.bf16.msra.mxu0 %v2595
  %3731 = vmatprep.subr.bf16.mxu0 %v2600
  %3732 = vmatpush1.bf16.msra.mxu0 %v2599
  %3733 = vmatprep.subr.bf16.mxu0 %v2604
  %3734 = vmatpush1.bf16.msra.mxu0 %v2603
  %3735 = vmatprep.subr.bf16.mxu0 %v2608
  %3736 = vmatpush1.bf16.msra.mxu0 %v2607
  %3737 = vmatprep.subr.bf16.mxu0 %v2612
  %3738 = vmatpush1.bf16.msra.mxu0 %v2611
  %3739 = vmatprep.subr.bf16.mxu0 %v2616
  %3740 = vmatpush1.bf16.msra.mxu0 %v2615
  %3741 = vmatprep.subr.bf16.mxu0 %v2620
  %3742 = vmatpush1.bf16.msra.mxu0 %v2619
  %3743 = vmatprep.mubr.bf16.mxu0 %v760
  %3744 = vmatmul.mubr.bf16.gmra.mrb[0].mxu0 %v759
  %v3745 = vpop.f32.mrb[0].mxu0
  %v3746 = vadd.f32 %v634, %v3745
  %v3747 = vpop.f32.mrb[0].mxu0
  %v3748 = vadd.f32 %v638, %v3747
  %v3749 = vpop.f32.mrb[0].mxu0
  %v3750 = vadd.f32 %v634, %v3749
  %v3751 = vpop.f32.mrb[0].mxu0
  %v3752 = vadd.f32 %v638, %v3751
  %3753 = vmatprep.mubr.bf16.mxu0 %v778
  %3754 = vmatmul.mubr.bf16.gmra.mrb[0].mxu0 %v777
  %v3755 = vpop.f32.mrb[0].mxu0
  %v3756 = vadd.f32 %v634, %v3755
  %v3757 = vpop.f32.mrb[0].mxu0
  %v3758 = vadd.f32 %v638, %v3757
  %v3759 = vpop.f32.mrb[0].mxu0
  %v3760 = vadd.f32 %v634, %v3759
  %v3761 = vpop.f32.mrb[0].mxu0
  %v3762 = vadd.f32 %v638, %v3761
  %3763 = vdwg.mxu0
  %3764 = vmatprep.subr.bf16.mxu0 %v2624
  %3765 = vmatpush1.bf16.msra.mxu0 %v2623
  %3766 = vmatprep.subr.bf16.mxu0 %v2628
  %3767 = vmatpush1.bf16.msra.mxu0 %v2627
  %3768 = vmatprep.subr.bf16.mxu0 %v2632
  %3769 = vmatpush1.bf16.msra.mxu0 %v2631
  %3770 = vmatprep.subr.bf16.mxu0 %v2636
  %3771 = vmatpush1.bf16.msra.mxu0 %v2635
  %3772 = vmatprep.subr.bf16.mxu0 %v2640
  %3773 = vmatpush1.bf16.msra.mxu0 %v2639
  %3774 = vmatprep.subr.bf16.mxu0 %v2644
  %3775 = vmatpush1.bf16.msra.mxu0 %v2643
  %3776 = vmatprep.subr.bf16.mxu0 %v2648
  %3777 = vmatpush1.bf16.msra.mxu0 %v2647
  %3778 = vmatprep.subr.bf16.mxu0 %v2652
  %3779 = vmatpush1.bf16.msra.mxu0 %v2651
  %3780 = vmatprep.subr.bf16.mxu0 %v2656
  %3781 = vmatpush1.bf16.msra.mxu0 %v2655
  %3782 = vmatprep.subr.bf16.mxu0 %v2660
  %3783 = vmatpush1.bf16.msra.mxu0 %v2659
  %3784 = vmatprep.subr.bf16.mxu0 %v2664
  %3785 = vmatpush1.bf16.msra.mxu0 %v2663
  %3786 = vmatprep.subr.bf16.mxu0 %v2668
  %3787 = vmatpush1.bf16.msra.mxu0 %v2667
  %3788 = vmatprep.subr.bf16.mxu0 %v2672
  %3789 = vmatpush1.bf16.msra.mxu0 %v2671
  %3790 = vmatprep.subr.bf16.mxu0 %v2676
  %3791 = vmatpush1.bf16.msra.mxu0 %v2675
  %3792 = vmatprep.subr.bf16.mxu0 %v2680
  %3793 = vmatpush1.bf16.msra.mxu0 %v2679
  %3794 = vmatprep.subr.bf16.mxu0 %v2684
  %3795 = vmatpush1.bf16.msra.mxu0 %v2683
  %3796 = vmatprep.mubr.bf16.mxu0 %v762
  %3797 = vmatmul.mubr.bf16.gmra.mrb[0].mxu0 %v761
  %v3798 = vpop.f32.mrb[0].mxu0
  %v3799 = vadd.f32 %v3746, %v3798
  %v3800 = vpop.f32.mrb[0].mxu0
  %v3801 = vadd.f32 %v3748, %v3800
  %v3802 = vpop.f32.mrb[0].mxu0
  %v3803 = vadd.f32 %v3750, %v3802
  %v3804 = vpop.f32.mrb[0].mxu0
  %v3805 = vadd.f32 %v3752, %v3804
  %3806 = vmatprep.mubr.bf16.mxu0 %v780
  %3807 = vmatmul.mubr.bf16.gmra.mrb[0].mxu0 %v779
  %v3808 = vpop.f32.mrb[0].mxu0
  %v3809 = vadd.f32 %v3756, %v3808
  %v3810 = vpop.f32.mrb[0].mxu0
  %v3811 = vadd.f32 %v3758, %v3810
  %v3812 = vpop.f32.mrb[0].mxu0
  %v3813 = vadd.f32 %v3760, %v3812
  %v3814 = vpop.f32.mrb[0].mxu0
  %v3815 = vadd.f32 %v3762, %v3814
  %3816 = vdwg.mxu0
  %3817 = vmatprep.subr.bf16.mxu0 %v2688
  %3818 = vmatpush1.bf16.msra.mxu0 %v2687
  %3819 = vmatprep.subr.bf16.mxu0 %v2692
  %3820 = vmatpush1.bf16.msra.mxu0 %v2691
  %3821 = vmatprep.subr.bf16.mxu0 %v2696
  %3822 = vmatpush1.bf16.msra.mxu0 %v2695
  %3823 = vmatprep.subr.bf16.mxu0 %v2700
  %3824 = vmatpush1.bf16.msra.mxu0 %v2699
  %3825 = vmatprep.subr.bf16.mxu0 %v2704
  %3826 = vmatpush1.bf16.msra.mxu0 %v2703
  %3827 = vmatprep.subr.bf16.mxu0 %v2708
  %3828 = vmatpush1.bf16.msra.mxu0 %v2707
  %3829 = vmatprep.subr.bf16.mxu0 %v2712
  %3830 = vmatpush1.bf16.msra.mxu0 %v2711
  %3831 = vmatprep.subr.bf16.mxu0 %v2716
  %3832 = vmatpush1.bf16.msra.mxu0 %v2715
  %3833 = vmatprep.subr.bf16.mxu0 %v2720
  %3834 = vmatpush1.bf16.msra.mxu0 %v2719
  %3835 = vmatprep.subr.bf16.mxu0 %v2724
  %3836 = vmatpush1.bf16.msra.mxu0 %v2723
  %3837 = vmatprep.subr.bf16.mxu0 %v2728
  %3838 = vmatpush1.bf16.msra.mxu0 %v2727
  %3839 = vmatprep.subr.bf16.mxu0 %v2732
  %3840 = vmatpush1.bf16.msra.mxu0 %v2731
  %3841 = vmatprep.subr.bf16.mxu0 %v2736
  %3842 = vmatpush1.bf16.msra.mxu0 %v2735
  %3843 = vmatprep.subr.bf16.mxu0 %v2740
  %3844 = vmatpush1.bf16.msra.mxu0 %v2739
  %3845 = vmatprep.subr.bf16.mxu0 %v2744
  %3846 = vmatpush1.bf16.msra.mxu0 %v2743
  %3847 = vmatprep.subr.bf16.mxu0 %v2748
  %3848 = vmatpush1.bf16.msra.mxu0 %v2747
  %3849 = vmatprep.mubr.bf16.mxu0 %v764
  %3850 = vmatmul.mubr.bf16.gmra.mrb[0].mxu0 %v763
  %v3851 = vpop.f32.mrb[0].mxu0
  %v3852 = vadd.f32 %v3799, %v3851
  %v3853 = vpop.f32.mrb[0].mxu0
  %v3854 = vadd.f32 %v3801, %v3853
  %v3855 = vpop.f32.mrb[0].mxu0
  %v3856 = vadd.f32 %v3803, %v3855
  %v3857 = vpop.f32.mrb[0].mxu0
  %v3858 = vadd.f32 %v3805, %v3857
  %3859 = vmatprep.mubr.bf16.mxu0 %v782
  %3860 = vmatmul.mubr.bf16.gmra.mrb[0].mxu0 %v781
  %v3861 = vpop.f32.mrb[0].mxu0
  %v3862 = vadd.f32 %v3809, %v3861
  %v3863 = vpop.f32.mrb[0].mxu0
  %v3864 = vadd.f32 %v3811, %v3863
  %v3865 = vpop.f32.mrb[0].mxu0
  %v3866 = vadd.f32 %v3813, %v3865
  %v3867 = vpop.f32.mrb[0].mxu0
  %v3868 = vadd.f32 %v3815, %v3867
  %3869 = vdwg.mxu0
  %3870 = vmatprep.subr.bf16.mxu0 %v2752
  %3871 = vmatpush1.bf16.msra.mxu0 %v2751
  %3872 = vmatprep.subr.bf16.mxu0 %v2756
  %3873 = vmatpush1.bf16.msra.mxu0 %v2755
  %3874 = vmatprep.subr.bf16.mxu0 %v2760
  %3875 = vmatpush1.bf16.msra.mxu0 %v2759
  %3876 = vmatprep.subr.bf16.mxu0 %v2764
  %3877 = vmatpush1.bf16.msra.mxu0 %v2763
  %3878 = vmatprep.subr.bf16.mxu0 %v2768
  %3879 = vmatpush1.bf16.msra.mxu0 %v2767
  %3880 = vmatprep.subr.bf16.mxu0 %v2772
  %3881 = vmatpush1.bf16.msra.mxu0 %v2771
  %3882 = vmatprep.subr.bf16.mxu0 %v2776
  %3883 = vmatpush1.bf16.msra.mxu0 %v2775
  %3884 = vmatprep.subr.bf16.mxu0 %v2780
  %3885 = vmatpush1.bf16.msra.mxu0 %v2779
  %3886 = vmatprep.subr.bf16.mxu0 %v2784
  %3887 = vmatpush1.bf16.msra.mxu0 %v2783
  %3888 = vmatprep.subr.bf16.mxu0 %v2788
  %3889 = vmatpush1.bf16.msra.mxu0 %v2787
  %3890 = vmatprep.subr.bf16.mxu0 %v2792
  %3891 = vmatpush1.bf16.msra.mxu0 %v2791
  %3892 = vmatprep.subr.bf16.mxu0 %v2796
  %3893 = vmatpush1.bf16.msra.mxu0 %v2795
  %3894 = vmatprep.subr.bf16.mxu0 %v2800
  %3895 = vmatpush1.bf16.msra.mxu0 %v2799
  %3896 = vmatprep.subr.bf16.mxu0 %v2804
  %3897 = vmatpush1.bf16.msra.mxu0 %v2803
  %3898 = vmatprep.subr.bf16.mxu0 %v2808
  %3899 = vmatpush1.bf16.msra.mxu0 %v2807
  %3900 = vmatprep.subr.bf16.mxu0 %v2812
  %3901 = vmatpush1.bf16.msra.mxu0 %v2811
  %3902 = vmatprep.mubr.bf16.mxu0 %v766
  %3903 = vmatmul.mubr.bf16.gmra.mrb[0].mxu0 %v765
  %v3904 = vpop.f32.mrb[0].mxu0
  %v3905 = vadd.f32 %v3852, %v3904
  %v3906 = vpop.f32.mrb[0].mxu0
  %v3907 = vadd.f32 %v3854, %v3906
  %v3908 = vpop.f32.mrb[0].mxu0
  %v3909 = vadd.f32 %v3856, %v3908
  %v3910 = vpop.f32.mrb[0].mxu0
  %v3911 = vadd.f32 %v3858, %v3910
  %3912 = vmatprep.mubr.bf16.mxu0 %v784
  %3913 = vmatmul.mubr.bf16.gmra.mrb[0].mxu0 %v783
  %v3914 = vpop.f32.mrb[0].mxu0
  %v3915 = vadd.f32 %v3862, %v3914
  %v3916 = vpop.f32.mrb[0].mxu0
  %v3917 = vadd.f32 %v3864, %v3916
  %v3918 = vpop.f32.mrb[0].mxu0
  %v3919 = vadd.f32 %v3866, %v3918
  %v3920 = vpop.f32.mrb[0].mxu0
  %v3921 = vadd.f32 %v3868, %v3920
  %3922 = vdwg.mxu0
  %3923 = vmatprep.subr.bf16.mxu0 %v2816
  %3924 = vmatpush1.bf16.msra.mxu0 %v2815
  %3925 = vmatprep.subr.bf16.mxu0 %v2820
  %3926 = vmatpush1.bf16.msra.mxu0 %v2819
  %3927 = vmatprep.subr.bf16.mxu0 %v2824
  %3928 = vmatpush1.bf16.msra.mxu0 %v2823
  %3929 = vmatprep.subr.bf16.mxu0 %v2828
  %3930 = vmatpush1.bf16.msra.mxu0 %v2827
  %3931 = vmatprep.subr.bf16.mxu0 %v2832
  %3932 = vmatpush1.bf16.msra.mxu0 %v2831
  %3933 = vmatprep.subr.bf16.mxu0 %v2836
  %3934 = vmatpush1.bf16.msra.mxu0 %v2835
  %3935 = vmatprep.subr.bf16.mxu0 %v2840
  %3936 = vmatpush1.bf16.msra.mxu0 %v2839
  %3937 = vmatprep.subr.bf16.mxu0 %v2844
  %3938 = vmatpush1.bf16.msra.mxu0 %v2843
  %3939 = vmatprep.subr.bf16.mxu0 %v2848
  %3940 = vmatpush1.bf16.msra.mxu0 %v2847
  %3941 = vmatprep.subr.bf16.mxu0 %v2852
  %3942 = vmatpush1.bf16.msra.mxu0 %v2851
  %3943 = vmatprep.subr.bf16.mxu0 %v2856
  %3944 = vmatpush1.bf16.msra.mxu0 %v2855
  %3945 = vmatprep.subr.bf16.mxu0 %v2860
  %3946 = vmatpush1.bf16.msra.mxu0 %v2859
  %3947 = vmatprep.subr.bf16.mxu0 %v2864
  %3948 = vmatpush1.bf16.msra.mxu0 %v2863
  %3949 = vmatprep.subr.bf16.mxu0 %v2868
  %3950 = vmatpush1.bf16.msra.mxu0 %v2867
  %3951 = vmatprep.subr.bf16.mxu0 %v2872
  %3952 = vmatpush1.bf16.msra.mxu0 %v2871
  %3953 = vmatprep.subr.bf16.mxu0 %v2876
  %3954 = vmatpush1.bf16.msra.mxu0 %v2875
  %3955 = vmatprep.mubr.bf16.mxu0 %v768
  %3956 = vmatmul.mubr.bf16.gmra.mrb[0].mxu0 %v767
  %v3957 = vpop.f32.mrb[0].mxu0
  %v3958 = vadd.f32 %v3905, %v3957
  %v3959 = vpop.f32.mrb[0].mxu0
  %v3960 = vadd.f32 %v3907, %v3959
  %v3961 = vpop.f32.mrb[0].mxu0
  %v3962 = vadd.f32 %v3909, %v3961
  %v3963 = vpop.f32.mrb[0].mxu0
  %v3964 = vadd.f32 %v3911, %v3963
  %3965 = vmatprep.mubr.bf16.mxu0 %v786
  %3966 = vmatmul.mubr.bf16.gmra.mrb[0].mxu0 %v785
  %v3967 = vpop.f32.mrb[0].mxu0
  %v3968 = vadd.f32 %v3915, %v3967
  %v3969 = vpop.f32.mrb[0].mxu0
  %v3970 = vadd.f32 %v3917, %v3969
  %v3971 = vpop.f32.mrb[0].mxu0
  %v3972 = vadd.f32 %v3919, %v3971
  %v3973 = vpop.f32.mrb[0].mxu0
  %v3974 = vadd.f32 %v3921, %v3973
  %3975 = vdwg.mxu0
  %3976 = vmatprep.subr.bf16.mxu0 %v2880
  %3977 = vmatpush1.bf16.msra.mxu0 %v2879
  %3978 = vmatprep.subr.bf16.mxu0 %v2884
  %3979 = vmatpush1.bf16.msra.mxu0 %v2883
  %3980 = vmatprep.subr.bf16.mxu0 %v2888
  %3981 = vmatpush1.bf16.msra.mxu0 %v2887
  %3982 = vmatprep.subr.bf16.mxu0 %v2892
  %3983 = vmatpush1.bf16.msra.mxu0 %v2891
  %3984 = vmatprep.subr.bf16.mxu0 %v2896
  %3985 = vmatpush1.bf16.msra.mxu0 %v2895
  %3986 = vmatprep.subr.bf16.mxu0 %v2900
  %3987 = vmatpush1.bf16.msra.mxu0 %v2899
  %3988 = vmatprep.subr.bf16.mxu0 %v2904
  %3989 = vmatpush1.bf16.msra.mxu0 %v2903
  %3990 = vmatprep.subr.bf16.mxu0 %v2908
  %3991 = vmatpush1.bf16.msra.mxu0 %v2907
  %3992 = vmatprep.subr.bf16.mxu0 %v2912
  %3993 = vmatpush1.bf16.msra.mxu0 %v2911
  %3994 = vmatprep.subr.bf16.mxu0 %v2916
  %3995 = vmatpush1.bf16.msra.mxu0 %v2915
  %3996 = vmatprep.subr.bf16.mxu0 %v2920
  %3997 = vmatpush1.bf16.msra.mxu0 %v2919
  %3998 = vmatprep.subr.bf16.mxu0 %v2924
  %3999 = vmatpush1.bf16.msra.mxu0 %v2923
  %4000 = vmatprep.subr.bf16.mxu0 %v2928
  %4001 = vmatpush1.bf16.msra.mxu0 %v2927
  %4002 = vmatprep.subr.bf16.mxu0 %v2932
  %4003 = vmatpush1.bf16.msra.mxu0 %v2931
  %4004 = vmatprep.subr.bf16.mxu0 %v2936
  %4005 = vmatpush1.bf16.msra.mxu0 %v2935
  %4006 = vmatprep.subr.bf16.mxu0 %v2940
  %4007 = vmatpush1.bf16.msra.mxu0 %v2939
  %4008 = vmatprep.mubr.bf16.mxu0 %v770
  %4009 = vmatmul.mubr.bf16.gmra.mrb[0].mxu0 %v769
  %v4010 = vpop.f32.mrb[0].mxu0
  %v4011 = vadd.f32 %v3958, %v4010
  %v4012 = vpop.f32.mrb[0].mxu0
  %v4013 = vadd.f32 %v3960, %v4012
  %v4014 = vpop.f32.mrb[0].mxu0
  %v4015 = vadd.f32 %v3962, %v4014
  %v4016 = vpop.f32.mrb[0].mxu0
  %v4017 = vadd.f32 %v3964, %v4016
  %4018 = vmatprep.mubr.bf16.mxu0 %v788
  %4019 = vmatmul.mubr.bf16.gmra.mrb[0].mxu0 %v787
  %v4020 = vpop.f32.mrb[0].mxu0
  %v4021 = vadd.f32 %v3968, %v4020
  %v4022 = vpop.f32.mrb[0].mxu0
  %v4023 = vadd.f32 %v3970, %v4022
  %v4024 = vpop.f32.mrb[0].mxu0
  %v4025 = vadd.f32 %v3972, %v4024
  %v4026 = vpop.f32.mrb[0].mxu0
  %v4027 = vadd.f32 %v3974, %v4026
  %4028 = vdwg.mxu0
  %4029 = vmatprep.subr.bf16.mxu0 %v2944
  %4030 = vmatpush1.bf16.msra.mxu0 %v2943
  %4031 = vmatprep.subr.bf16.mxu0 %v2948
  %4032 = vmatpush1.bf16.msra.mxu0 %v2947
  %4033 = vmatprep.subr.bf16.mxu0 %v2952
  %4034 = vmatpush1.bf16.msra.mxu0 %v2951
  %4035 = vmatprep.subr.bf16.mxu0 %v2956
  %4036 = vmatpush1.bf16.msra.mxu0 %v2955
  %4037 = vmatprep.subr.bf16.mxu0 %v2960
  %4038 = vmatpush1.bf16.msra.mxu0 %v2959
  %4039 = vmatprep.subr.bf16.mxu0 %v2964
  %4040 = vmatpush1.bf16.msra.mxu0 %v2963
  %4041 = vmatprep.subr.bf16.mxu0 %v2968
  %4042 = vmatpush1.bf16.msra.mxu0 %v2967
  %4043 = vmatprep.subr.bf16.mxu0 %v2972
  %4044 = vmatpush1.bf16.msra.mxu0 %v2971
  %4045 = vmatprep.subr.bf16.mxu0 %v2976
  %4046 = vmatpush1.bf16.msra.mxu0 %v2975
  %4047 = vmatprep.subr.bf16.mxu0 %v2980
  %4048 = vmatpush1.bf16.msra.mxu0 %v2979
  %4049 = vmatprep.subr.bf16.mxu0 %v2984
  %4050 = vmatpush1.bf16.msra.mxu0 %v2983
  %4051 = vmatprep.subr.bf16.mxu0 %v2988
  %4052 = vmatpush1.bf16.msra.mxu0 %v2987
  %4053 = vmatprep.subr.bf16.mxu0 %v2992
  %4054 = vmatpush1.bf16.msra.mxu0 %v2991
  %4055 = vmatprep.subr.bf16.mxu0 %v2996
  %4056 = vmatpush1.bf16.msra.mxu0 %v2995
  %4057 = vmatprep.subr.bf16.mxu0 %v3000
  %4058 = vmatpush1.bf16.msra.mxu0 %v2999
  %4059 = vmatprep.subr.bf16.mxu0 %v3004
  %4060 = vmatpush1.bf16.msra.mxu0 %v3003
  %4061 = vmatprep.mubr.bf16.mxu0 %v772
  %4062 = vmatmul.mubr.bf16.gmra.mrb[0].mxu0 %v771
  %v4063 = vpop.f32.mrb[0].mxu0
  %v4064 = vadd.f32 %v4011, %v4063
  %v4065 = vpop.f32.mrb[0].mxu0
  %v4066 = vadd.f32 %v4013, %v4065
  %v4067 = vpop.f32.mrb[0].mxu0
  %v4068 = vadd.f32 %v4015, %v4067
  %v4069 = vpop.f32.mrb[0].mxu0
  %v4070 = vadd.f32 %v4017, %v4069
  %4071 = vmatprep.mubr.bf16.mxu0 %v790
  %4072 = vmatmul.mubr.bf16.gmra.mrb[0].mxu0 %v789
  %v4073 = vpop.f32.mrb[0].mxu0
  %v4074 = vadd.f32 %v4021, %v4073
  %v4075 = vpop.f32.mrb[0].mxu0
  %v4076 = vadd.f32 %v4023, %v4075
  %v4077 = vpop.f32.mrb[0].mxu0
  %v4078 = vadd.f32 %v4025, %v4077
  %v4079 = vpop.f32.mrb[0].mxu0
  %v4080 = vadd.f32 %v4027, %v4079
  %4081 = vdwg.mxu0
  %4082 = vmatprep.subr.bf16.mxu0 %v3008
  %4083 = vmatpush1.bf16.msra.mxu0 %v3007
  %4084 = vmatprep.subr.bf16.mxu0 %v3012
  %4085 = vmatpush1.bf16.msra.mxu0 %v3011
  %4086 = vmatprep.subr.bf16.mxu0 %v3016
  %4087 = vmatpush1.bf16.msra.mxu0 %v3015
  %4088 = vmatprep.subr.bf16.mxu0 %v3020
  %4089 = vmatpush1.bf16.msra.mxu0 %v3019
  %4090 = vmatprep.subr.bf16.mxu0 %v3024
  %4091 = vmatpush1.bf16.msra.mxu0 %v3023
  %4092 = vmatprep.subr.bf16.mxu0 %v3028
  %4093 = vmatpush1.bf16.msra.mxu0 %v3027
  %4094 = vmatprep.subr.bf16.mxu0 %v3032
  %4095 = vmatpush1.bf16.msra.mxu0 %v3031
  %4096 = vmatprep.subr.bf16.mxu0 %v3036
  %4097 = vmatpush1.bf16.msra.mxu0 %v3035
  %4098 = vmatprep.subr.bf16.mxu0 %v3040
  %4099 = vmatpush1.bf16.msra.mxu0 %v3039
  %4100 = vmatprep.subr.bf16.mxu0 %v3044
  %4101 = vmatpush1.bf16.msra.mxu0 %v3043
  %4102 = vmatprep.subr.bf16.mxu0 %v3048
  %4103 = vmatpush1.bf16.msra.mxu0 %v3047
  %4104 = vmatprep.subr.bf16.mxu0 %v3052
  %4105 = vmatpush1.bf16.msra.mxu0 %v3051
  %4106 = vmatprep.subr.bf16.mxu0 %v3056
  %4107 = vmatpush1.bf16.msra.mxu0 %v3055
  %4108 = vmatprep.subr.bf16.mxu0 %v3060
  %4109 = vmatpush1.bf16.msra.mxu0 %v3059
  %4110 = vmatprep.subr.bf16.mxu0 %v3064
  %4111 = vmatpush1.bf16.msra.mxu0 %v3063
  %4112 = vmatprep.subr.bf16.mxu0 %v3068
  %4113 = vmatpush1.bf16.msra.mxu0 %v3067
  %4114 = vmatprep.mubr.bf16.mxu0 %v774
  %4115 = vmatmul.mubr.bf16.gmra.mrb[0].mxu0 %v773
  %v4116 = vpop.f32.mrb[0].mxu0
  %v4117 = vadd.f32 %v4064, %v4116
  %v4118 = vpop.f32.mrb[0].mxu0
  %v4119 = vadd.f32 %v4066, %v4118
  %v4120 = vpop.f32.mrb[0].mxu0
  %v4121 = vadd.f32 %v4068, %v4120
  %v4122 = vpop.f32.mrb[0].mxu0
  %v4123 = vadd.f32 %v4070, %v4122
  %4124 = vmatprep.mubr.bf16.mxu0 %v792
  %4125 = vmatmul.mubr.bf16.gmra.mrb[0].mxu0 %v791
  %v4126 = vpop.f32.mrb[0].mxu0
  %v4127 = vadd.f32 %v4074, %v4126
  %v4128 = vpop.f32.mrb[0].mxu0
  %v4129 = vadd.f32 %v4076, %v4128
  %v4130 = vpop.f32.mrb[0].mxu0
  %v4131 = vadd.f32 %v4078, %v4130
  %v4132 = vpop.f32.mrb[0].mxu0
  %v4133 = vadd.f32 %v4080, %v4132
  %4134 = vdwg.mxu0
  %4135 = vmatprep.subr.bf16.mxu0 %v3072
  %4136 = vmatpush1.bf16.msra.mxu0 %v3071
  %4137 = vmatprep.subr.bf16.mxu0 %v3076
  %4138 = vmatpush1.bf16.msra.mxu0 %v3075
  %4139 = vmatprep.subr.bf16.mxu0 %v3080
  %4140 = vmatpush1.bf16.msra.mxu0 %v3079
  %4141 = vmatprep.subr.bf16.mxu0 %v3084
  %4142 = vmatpush1.bf16.msra.mxu0 %v3083
  %4143 = vmatprep.subr.bf16.mxu0 %v3088
  %4144 = vmatpush1.bf16.msra.mxu0 %v3087
  %4145 = vmatprep.subr.bf16.mxu0 %v3092
  %4146 = vmatpush1.bf16.msra.mxu0 %v3091
  %4147 = vmatprep.subr.bf16.mxu0 %v3096
  %4148 = vmatpush1.bf16.msra.mxu0 %v3095
  %4149 = vmatprep.subr.bf16.mxu0 %v3100
  %4150 = vmatpush1.bf16.msra.mxu0 %v3099
  %4151 = vmatprep.subr.bf16.mxu0 %v3104
  %4152 = vmatpush1.bf16.msra.mxu0 %v3103
  %4153 = vmatprep.subr.bf16.mxu0 %v3108
  %4154 = vmatpush1.bf16.msra.mxu0 %v3107
  %4155 = vmatprep.subr.bf16.mxu0 %v3112
  %4156 = vmatpush1.bf16.msra.mxu0 %v3111
  %4157 = vmatprep.subr.bf16.mxu0 %v3116
  %4158 = vmatpush1.bf16.msra.mxu0 %v3115
  %4159 = vmatprep.subr.bf16.mxu0 %v3120
  %4160 = vmatpush1.bf16.msra.mxu0 %v3119
  %4161 = vmatprep.subr.bf16.mxu0 %v3124
  %4162 = vmatpush1.bf16.msra.mxu0 %v3123
  %4163 = vmatprep.subr.bf16.mxu0 %v3128
  %4164 = vmatpush1.bf16.msra.mxu0 %v3127
  %4165 = vmatprep.subr.bf16.mxu0 %v3132
  %4166 = vmatpush1.bf16.msra.mxu0 %v3131
  %4167 = vmatprep.mubr.bf16.mxu0 %v776
  %4168 = vmatmul.mubr.bf16.gmra.mrb[0].mxu0 %v775
  %v4169 = vpop.f32.mrb[0].mxu0
  %v4170 = vadd.f32 %v4117, %v4169
  %v4171 = vpop.f32.mrb[0].mxu0
  %v4172 = vadd.f32 %v4119, %v4171
  %v4173 = vpop.f32.mrb[0].mxu0
  %v4174 = vadd.f32 %v4121, %v4173
  %v4175 = vpop.f32.mrb[0].mxu0
  %v4176 = vadd.f32 %v4123, %v4175
  %4177 = vmatprep.mubr.bf16.mxu0 %v794
  %4178 = vmatmul.mubr.bf16.gmra.mrb[0].mxu0 %v793
  %v4179 = vpop.f32.mrb[0].mxu0
  %v4180 = vadd.f32 %v4127, %v4179
  %v4181 = vpop.f32.mrb[0].mxu0
  %v4182 = vadd.f32 %v4129, %v4181
  %v4183 = vpop.f32.mrb[0].mxu0
  %v4184 = vadd.f32 %v4131, %v4183
  %v4185 = vpop.f32.mrb[0].mxu0
  %v4186 = vadd.f32 %v4133, %v4185
  %4187 = vdwg.mxu0
  %4188 = vmatprep.subr.bf16.mxu0 %v2562
  %4189 = vmatpush1.bf16.msra.mxu0 %v2561
  %4190 = vmatprep.subr.bf16.mxu0 %v2566
  %4191 = vmatpush1.bf16.msra.mxu0 %v2565
  %4192 = vmatprep.subr.bf16.mxu0 %v2570
  %4193 = vmatpush1.bf16.msra.mxu0 %v2569
  %4194 = vmatprep.subr.bf16.mxu0 %v2574
  %4195 = vmatpush1.bf16.msra.mxu0 %v2573
  %4196 = vmatprep.subr.bf16.mxu0 %v2578
  %4197 = vmatpush1.bf16.msra.mxu0 %v2577
  %4198 = vmatprep.subr.bf16.mxu0 %v2582
  %4199 = vmatpush1.bf16.msra.mxu0 %v2581
  %4200 = vmatprep.subr.bf16.mxu0 %v2586
  %4201 = vmatpush1.bf16.msra.mxu0 %v2585
  %4202 = vmatprep.subr.bf16.mxu0 %v2590
  %4203 = vmatpush1.bf16.msra.mxu0 %v2589
  %4204 = vmatprep.subr.bf16.mxu0 %v2594
  %4205 = vmatpush1.bf16.msra.mxu0 %v2593
  %4206 = vmatprep.subr.bf16.mxu0 %v2598
  %4207 = vmatpush1.bf16.msra.mxu0 %v2597
  %4208 = vmatprep.subr.bf16.mxu0 %v2602
  %4209 = vmatpush1.bf16.msra.mxu0 %v2601
  %4210 = vmatprep.subr.bf16.mxu0 %v2606
  %4211 = vmatpush1.bf16.msra.mxu0 %v2605
  %4212 = vmatprep.subr.bf16.mxu0 %v2610
  %4213 = vmatpush1.bf16.msra.mxu0 %v2609
  %4214 = vmatprep.subr.bf16.mxu0 %v2614
  %4215 = vmatpush1.bf16.msra.mxu0 %v2613
  %4216 = vmatprep.subr.bf16.mxu0 %v2618
  %4217 = vmatpush1.bf16.msra.mxu0 %v2617
  %4218 = vmatprep.subr.bf16.mxu0 %v2622
  %4219 = vmatpush1.bf16.msra.mxu0 %v2621
  %4220 = vmatprep.mubr.bf16.mxu0 %v760
  %4221 = vmatmul.mubr.bf16.gmra.mrb[0].mxu0 %v759
  %v4222 = vpop.f32.mrb[0].mxu0
  %v4223 = vadd.f32 %v642, %v4222
  %v4224 = vpop.f32.mrb[0].mxu0
  %v4225 = vadd.f32 %v646, %v4224
  %v4226 = vpop.f32.mrb[0].mxu0
  %v4227 = vadd.f32 %v642, %v4226
  %v4228 = vpop.f32.mrb[0].mxu0
  %v4229 = vadd.f32 %v646, %v4228
  %4230 = vmatprep.mubr.bf16.mxu0 %v778
  %4231 = vmatmul.mubr.bf16.gmra.mrb[0].mxu0 %v777
  %v4232 = vpop.f32.mrb[0].mxu0
  %v4233 = vadd.f32 %v642, %v4232
  %v4234 = vpop.f32.mrb[0].mxu0
  %v4235 = vadd.f32 %v646, %v4234
  %v4236 = vpop.f32.mrb[0].mxu0
  %v4237 = vadd.f32 %v642, %v4236
  %v4238 = vpop.f32.mrb[0].mxu0
  %v4239 = vadd.f32 %v646, %v4238
  %4240 = vdwg.mxu0
  %4241 = vmatprep.subr.bf16.mxu0 %v2626
  %4242 = vmatpush1.bf16.msra.mxu0 %v2625
  %4243 = vmatprep.subr.bf16.mxu0 %v2630
  %4244 = vmatpush1.bf16.msra.mxu0 %v2629
  %4245 = vmatprep.subr.bf16.mxu0 %v2634
  %4246 = vmatpush1.bf16.msra.mxu0 %v2633
  %4247 = vmatprep.subr.bf16.mxu0 %v2638
  %4248 = vmatpush1.bf16.msra.mxu0 %v2637
  %4249 = vmatprep.subr.bf16.mxu0 %v2642
  %4250 = vmatpush1.bf16.msra.mxu0 %v2641
  %4251 = vmatprep.subr.bf16.mxu0 %v2646
  %4252 = vmatpush1.bf16.msra.mxu0 %v2645
  %4253 = vmatprep.subr.bf16.mxu0 %v2650
  %4254 = vmatpush1.bf16.msra.mxu0 %v2649
  %4255 = vmatprep.subr.bf16.mxu0 %v2654
  %4256 = vmatpush1.bf16.msra.mxu0 %v2653
  %4257 = vmatprep.subr.bf16.mxu0 %v2658
  %4258 = vmatpush1.bf16.msra.mxu0 %v2657
  %4259 = vmatprep.subr.bf16.mxu0 %v2662
  %4260 = vmatpush1.bf16.msra.mxu0 %v2661
  %4261 = vmatprep.subr.bf16.mxu0 %v2666
  %4262 = vmatpush1.bf16.msra.mxu0 %v2665
  %4263 = vmatprep.subr.bf16.mxu0 %v2670
  %4264 = vmatpush1.bf16.msra.mxu0 %v2669
  %4265 = vmatprep.subr.bf16.mxu0 %v2674
  %4266 = vmatpush1.bf16.msra.mxu0 %v2673
  %4267 = vmatprep.subr.bf16.mxu0 %v2678
  %4268 = vmatpush1.bf16.msra.mxu0 %v2677
  %4269 = vmatprep.subr.bf16.mxu0 %v2682
  %4270 = vmatpush1.bf16.msra.mxu0 %v2681
  %4271 = vmatprep.subr.bf16.mxu0 %v2686
  %4272 = vmatpush1.bf16.msra.mxu0 %v2685
  %4273 = vmatprep.mubr.bf16.mxu0 %v762
  %4274 = vmatmul.mubr.bf16.gmra.mrb[0].mxu0 %v761
  %v4275 = vpop.f32.mrb[0].mxu0
  %v4276 = vadd.f32 %v4223, %v4275
  %v4277 = vpop.f32.mrb[0].mxu0
  %v4278 = vadd.f32 %v4225, %v4277
  %v4279 = vpop.f32.mrb[0].mxu0
  %v4280 = vadd.f32 %v4227, %v4279
  %v4281 = vpop.f32.mrb[0].mxu0
  %v4282 = vadd.f32 %v4229, %v4281
  %4283 = vmatprep.mubr.bf16.mxu0 %v780
  %4284 = vmatmul.mubr.bf16.gmra.mrb[0].mxu0 %v779
  %v4285 = vpop.f32.mrb[0].mxu0
  %v4286 = vadd.f32 %v4233, %v4285
  %v4287 = vpop.f32.mrb[0].mxu0
  %v4288 = vadd.f32 %v4235, %v4287
  %v4289 = vpop.f32.mrb[0].mxu0
  %v4290 = vadd.f32 %v4237, %v4289
  %v4291 = vpop.f32.mrb[0].mxu0
  %v4292 = vadd.f32 %v4239, %v4291
  %4293 = vdwg.mxu0
  %4294 = vmatprep.subr.bf16.mxu0 %v2690
  %4295 = vmatpush1.bf16.msra.mxu0 %v2689
  %4296 = vmatprep.subr.bf16.mxu0 %v2694
  %4297 = vmatpush1.bf16.msra.mxu0 %v2693
  %4298 = vmatprep.subr.bf16.mxu0 %v2698
  %4299 = vmatpush1.bf16.msra.mxu0 %v2697
  %4300 = vmatprep.subr.bf16.mxu0 %v2702
  %4301 = vmatpush1.bf16.msra.mxu0 %v2701
  %4302 = vmatprep.subr.bf16.mxu0 %v2706
  %4303 = vmatpush1.bf16.msra.mxu0 %v2705
  %4304 = vmatprep.subr.bf16.mxu0 %v2710
  %4305 = vmatpush1.bf16.msra.mxu0 %v2709
  %4306 = vmatprep.subr.bf16.mxu0 %v2714
  %4307 = vmatpush1.bf16.msra.mxu0 %v2713
  %4308 = vmatprep.subr.bf16.mxu0 %v2718
  %4309 = vmatpush1.bf16.msra.mxu0 %v2717
  %4310 = vmatprep.subr.bf16.mxu0 %v2722
  %4311 = vmatpush1.bf16.msra.mxu0 %v2721
  %4312 = vmatprep.subr.bf16.mxu0 %v2726
  %4313 = vmatpush1.bf16.msra.mxu0 %v2725
  %4314 = vmatprep.subr.bf16.mxu0 %v2730
  %4315 = vmatpush1.bf16.msra.mxu0 %v2729
  %4316 = vmatprep.subr.bf16.mxu0 %v2734
  %4317 = vmatpush1.bf16.msra.mxu0 %v2733
  %4318 = vmatprep.subr.bf16.mxu0 %v2738
  %4319 = vmatpush1.bf16.msra.mxu0 %v2737
  %4320 = vmatprep.subr.bf16.mxu0 %v2742
  %4321 = vmatpush1.bf16.msra.mxu0 %v2741
  %4322 = vmatprep.subr.bf16.mxu0 %v2746
  %4323 = vmatpush1.bf16.msra.mxu0 %v2745
  %4324 = vmatprep.subr.bf16.mxu0 %v2750
  %4325 = vmatpush1.bf16.msra.mxu0 %v2749
  %4326 = vmatprep.mubr.bf16.mxu0 %v764
  %4327 = vmatmul.mubr.bf16.gmra.mrb[0].mxu0 %v763
  %v4328 = vpop.f32.mrb[0].mxu0
  %v4329 = vadd.f32 %v4276, %v4328
  %v4330 = vpop.f32.mrb[0].mxu0
  %v4331 = vadd.f32 %v4278, %v4330
  %v4332 = vpop.f32.mrb[0].mxu0
  %v4333 = vadd.f32 %v4280, %v4332
  %v4334 = vpop.f32.mrb[0].mxu0
  %v4335 = vadd.f32 %v4282, %v4334
  %4336 = vmatprep.mubr.bf16.mxu0 %v782
  %4337 = vmatmul.mubr.bf16.gmra.mrb[0].mxu0 %v781
  %v4338 = vpop.f32.mrb[0].mxu0
  %v4339 = vadd.f32 %v4286, %v4338
  %v4340 = vpop.f32.mrb[0].mxu0
  %v4341 = vadd.f32 %v4288, %v4340
  %v4342 = vpop.f32.mrb[0].mxu0
  %v4343 = vadd.f32 %v4290, %v4342
  %v4344 = vpop.f32.mrb[0].mxu0
  %v4345 = vadd.f32 %v4292, %v4344
  %4346 = vdwg.mxu0
  %4347 = vmatprep.subr.bf16.mxu0 %v2754
  %4348 = vmatpush1.bf16.msra.mxu0 %v2753
  %4349 = vmatprep.subr.bf16.mxu0 %v2758
  %4350 = vmatpush1.bf16.msra.mxu0 %v2757
  %4351 = vmatprep.subr.bf16.mxu0 %v2762
  %4352 = vmatpush1.bf16.msra.mxu0 %v2761
  %4353 = vmatprep.subr.bf16.mxu0 %v2766
  %4354 = vmatpush1.bf16.msra.mxu0 %v2765
  %4355 = vmatprep.subr.bf16.mxu0 %v2770
  %4356 = vmatpush1.bf16.msra.mxu0 %v2769
  %4357 = vmatprep.subr.bf16.mxu0 %v2774
  %4358 = vmatpush1.bf16.msra.mxu0 %v2773
  %4359 = vmatprep.subr.bf16.mxu0 %v2778
  %4360 = vmatpush1.bf16.msra.mxu0 %v2777
  %4361 = vmatprep.subr.bf16.mxu0 %v2782
  %4362 = vmatpush1.bf16.msra.mxu0 %v2781
  %4363 = vmatprep.subr.bf16.mxu0 %v2786
  %4364 = vmatpush1.bf16.msra.mxu0 %v2785
  %4365 = vmatprep.subr.bf16.mxu0 %v2790
  %4366 = vmatpush1.bf16.msra.mxu0 %v2789
  %4367 = vmatprep.subr.bf16.mxu0 %v2794
  %4368 = vmatpush1.bf16.msra.mxu0 %v2793
  %4369 = vmatprep.subr.bf16.mxu0 %v2798
  %4370 = vmatpush1.bf16.msra.mxu0 %v2797
  %4371 = vmatprep.subr.bf16.mxu0 %v2802
  %4372 = vmatpush1.bf16.msra.mxu0 %v2801
  %4373 = vmatprep.subr.bf16.mxu0 %v2806
  %4374 = vmatpush1.bf16.msra.mxu0 %v2805
  %4375 = vmatprep.subr.bf16.mxu0 %v2810
  %4376 = vmatpush1.bf16.msra.mxu0 %v2809
  %4377 = vmatprep.subr.bf16.mxu0 %v2814
  %4378 = vmatpush1.bf16.msra.mxu0 %v2813
  %4379 = vmatprep.mubr.bf16.mxu0 %v766
  %4380 = vmatmul.mubr.bf16.gmra.mrb[0].mxu0 %v765
  %v4381 = vpop.f32.mrb[0].mxu0
  %v4382 = vadd.f32 %v4329, %v4381
  %v4383 = vpop.f32.mrb[0].mxu0
  %v4384 = vadd.f32 %v4331, %v4383
  %v4385 = vpop.f32.mrb[0].mxu0
  %v4386 = vadd.f32 %v4333, %v4385
  %v4387 = vpop.f32.mrb[0].mxu0
  %v4388 = vadd.f32 %v4335, %v4387
  %4389 = vmatprep.mubr.bf16.mxu0 %v784
  %4390 = vmatmul.mubr.bf16.gmra.mrb[0].mxu0 %v783
  %v4391 = vpop.f32.mrb[0].mxu0
  %v4392 = vadd.f32 %v4339, %v4391
  %v4393 = vpop.f32.mrb[0].mxu0
  %v4394 = vadd.f32 %v4341, %v4393
  %v4395 = vpop.f32.mrb[0].mxu0
  %v4396 = vadd.f32 %v4343, %v4395
  %v4397 = vpop.f32.mrb[0].mxu0
  %v4398 = vadd.f32 %v4345, %v4397
  %4399 = vdwg.mxu0
  %4400 = vmatprep.subr.bf16.mxu0 %v2818
  %4401 = vmatpush1.bf16.msra.mxu0 %v2817
  %4402 = vmatprep.subr.bf16.mxu0 %v2822
  %4403 = vmatpush1.bf16.msra.mxu0 %v2821
  %4404 = vmatprep.subr.bf16.mxu0 %v2826
  %4405 = vmatpush1.bf16.msra.mxu0 %v2825
  %4406 = vmatprep.subr.bf16.mxu0 %v2830
  %4407 = vmatpush1.bf16.msra.mxu0 %v2829
  %4408 = vmatprep.subr.bf16.mxu0 %v2834
  %4409 = vmatpush1.bf16.msra.mxu0 %v2833
  %4410 = vmatprep.subr.bf16.mxu0 %v2838
  %4411 = vmatpush1.bf16.msra.mxu0 %v2837
  %4412 = vmatprep.subr.bf16.mxu0 %v2842
  %4413 = vmatpush1.bf16.msra.mxu0 %v2841
  %4414 = vmatprep.subr.bf16.mxu0 %v2846
  %4415 = vmatpush1.bf16.msra.mxu0 %v2845
  %4416 = vmatprep.subr.bf16.mxu0 %v2850
  %4417 = vmatpush1.bf16.msra.mxu0 %v2849
  %4418 = vmatprep.subr.bf16.mxu0 %v2854
  %4419 = vmatpush1.bf16.msra.mxu0 %v2853
  %4420 = vmatprep.subr.bf16.mxu0 %v2858
  %4421 = vmatpush1.bf16.msra.mxu0 %v2857
  %4422 = vmatprep.subr.bf16.mxu0 %v2862
  %4423 = vmatpush1.bf16.msra.mxu0 %v2861
  %4424 = vmatprep.subr.bf16.mxu0 %v2866
  %4425 = vmatpush1.bf16.msra.mxu0 %v2865
  %4426 = vmatprep.subr.bf16.mxu0 %v2870
  %4427 = vmatpush1.bf16.msra.mxu0 %v2869
  %4428 = vmatprep.subr.bf16.mxu0 %v2874
  %4429 = vmatpush1.bf16.msra.mxu0 %v2873
  %4430 = vmatprep.subr.bf16.mxu0 %v2878
  %4431 = vmatpush1.bf16.msra.mxu0 %v2877
  %4432 = vmatprep.mubr.bf16.mxu0 %v768
  %4433 = vmatmul.mubr.bf16.gmra.mrb[0].mxu0 %v767
  %v4434 = vpop.f32.mrb[0].mxu0
  %v4435 = vadd.f32 %v4382, %v4434
  %v4436 = vpop.f32.mrb[0].mxu0
  %v4437 = vadd.f32 %v4384, %v4436
  %v4438 = vpop.f32.mrb[0].mxu0
  %v4439 = vadd.f32 %v4386, %v4438
  %v4440 = vpop.f32.mrb[0].mxu0
  %v4441 = vadd.f32 %v4388, %v4440
  %4442 = vmatprep.mubr.bf16.mxu0 %v786
  %4443 = vmatmul.mubr.bf16.gmra.mrb[0].mxu0 %v785
  %v4444 = vpop.f32.mrb[0].mxu0
  %v4445 = vadd.f32 %v4392, %v4444
  %v4446 = vpop.f32.mrb[0].mxu0
  %v4447 = vadd.f32 %v4394, %v4446
  %v4448 = vpop.f32.mrb[0].mxu0
  %v4449 = vadd.f32 %v4396, %v4448
  %v4450 = vpop.f32.mrb[0].mxu0
  %v4451 = vadd.f32 %v4398, %v4450
  %4452 = vdwg.mxu0
  %4453 = vmatprep.subr.bf16.mxu0 %v2882
  %4454 = vmatpush1.bf16.msra.mxu0 %v2881
  %4455 = vmatprep.subr.bf16.mxu0 %v2886
  %4456 = vmatpush1.bf16.msra.mxu0 %v2885
  %4457 = vmatprep.subr.bf16.mxu0 %v2890
  %4458 = vmatpush1.bf16.msra.mxu0 %v2889
  %4459 = vmatprep.subr.bf16.mxu0 %v2894
  %4460 = vmatpush1.bf16.msra.mxu0 %v2893
  %4461 = vmatprep.subr.bf16.mxu0 %v2898
  %4462 = vmatpush1.bf16.msra.mxu0 %v2897
  %4463 = vmatprep.subr.bf16.mxu0 %v2902
  %4464 = vmatpush1.bf16.msra.mxu0 %v2901
  %4465 = vmatprep.subr.bf16.mxu0 %v2906
  %4466 = vmatpush1.bf16.msra.mxu0 %v2905
  %4467 = vmatprep.subr.bf16.mxu0 %v2910
  %4468 = vmatpush1.bf16.msra.mxu0 %v2909
  %4469 = vmatprep.subr.bf16.mxu0 %v2914
  %4470 = vmatpush1.bf16.msra.mxu0 %v2913
  %4471 = vmatprep.subr.bf16.mxu0 %v2918
  %4472 = vmatpush1.bf16.msra.mxu0 %v2917
  %4473 = vmatprep.subr.bf16.mxu0 %v2922
  %4474 = vmatpush1.bf16.msra.mxu0 %v2921
  %4475 = vmatprep.subr.bf16.mxu0 %v2926
  %4476 = vmatpush1.bf16.msra.mxu0 %v2925
  %4477 = vmatprep.subr.bf16.mxu0 %v2930
  %4478 = vmatpush1.bf16.msra.mxu0 %v2929
  %4479 = vmatprep.subr.bf16.mxu0 %v2934
  %4480 = vmatpush1.bf16.msra.mxu0 %v2933
  %4481 = vmatprep.subr.bf16.mxu0 %v2938
  %4482 = vmatpush1.bf16.msra.mxu0 %v2937
  %4483 = vmatprep.subr.bf16.mxu0 %v2942
  %4484 = vmatpush1.bf16.msra.mxu0 %v2941
  %4485 = vmatprep.mubr.bf16.mxu0 %v770
  %4486 = vmatmul.mubr.bf16.gmra.mrb[0].mxu0 %v769
  %v4487 = vpop.f32.mrb[0].mxu0
  %v4488 = vadd.f32 %v4435, %v4487
  %v4489 = vpop.f32.mrb[0].mxu0
  %v4490 = vadd.f32 %v4437, %v4489
  %v4491 = vpop.f32.mrb[0].mxu0
  %v4492 = vadd.f32 %v4439, %v4491
  %v4493 = vpop.f32.mrb[0].mxu0
  %v4494 = vadd.f32 %v4441, %v4493
  %4495 = vmatprep.mubr.bf16.mxu0 %v788
  %4496 = vmatmul.mubr.bf16.gmra.mrb[0].mxu0 %v787
  %v4497 = vpop.f32.mrb[0].mxu0
  %v4498 = vadd.f32 %v4445, %v4497
  %v4499 = vpop.f32.mrb[0].mxu0
  %v4500 = vadd.f32 %v4447, %v4499
  %v4501 = vpop.f32.mrb[0].mxu0
  %v4502 = vadd.f32 %v4449, %v4501
  %v4503 = vpop.f32.mrb[0].mxu0
  %v4504 = vadd.f32 %v4451, %v4503
  %4505 = vdwg.mxu0
  %4506 = vmatprep.subr.bf16.mxu0 %v2946
  %4507 = vmatpush1.bf16.msra.mxu0 %v2945
  %4508 = vmatprep.subr.bf16.mxu0 %v2950
  %4509 = vmatpush1.bf16.msra.mxu0 %v2949
  %4510 = vmatprep.subr.bf16.mxu0 %v2954
  %4511 = vmatpush1.bf16.msra.mxu0 %v2953
  %4512 = vmatprep.subr.bf16.mxu0 %v2958
  %4513 = vmatpush1.bf16.msra.mxu0 %v2957
  %4514 = vmatprep.subr.bf16.mxu0 %v2962
  %4515 = vmatpush1.bf16.msra.mxu0 %v2961
  %4516 = vmatprep.subr.bf16.mxu0 %v2966
  %4517 = vmatpush1.bf16.msra.mxu0 %v2965
  %4518 = vmatprep.subr.bf16.mxu0 %v2970
  %4519 = vmatpush1.bf16.msra.mxu0 %v2969
  %4520 = vmatprep.subr.bf16.mxu0 %v2974
  %4521 = vmatpush1.bf16.msra.mxu0 %v2973
  %4522 = vmatprep.subr.bf16.mxu0 %v2978
  %4523 = vmatpush1.bf16.msra.mxu0 %v2977
  %4524 = vmatprep.subr.bf16.mxu0 %v2982
  %4525 = vmatpush1.bf16.msra.mxu0 %v2981
  %4526 = vmatprep.subr.bf16.mxu0 %v2986
  %4527 = vmatpush1.bf16.msra.mxu0 %v2985
  %4528 = vmatprep.subr.bf16.mxu0 %v2990
  %4529 = vmatpush1.bf16.msra.mxu0 %v2989
  %4530 = vmatprep.subr.bf16.mxu0 %v2994
  %4531 = vmatpush1.bf16.msra.mxu0 %v2993
  %4532 = vmatprep.subr.bf16.mxu0 %v2998
  %4533 = vmatpush1.bf16.msra.mxu0 %v2997
  %4534 = vmatprep.subr.bf16.mxu0 %v3002
  %4535 = vmatpush1.bf16.msra.mxu0 %v3001
  %4536 = vmatprep.subr.bf16.mxu0 %v3006
  %4537 = vmatpush1.bf16.msra.mxu0 %v3005
  %4538 = vmatprep.mubr.bf16.mxu0 %v772
  %4539 = vmatmul.mubr.bf16.gmra.mrb[0].mxu0 %v771
  %v4540 = vpop.f32.mrb[0].mxu0
  %v4541 = vadd.f32 %v4488, %v4540
  %v4542 = vpop.f32.mrb[0].mxu0
  %v4543 = vadd.f32 %v4490, %v4542
  %v4544 = vpop.f32.mrb[0].mxu0
  %v4545 = vadd.f32 %v4492, %v4544
  %v4546 = vpop.f32.mrb[0].mxu0
  %v4547 = vadd.f32 %v4494, %v4546
  %4548 = vmatprep.mubr.bf16.mxu0 %v790
  %4549 = vmatmul.mubr.bf16.gmra.mrb[0].mxu0 %v789
  %v4550 = vpop.f32.mrb[0].mxu0
  %v4551 = vadd.f32 %v4498, %v4550
  %v4552 = vpop.f32.mrb[0].mxu0
  %v4553 = vadd.f32 %v4500, %v4552
  %v4554 = vpop.f32.mrb[0].mxu0
  %v4555 = vadd.f32 %v4502, %v4554
  %v4556 = vpop.f32.mrb[0].mxu0
  %v4557 = vadd.f32 %v4504, %v4556
  %4558 = vdwg.mxu0
  %4559 = vmatprep.subr.bf16.mxu0 %v3010
  %4560 = vmatpush1.bf16.msra.mxu0 %v3009
  %4561 = vmatprep.subr.bf16.mxu0 %v3014
  %4562 = vmatpush1.bf16.msra.mxu0 %v3013
  %4563 = vmatprep.subr.bf16.mxu0 %v3018
  %4564 = vmatpush1.bf16.msra.mxu0 %v3017
  %4565 = vmatprep.subr.bf16.mxu0 %v3022
  %4566 = vmatpush1.bf16.msra.mxu0 %v3021
  %4567 = vmatprep.subr.bf16.mxu0 %v3026
  %4568 = vmatpush1.bf16.msra.mxu0 %v3025
  %4569 = vmatprep.subr.bf16.mxu0 %v3030
  %4570 = vmatpush1.bf16.msra.mxu0 %v3029
  %4571 = vmatprep.subr.bf16.mxu0 %v3034
  %4572 = vmatpush1.bf16.msra.mxu0 %v3033
  %4573 = vmatprep.subr.bf16.mxu0 %v3038
  %4574 = vmatpush1.bf16.msra.mxu0 %v3037
  %4575 = vmatprep.subr.bf16.mxu0 %v3042
  %4576 = vmatpush1.bf16.msra.mxu0 %v3041
  %4577 = vmatprep.subr.bf16.mxu0 %v3046
  %4578 = vmatpush1.bf16.msra.mxu0 %v3045
  %4579 = vmatprep.subr.bf16.mxu0 %v3050
  %4580 = vmatpush1.bf16.msra.mxu0 %v3049
  %4581 = vmatprep.subr.bf16.mxu0 %v3054
  %4582 = vmatpush1.bf16.msra.mxu0 %v3053
  %4583 = vmatprep.subr.bf16.mxu0 %v3058
  %4584 = vmatpush1.bf16.msra.mxu0 %v3057
  %4585 = vmatprep.subr.bf16.mxu0 %v3062
  %4586 = vmatpush1.bf16.msra.mxu0 %v3061
  %4587 = vmatprep.subr.bf16.mxu0 %v3066
  %4588 = vmatpush1.bf16.msra.mxu0 %v3065
  %4589 = vmatprep.subr.bf16.mxu0 %v3070
  %4590 = vmatpush1.bf16.msra.mxu0 %v3069
  %4591 = vmatprep.mubr.bf16.mxu0 %v774
  %4592 = vmatmul.mubr.bf16.gmra.mrb[0].mxu0 %v773
  %v4593 = vpop.f32.mrb[0].mxu0
  %v4594 = vadd.f32 %v4541, %v4593
  %v4595 = vpop.f32.mrb[0].mxu0
  %v4596 = vadd.f32 %v4543, %v4595
  %v4597 = vpop.f32.mrb[0].mxu0
  %v4598 = vadd.f32 %v4545, %v4597
  %v4599 = vpop.f32.mrb[0].mxu0
  %v4600 = vadd.f32 %v4547, %v4599
  %4601 = vmatprep.mubr.bf16.mxu0 %v792
  %4602 = vmatmul.mubr.bf16.gmra.mrb[0].mxu0 %v791
  %v4603 = vpop.f32.mrb[0].mxu0
  %v4604 = vadd.f32 %v4551, %v4603
  %v4605 = vpop.f32.mrb[0].mxu0
  %v4606 = vadd.f32 %v4553, %v4605
  %v4607 = vpop.f32.mrb[0].mxu0
  %v4608 = vadd.f32 %v4555, %v4607
  %v4609 = vpop.f32.mrb[0].mxu0
  %v4610 = vadd.f32 %v4557, %v4609
  %4611 = vdwg.mxu0
  %4612 = vmatprep.subr.bf16.mxu0 %v3074
  %4613 = vmatpush1.bf16.msra.mxu0 %v3073
  %4614 = vmatprep.subr.bf16.mxu0 %v3078
  %4615 = vmatpush1.bf16.msra.mxu0 %v3077
  %4616 = vmatprep.subr.bf16.mxu0 %v3082
  %4617 = vmatpush1.bf16.msra.mxu0 %v3081
  %4618 = vmatprep.subr.bf16.mxu0 %v3086
  %4619 = vmatpush1.bf16.msra.mxu0 %v3085
  %4620 = vmatprep.subr.bf16.mxu0 %v3090
  %4621 = vmatpush1.bf16.msra.mxu0 %v3089
  %4622 = vmatprep.subr.bf16.mxu0 %v3094
  %4623 = vmatpush1.bf16.msra.mxu0 %v3093
  %4624 = vmatprep.subr.bf16.mxu0 %v3098
  %4625 = vmatpush1.bf16.msra.mxu0 %v3097
  %4626 = vmatprep.subr.bf16.mxu0 %v3102
  %4627 = vmatpush1.bf16.msra.mxu0 %v3101
  %4628 = vmatprep.subr.bf16.mxu0 %v3106
  %4629 = vmatpush1.bf16.msra.mxu0 %v3105
  %4630 = vmatprep.subr.bf16.mxu0 %v3110
  %4631 = vmatpush1.bf16.msra.mxu0 %v3109
  %4632 = vmatprep.subr.bf16.mxu0 %v3114
  %4633 = vmatpush1.bf16.msra.mxu0 %v3113
  %4634 = vmatprep.subr.bf16.mxu0 %v3118
  %4635 = vmatpush1.bf16.msra.mxu0 %v3117
  %4636 = vmatprep.subr.bf16.mxu0 %v3122
  %4637 = vmatpush1.bf16.msra.mxu0 %v3121
  %4638 = vmatprep.subr.bf16.mxu0 %v3126
  %4639 = vmatpush1.bf16.msra.mxu0 %v3125
  %4640 = vmatprep.subr.bf16.mxu0 %v3130
  %4641 = vmatpush1.bf16.msra.mxu0 %v3129
  %4642 = vmatprep.subr.bf16.mxu0 %v3134
  %4643 = vmatpush1.bf16.msra.mxu0 %v3133
  %4644 = vmatprep.mubr.bf16.mxu0 %v776
  %4645 = vmatmul.mubr.bf16.gmra.mrb[0].mxu0 %v775
  %v4646 = vpop.f32.mrb[0].mxu0
  %v4647 = vadd.f32 %v4594, %v4646
  %v4648 = vpop.f32.mrb[0].mxu0
  %v4649 = vadd.f32 %v4596, %v4648
  %v4650 = vpop.f32.mrb[0].mxu0
  %v4651 = vadd.f32 %v4598, %v4650
  %v4652 = vpop.f32.mrb[0].mxu0
  %v4653 = vadd.f32 %v4600, %v4652
  %4654 = vmatprep.mubr.bf16.mxu0 %v794
  %4655 = vmatmul.mubr.bf16.gmra.mrb[0].mxu0 %v793
  %v4656 = vpop.f32.mrb[0].mxu0
  %v4657 = vadd.f32 %v4604, %v4656
  %v4658 = vpop.f32.mrb[0].mxu0
  %v4659 = vadd.f32 %v4606, %v4658
  %v4660 = vpop.f32.mrb[0].mxu0
  %v4661 = vadd.f32 %v4608, %v4660
  %v4662 = vpop.f32.mrb[0].mxu0
  %v4663 = vadd.f32 %v4610, %v4662
  %4664 = vdwg.mxu0
  %vm4665 = vcmp.gt.f32.partialorder %v4170, 0.0
  %vm4666 = vcmp.gt.f32.partialorder %v4172, 0.0
  %vm4667 = vcmp.gt.f32.partialorder %v4647, 0.0
  %vm4668 = vcmp.gt.f32.partialorder %v4649, 0.0
  %vm4669 = vcmp.gt.f32.partialorder %v4174, 0.0
  %vm4670 = vcmp.gt.f32.partialorder %v4176, 0.0
  %vm4671 = vcmp.gt.f32.partialorder %v4651, 0.0
  %vm4672 = vcmp.gt.f32.partialorder %v4653, 0.0
  %vm4673 = vcmp.gt.f32.partialorder %v4180, 0.0
  %vm4674 = vcmp.gt.f32.partialorder %v4182, 0.0
  %vm4675 = vcmp.gt.f32.partialorder %v4657, 0.0
  %vm4676 = vcmp.gt.f32.partialorder %v4659, 0.0
  %vm4677 = vcmp.gt.f32.partialorder %v4184, 0.0
  %vm4678 = vcmp.gt.f32.partialorder %v4186, 0.0
  %vm4679 = vcmp.gt.f32.partialorder %v4661, 0.0
  %vm4680 = vcmp.gt.f32.partialorder %v4663, 0.0
  %v4681 = vmul.f32 %v4170, 0.01
  %v4682 = vmul.f32 %v4172, 0.01
  %v4683 = vmul.f32 %v4647, 0.01
  %v4684 = vmul.f32 %v4649, 0.01
  %v4685 = vmul.f32 %v4174, 0.01
  %v4686 = vmul.f32 %v4176, 0.01
  %v4687 = vmul.f32 %v4651, 0.01
  %v4688 = vmul.f32 %v4653, 0.01
  %v4689 = vmul.f32 %v4180, 0.01
  %v4690 = vmul.f32 %v4182, 0.01
  %v4691 = vmul.f32 %v4657, 0.01
  %v4692 = vmul.f32 %v4659, 0.01
  %v4693 = vmul.f32 %v4184, 0.01
  %v4694 = vmul.f32 %v4186, 0.01
  %v4695 = vmul.f32 %v4661, 0.01
  %v4696 = vmul.f32 %v4663, 0.01
  %v4697 = vsel %vm4665, %v4170, %v4681
  %v4698 = vsel %vm4666, %v4172, %v4682
  %v4699 = vsel %vm4667, %v4647, %v4683
  %v4700 = vsel %vm4668, %v4649, %v4684
  %v4701 = vsel %vm4669, %v4174, %v4685
  %v4702 = vsel %vm4670, %v4176, %v4686
  %v4703 = vsel %vm4671, %v4651, %v4687
  %v4704 = vsel %vm4672, %v4653, %v4688
  %v4705 = vsel %vm4673, %v4180, %v4689
  %v4706 = vsel %vm4674, %v4182, %v4690
  %v4707 = vsel %vm4675, %v4657, %v4691
  %v4708 = vsel %vm4676, %v4659, %v4692
  %v4709 = vsel %vm4677, %v4184, %v4693
  %v4710 = vsel %vm4678, %v4186, %v4694
  %v4711 = vsel %vm4679, %v4661, %v4695
  %v4712 = vsel %vm4680, %v4663, %v4696
  %v4713 = vld [vmem:[%s3] sm:$0xff]
  %v4714 = vld [vmem:[%s3 + $0x8] sm:$0xff]
  %v4715 = vld [vmem:[%s3 + $0x10] sm:$0xff]
  %v4716 = vld [vmem:[%s3 + $0x18] sm:$0xff]
  %v4717 = vld [vmem:[%s3 + $0x20] sm:$0xff]
  %v4718 = vld [vmem:[%s3 + $0x28] sm:$0xff]
  %v4719 = vld [vmem:[%s3 + $0x30] sm:$0xff]
  %v4720 = vld [vmem:[%s3 + $0x38] sm:$0xff]
  %v4721 = vld [vmem:[%s3 + $0x40] sm:$0xff]
  %v4722 = vld [vmem:[%s3 + $0x48] sm:$0xff]
  %v4723 = vld [vmem:[%s3 + $0x50] sm:$0xff]
  %v4724 = vld [vmem:[%s3 + $0x58] sm:$0xff]
  %v4725 = vld [vmem:[%s3 + $0x60] sm:$0xff]
  %v4726 = vld [vmem:[%s3 + $0x68] sm:$0xff]
  %v4727 = vld [vmem:[%s3 + $0x70] sm:$0xff]
  %v4728 = vld [vmem:[%s3 + $0x78] sm:$0xff]
  %v4729 = vmul.f32 %v4697, %v4713
  %v4730 = vmul.f32 %v4698, %v4714
  %v4731 = vmul.f32 %v4699, %v4715
  %v4732 = vmul.f32 %v4700, %v4716
  %v4733 = vmul.f32 %v4701, %v4717
  %v4734 = vmul.f32 %v4702, %v4718
  %v4735 = vmul.f32 %v4703, %v4719
  %v4736 = vmul.f32 %v4704, %v4720
  %v4737 = vmul.f32 %v4705, %v4721
  %v4738 = vmul.f32 %v4706, %v4722
  %v4739 = vmul.f32 %v4707, %v4723
  %v4740 = vmul.f32 %v4708, %v4724
  %v4741 = vmul.f32 %v4709, %v4725
  %v4742 = vmul.f32 %v4710, %v4726
  %v4743 = vmul.f32 %v4711, %v4727
  %v4744 = vmul.f32 %v4712, %v4728
  %v4745 = vadd.f32 %v4729, %v4730
  %v4746 = vadd.f32 %v4745, %v4731
  %v4747 = vadd.f32 %v4746, %v4732
  %4748 = vadd.xlane.f32.xlu0 %v4747
  %v4749 = vpop.xlane.xlu0 %4748
  %v4750 = vadd.f32 %v4733, %v4734
  %v4751 = vadd.f32 %v4750, %v4735
  %v4752 = vadd.f32 %v4751, %v4736
  %4753 = vadd.xlane.f32.xlu0 %v4752
  %v4754 = vpop.xlane.xlu0 %4753
  %v4755 = vadd.f32 %v4737, %v4738
  %v4756 = vadd.f32 %v4755, %v4739
  %v4757 = vadd.f32 %v4756, %v4740
  %4758 = vadd.xlane.f32.xlu0 %v4757
  %v4759 = vpop.xlane.xlu0 %4758
  %v4760 = vadd.f32 %v4741, %v4742
  %v4761 = vadd.f32 %v4760, %v4743
  %v4762 = vadd.f32 %v4761, %v4744
  %4763 = vadd.xlane.f32.xlu0 %v4762
  %v4764 = vpop.xlane.xlu0 %4763
  %vm4765 = vcmask 7168
  %4766 = vst.msk [vmem:[%s4] sm:$0xff] %vm4765, %v4749
  %4767 = vst.msk [vmem:[%s4 + $0x8] sm:$0xff] %vm4765, %v4754
  %4768 = vst.msk [vmem:[%s4 + $0x10] sm:$0xff] %vm4765, %v4759
  %4769 = vst.msk [vmem:[%s4 + $0x18] sm:$0xff] %vm4765, %v4764
  // Predicated region
  $region18: #{discriminator_forward.5} parent=0 // pred_check
    _
  $region19: #{discriminator_forward.5} parent=0 // pred_check_branch
    %4771 = sbr.rel (0) target = $region21
  $region20: #{discriminator_forward.5} parent=0 // pred_region
    _
  $region21: #{discriminator_forward.5} parent=0 // pred_fallthru
    _
  // Predicated region
  $region22: #{discriminator_forward.5} parent=0 // pred_check
    _
  $region23: #{discriminator_forward.5} parent=0 // pred_check_branch
    %4773 = sbr.rel (0) target = $region25
  $region24: #{discriminator_forward.5} parent=0 // pred_region
    _
  $region25: #{discriminator_forward.5} parent=0 // pred_fallthru
    _

</llo_original>
